<compile_context>
chip_gen: v6e
topology: v6e:2x2x1
jax: 0.10.0
libtpu: 0.0.40
codegen_flags: <defaults>
</compile_context>

<pallas_src>
import functools
import math

import jax
import jax.numpy as jnp
from jax import lax
from jax.experimental import pallas as pl
from jax.experimental.pallas import tpu as pltpu

# ----------------------- small, structure-preserving config -----------------------
BATCH = 2
SEQ = 8
HIDDEN = 128
NUM_HEADS = 8
HEAD_DIM = HIDDEN // NUM_HEADS                     # 16
NUM_KV_HEADS = NUM_HEADS
NUM_GROUPS = 2                                     # PALU groups (orig: 8)
GROUP_SIZE = NUM_HEADS // NUM_GROUPS               # 4 (orig: 4)
RANK_K = [32] * NUM_GROUPS                         # per-group K latent rank (orig: 128 each)
SUM_RANK_K = sum(RANK_K)                           # 64
RANK_V = 64                                        # fused V latent dim (orig: 1024)
FUSED_GROUP_DIM = RANK_V // NUM_GROUPS             # 32
FUSED_HIDDEN = FUSED_GROUP_DIM * NUM_HEADS         # 256
GROUP_DIM_K = (NUM_HEADS * HEAD_DIM) // NUM_GROUPS # 64 (= GROUP_SIZE * HEAD_DIM)
ROPE_THETA = 10000.0
ATTENTION_DROPOUT = 0.0                            # eval mode -> dropout is identity


# ----------------------------- the fused Pallas kernel ------------------------------
def _fused_attn_kernel(x_ref, w_all_ref, wo_ref, cos_ref, sin_ref, mask_ref, o_ref, *,
                       batch, seq, num_heads, head_dim, num_groups, group_size,
                       fused_group_dim):
    f32 = jnp.float32
    hd = num_heads * head_dim

    x = x_ref[...]                                                    # (B*S, HIDDEN)

    # One wide MXU push: q / q_rot / k / k_rot / v   (N = 4*H*D + RANK_V = 576).
    # Scale 1/sqrt(D), low-rank K reconstruction and rotate_half are folded into the weight.
    proj = jnp.dot(x, w_all_ref[...], preferred_element_type=f32)     # (B*S, 576)
    q     = proj[:, 0 * hd:1 * hd]
    q_rot = proj[:, 1 * hd:2 * hd]
    k     = proj[:, 2 * hd:3 * hd]
    k_rot = proj[:, 3 * hd:4 * hd]
    v     = proj[:, 4 * hd:4 * hd + num_groups * fused_group_dim]     # (B*S, RANK_V)

    # RoPE: rotate_half already pre-applied via the weight, so this is pure VPU.
    cos = cos_ref[...]                                                # (B*S, H*D)
    sin = sin_ref[...]
    q = q * cos + q_rot * sin
    k = k * cos + k_rot * sin

    # Per-head scaled QK^T, batched over the batch axis (heads loop stays a static Python
    # unroll: a (S,H,D)->(H,S,D) relayout for a fully head-batched dot is riskier to lower
    # at these tiny, unaligned tiles than straight-line MXU pushes Mosaic can pipeline).
    # TODO(synk): flash-style KV tiling for production sequence lengths.
    scores = []
    for h in range(num_heads):
        qh = q[:, h * head_dim:(h + 1) * head_dim].reshape(batch, seq, head_dim)
        kh = k[:, h * head_dim:(h + 1) * head_dim].reshape(batch, seq, head_dim)
        scores.append(jnp.einsum("bsd,btd->bst", qh, kh,
                                 preferred_element_type=f32)[None])
    s = jnp.concatenate(scores, axis=0)                               # (H, B, S, S)
    s = s + mask_ref[...][None]                                       # single mask add

    # fp32 softmax over keys for all (head, batch, query) rows at once.
    m = jnp.max(s, axis=-1, keepdims=True)
    e = jnp.exp(s - m)
    p = e * pl.reciprocal(jnp.sum(e, axis=-1, keepdims=True), approx=True)
    p = p.astype(x.dtype)                                             # torch: .to(query dtype)

    # 0/1 phase-selection matrices implementing torch's
    #   (gs*S, G*Fg) --transpose(1,2).reshape--> (S, FUSED_HIDDEN)
    # as matmuls (row r = gs*s' + phase), built in-kernel via iota (no DMA).
    row = lax.broadcasted_iota(jnp.int32, (seq, group_size * seq), 0)
    col = lax.broadcasted_iota(jnp.int32, (seq, group_size * seq), 1)
    sels = [(col == group_size * row + ph).astype(x.dtype) for ph in range(group_size)]

    wo = wo_ref[...]                                                  # (FUSED_HIDDEN, HIDDEN)
    outs = []
    for b in range(batch):
        # PALU grouped P @ V_latent (softmax weights consumed in the fused latent space).
        o_groups = []
        for g in range(num_groups):
            p_bg = p[g * group_size:(g + 1) * group_size, b].reshape(group_size * seq, seq)
            v_bg = v[b * seq:(b + 1) * seq,
                     g * fused_group_dim:(g + 1) * fused_group_dim]   # (S, Fg)
            o_groups.append(jnp.dot(p_bg, v_bg, preferred_element_type=f32))
        o_cat = jnp.concatenate(o_groups, axis=-1)                    # (gs*S, G*Fg)
        # layout fixup as matmuls -> (S, FUSED_HIDDEN), lane dense, then fused o_proj
        attn_flat = jnp.concatenate(
            [jnp.dot(sel, o_cat, preferred_element_type=f32) for sel in sels],
            axis=-1)                                                  # (S, 256)
        outs.append(jnp.dot(attn_flat, wo, preferred_element_type=f32))  # (S, HIDDEN)

    # single unmasked, 128-lane-dense store
    o_ref[...] = jnp.concatenate(outs, axis=0).astype(o_ref.dtype)    # (B*S, HIDDEN)


# ------------------------------ RoPE glue (host side) -------------------------------
def rotate_half(x):
    d = x.shape[-1] // 2
    return jnp.concatenate([-x[..., d:], x[..., :d]], axis=-1)


def rotary_cos_sin(seq_len, dim, theta, dtype):
    inv_freq = 1.0 / (theta ** (jnp.arange(0, dim, 2, dtype=jnp.float32) / dim))
    t = jnp.arange(seq_len, dtype=jnp.float32)
    freqs = jnp.outer(t, inv_freq)
    emb = jnp.concatenate([freqs, freqs], axis=-1)
    return jnp.cos(emb).astype(dtype), jnp.sin(emb).astype(dtype)


def _rotate_half_matrix(num_heads, head_dim, dtype):
    # R such that (x @ R) == rotate_half(x) applied independently to every head block.
    half = head_dim // 2
    idx = jnp.arange(half)
    blk = jnp.zeros((head_dim, head_dim), dtype)
    blk = blk.at[idx, idx + half].set(1.0)     # first half  -> second half (+)
    blk = blk.at[idx + half, idx].set(-1.0)    # second half -> first half  (-)
    return jnp.kron(jnp.eye(num_heads, dtype=dtype), blk)


# ------------------------------ full forward (q_len > 1 path) -----------------------
def llama_attention_palu_forward(params, hidden_states, attention_mask, position_ids):
    B, S, _ = hidden_states.shape
    dtype = hidden_states.dtype
    hd = NUM_HEADS * HEAD_DIM

    # ---- host-side weight prep (one-time at load in deployment) ----
    # Fold the headwise low-rank K reconstruction (U_g @ W_vt_g) into a dense weight —
    # valid on the prefill / no-cache path only (decode must keep the latent-K form).
    wk_blocks, off = [], 0
    for r in RANK_K:
        wk_blocks.append(params["k_u"][:, off:off + r] @ params["k_vt_w"][off:off + r, :])
        off += r
    wk_eff = jnp.concatenate(wk_blocks, axis=0)                        # (H*D, HIDDEN)

    wq_scaled = params["q_proj_w"] * (1.0 / math.sqrt(HEAD_DIM))       # fold 1/sqrt(D)
    rot = _rotate_half_matrix(NUM_HEADS, HEAD_DIM, dtype)              # x @ rot = rotate_half
    wq_rot = rot.T @ wq_scaled                                         # x@wq_rot.T == (x@wq.T)@rot
    wk_rot = rot.T @ wk_eff
    # one (HIDDEN, 576) weight: [q | q_rot | k | k_rot | v] -> a single wide MXU matmul
    w_all_t = jnp.concatenate(
        [wq_scaled, wq_rot, wk_eff, wk_rot, params["v_proj_w"]], axis=0).T
    wo_t = params["o_proj_w"].T                                        # (FUSED_HIDDEN, HIDDEN)

    cos_t, sin_t = rotary_cos_sin(S, HEAD_DIM, ROPE_THETA, dtype)      # (S, D) tables
    cos_f = jnp.tile(cos_t[position_ids], (1, 1, NUM_HEADS)).reshape(B * S, hd)
    sin_f = jnp.tile(sin_t[position_ids], (1, 1, NUM_HEADS)).reshape(B * S, hd)

    x_flat = hidden_states.reshape(B * S, HIDDEN)                      # fold batch: 1 grid step
    mask3 = attention_mask.reshape(B, S, S)                            # (B,1,S,S) -> (B,S,S)

    kernel = functools.partial(
        _fused_attn_kernel, batch=B, seq=S, num_heads=NUM_HEADS, head_dim=HEAD_DIM,
        num_groups=NUM_GROUPS, group_size=GROUP_SIZE, fused_group_dim=FUSED_GROUP_DIM)

    out_flat = pl.pallas_call(
        kernel,
        out_shape=jax.ShapeDtypeStruct((B * S, HIDDEN), dtype),
        compiler_params=pltpu.CompilerParams(vmem_limit_bytes=32 * 1024 * 1024),
    )(x_flat, w_all_t, wo_t, cos_f, sin_f, mask3)

    return out_flat.reshape(B, S, HIDDEN)


# ------------------------------ pure-JAX reference (mirrors torch) -------------------
def reference_forward(params, hidden, mask, pos):
    B, S, _ = hidden.shape
    q = hidden @ params["q_proj_w"].T
    k_lat = hidden @ params["k_vt_w"].T
    v = hidden @ params["v_proj_w"].T
    q = q.reshape(B, S, NUM_HEADS, HEAD_DIM).transpose(0, 2, 1, 3)
    v_h = v.reshape(B, S, NUM_GROUPS, FUSED_GROUP_DIM).transpose(0, 2, 1, 3)
    outs, off = [], 0
    for i in range(NUM_GROUPS):
        r = RANK_K[i]
        outs.append(k_lat[:, :, off:off + r] @ params["k_u"][:, off:off + r].T)
        off += r
    k = jnp.concatenate(outs, axis=-1)
    k = k.reshape(B, S, NUM_KV_HEADS, HEAD_DIM).transpose(0, 2, 1, 3)
    cos, sin = rotary_cos_sin(S, HEAD_DIM, ROPE_THETA, q.dtype)
    cos = cos[pos][:, None]; sin = sin[pos][:, None]
    q = q * cos + rotate_half(q) * sin
    k = k * cos + rotate_half(k) * sin
    w = jnp.einsum("bhsd,bhtd->bhst", q, k) / math.sqrt(HEAD_DIM)
    w = w + mask
    w = jax.nn.softmax(w.astype(jnp.float32), axis=-1).astype(q.dtype)
    w = w.reshape(B, NUM_GROUPS, S * GROUP_SIZE, S)
    o = jnp.einsum("bgts,bgsf->bgtf", w, v_h)
    o = o.transpose(0, 2, 1, 3).reshape(B, S, FUSED_HIDDEN)
    return o @ params["o_proj_w"].T


# ------------------------------ params & main ---------------------------------------
def init_params(key):
    ks = jax.random.split(key, 5)
    s = 0.02
    return {
        "q_proj_w": jax.random.normal(ks[0], (NUM_HEADS * HEAD_DIM, HIDDEN), jnp.float32) * s,
        "k_vt_w":   jax.random.normal(ks[1], (SUM_RANK_K, HIDDEN), jnp.float32) * s,
        "k_u":      jax.random.normal(ks[2], (GROUP_DIM_K, SUM_RANK_K), jnp.float32) * s,
        "v_proj_w": jax.random.normal(ks[3], (RANK_V, HIDDEN), jnp.float32) * s,
        "o_proj_w": jax.random.normal(ks[4], (HIDDEN, FUSED_HIDDEN), jnp.float32) * s,
    }


if __name__ == "__main__":
    key = jax.random.PRNGKey(0)
    pkey, xkey = jax.random.split(key)
    params = init_params(pkey)

    hidden_states = jax.random.normal(xkey, (BATCH, SEQ, HIDDEN), jnp.float32)
    position_ids = jnp.tile(jnp.arange(SEQ, dtype=jnp.int32)[None, :], (BATCH, 1))
    # additive causal mask, (B, 1, S, S)
    causal = jnp.where(
        jnp.arange(SEQ)[:, None] >= jnp.arange(SEQ)[None, :], 0.0, -1e9
    ).astype(jnp.float32)
    attention_mask = jnp.broadcast_to(causal[None, None], (BATCH, 1, SEQ, SEQ))

    fwd = jax.jit(llama_attention_palu_forward)
    out = jax.block_until_ready(fwd(params, hidden_states, attention_mask, position_ids))

    ref = reference_forward(params, hidden_states, attention_mask, position_ids)
    assert out.shape == (BATCH, SEQ, HIDDEN)
    # tolerance accounts for the EUP approximate reciprocal used for the in-kernel softmax
    # normalization; all other math is fp32 with fp32 MXU accumulation.
    err = float(jnp.max(jnp.abs(out - ref)))
    assert jnp.allclose(out, ref, atol=2e-3, rtol=1e-2), (
        f"Pallas output mismatch vs reference (max abs err {err})")

    print("KERNEL_OK")
</pallas_src>

<mosaic_0001>
module attributes {stable_mosaic.version = 11 : i64} {
  func.func @_fused_attn_kernel(%arg0: memref<16x128xf32, #tpu.memory_space<vmem>>, %arg1: memref<128x576xf32, #tpu.memory_space<vmem>>, %arg2: memref<256x128xf32, #tpu.memory_space<vmem>>, %arg3: memref<16x128xf32, #tpu.memory_space<vmem>>, %arg4: memref<16x128xf32, #tpu.memory_space<vmem>>, %arg5: memref<2x8x8xf32, #tpu.memory_space<vmem>>, %arg6: memref<16x128xf32, #tpu.memory_space<vmem>>) attributes {dimension_semantics = [], scalar_prefetch = 0 : i64, scratch_operands = 0 : i64, tpu.core_type = #tpu.core_type<tc>} {
    %c0 = arith.constant 0 : index
    %c0_0 = arith.constant 0 : index
    %0 = vector.load %arg0[%c0, %c0_0] : memref<16x128xf32, #tpu.memory_space<vmem>>, vector<16x128xf32>
    %c0_1 = arith.constant 0 : index
    %c0_2 = arith.constant 0 : index
    %1 = vector.load %arg1[%c0_1, %c0_2] : memref<128x576xf32, #tpu.memory_space<vmem>>, vector<128x576xf32>
    %cst = arith.constant dense<0.000000e+00> : vector<16x576xf32>
    %2 = tpu.matmul %0, %1, %cst {dimension_numbers = #tpu.dot_dimension_numbers<[1], [0], [0], [1], [0, 0, 1, 1], [], []>} : vector<16x128xf32>, vector<128x576xf32>, vector<16x576xf32> -> vector<16x576xf32>
    %3 = vector.extract_strided_slice %2 {offsets = [0, 0], sizes = [16, 128], strides = [1, 1]} : vector<16x576xf32> to vector<16x128xf32>
    %4 = vector.extract_strided_slice %2 {offsets = [0, 128], sizes = [16, 128], strides = [1, 1]} : vector<16x576xf32> to vector<16x128xf32>
    %5 = vector.extract_strided_slice %2 {offsets = [0, 256], sizes = [16, 128], strides = [1, 1]} : vector<16x576xf32> to vector<16x128xf32>
    %6 = vector.extract_strided_slice %2 {offsets = [0, 384], sizes = [16, 128], strides = [1, 1]} : vector<16x576xf32> to vector<16x128xf32>
    %7 = vector.extract_strided_slice %2 {offsets = [0, 512], sizes = [16, 64], strides = [1, 1]} : vector<16x576xf32> to vector<16x64xf32>
    %c0_3 = arith.constant 0 : index
    %c0_4 = arith.constant 0 : index
    %8 = vector.load %arg3[%c0_3, %c0_4] : memref<16x128xf32, #tpu.memory_space<vmem>>, vector<16x128xf32>
    %c0_5 = arith.constant 0 : index
    %c0_6 = arith.constant 0 : index
    %9 = vector.load %arg4[%c0_5, %c0_6] : memref<16x128xf32, #tpu.memory_space<vmem>>, vector<16x128xf32>
    %10 = arith.mulf %3, %8 : vector<16x128xf32>
    %11 = arith.mulf %4, %9 : vector<16x128xf32>
    %12 = arith.addf %10, %11 : vector<16x128xf32>
    %13 = arith.mulf %5, %8 : vector<16x128xf32>
    %14 = arith.mulf %6, %9 : vector<16x128xf32>
    %15 = arith.addf %13, %14 : vector<16x128xf32>
    %16 = vector.extract_strided_slice %12 {offsets = [0, 0], sizes = [16, 16], strides = [1, 1]} : vector<16x128xf32> to vector<16x16xf32>
    %17 = vector.shape_cast %16 : vector<16x16xf32> to vector<2x8x16xf32>
    %18 = vector.extract_strided_slice %15 {offsets = [0, 0], sizes = [16, 16], strides = [1, 1]} : vector<16x128xf32> to vector<16x16xf32>
    %19 = vector.shape_cast %18 : vector<16x16xf32> to vector<2x8x16xf32>
    "tpu.trace_start"() <{level = 10 : i32, message = "bsd,btd->bst"}> : () -> ()
    %cst_7 = arith.constant dense<0.000000e+00> : vector<2x8x8xf32>
    %20 = tpu.matmul %17, %19, %cst_7 {dimension_numbers = #tpu.dot_dimension_numbers<[2], [2], [1], [1], [0, 0, 0, 1, 1, 1], [0], [0]>} : vector<2x8x16xf32>, vector<2x8x16xf32>, vector<2x8x8xf32> -> vector<2x8x8xf32>
    "tpu.trace_stop"() : () -> ()
    %21 = vector.shape_cast %20 : vector<2x8x8xf32> to vector<1x2x8x8xf32>
    %22 = vector.extract_strided_slice %12 {offsets = [0, 16], sizes = [16, 16], strides = [1, 1]} : vector<16x128xf32> to vector<16x16xf32>
    %23 = vector.shape_cast %22 : vector<16x16xf32> to vector<2x8x16xf32>
    %24 = vector.extract_strided_slice %15 {offsets = [0, 16], sizes = [16, 16], strides = [1, 1]} : vector<16x128xf32> to vector<16x16xf32>
    %25 = vector.shape_cast %24 : vector<16x16xf32> to vector<2x8x16xf32>
    "tpu.trace_start"() <{level = 10 : i32, message = "bsd,btd->bst"}> : () -> ()
    %cst_8 = arith.constant dense<0.000000e+00> : vector<2x8x8xf32>
    %26 = tpu.matmul %23, %25, %cst_8 {dimension_numbers = #tpu.dot_dimension_numbers<[2], [2], [1], [1], [0, 0, 0, 1, 1, 1], [0], [0]>} : vector<2x8x16xf32>, vector<2x8x16xf32>, vector<2x8x8xf32> -> vector<2x8x8xf32>
    "tpu.trace_stop"() : () -> ()
    %27 = vector.shape_cast %26 : vector<2x8x8xf32> to vector<1x2x8x8xf32>
    %28 = vector.extract_strided_slice %12 {offsets = [0, 32], sizes = [16, 16], strides = [1, 1]} : vector<16x128xf32> to vector<16x16xf32>
    %29 = vector.shape_cast %28 : vector<16x16xf32> to vector<2x8x16xf32>
    %30 = vector.extract_strided_slice %15 {offsets = [0, 32], sizes = [16, 16], strides = [1, 1]} : vector<16x128xf32> to vector<16x16xf32>
    %31 = vector.shape_cast %30 : vector<16x16xf32> to vector<2x8x16xf32>
    "tpu.trace_start"() <{level = 10 : i32, message = "bsd,btd->bst"}> : () -> ()
    %cst_9 = arith.constant dense<0.000000e+00> : vector<2x8x8xf32>
    %32 = tpu.matmul %29, %31, %cst_9 {dimension_numbers = #tpu.dot_dimension_numbers<[2], [2], [1], [1], [0, 0, 0, 1, 1, 1], [0], [0]>} : vector<2x8x16xf32>, vector<2x8x16xf32>, vector<2x8x8xf32> -> vector<2x8x8xf32>
    "tpu.trace_stop"() : () -> ()
    %33 = vector.shape_cast %32 : vector<2x8x8xf32> to vector<1x2x8x8xf32>
    %34 = vector.extract_strided_slice %12 {offsets = [0, 48], sizes = [16, 16], strides = [1, 1]} : vector<16x128xf32> to vector<16x16xf32>
    %35 = vector.shape_cast %34 : vector<16x16xf32> to vector<2x8x16xf32>
    %36 = vector.extract_strided_slice %15 {offsets = [0, 48], sizes = [16, 16], strides = [1, 1]} : vector<16x128xf32> to vector<16x16xf32>
    %37 = vector.shape_cast %36 : vector<16x16xf32> to vector<2x8x16xf32>
    "tpu.trace_start"() <{level = 10 : i32, message = "bsd,btd->bst"}> : () -> ()
    %cst_10 = arith.constant dense<0.000000e+00> : vector<2x8x8xf32>
    %38 = tpu.matmul %35, %37, %cst_10 {dimension_numbers = #tpu.dot_dimension_numbers<[2], [2], [1], [1], [0, 0, 0, 1, 1, 1], [0], [0]>} : vector<2x8x16xf32>, vector<2x8x16xf32>, vector<2x8x8xf32> -> vector<2x8x8xf32>
    "tpu.trace_stop"() : () -> ()
    %39 = vector.shape_cast %38 : vector<2x8x8xf32> to vector<1x2x8x8xf32>
    %40 = vector.extract_strided_slice %12 {offsets = [0, 64], sizes = [16, 16], strides = [1, 1]} : vector<16x128xf32> to vector<16x16xf32>
    %41 = vector.shape_cast %40 : vector<16x16xf32> to vector<2x8x16xf32>
    %42 = vector.extract_strided_slice %15 {offsets = [0, 64], sizes = [16, 16], strides = [1, 1]} : vector<16x128xf32> to vector<16x16xf32>
    %43 = vector.shape_cast %42 : vector<16x16xf32> to vector<2x8x16xf32>
    "tpu.trace_start"() <{level = 10 : i32, message = "bsd,btd->bst"}> : () -> ()
    %cst_11 = arith.constant dense<0.000000e+00> : vector<2x8x8xf32>
    %44 = tpu.matmul %41, %43, %cst_11 {dimension_numbers = #tpu.dot_dimension_numbers<[2], [2], [1], [1], [0, 0, 0, 1, 1, 1], [0], [0]>} : vector<2x8x16xf32>, vector<2x8x16xf32>, vector<2x8x8xf32> -> vector<2x8x8xf32>
    "tpu.trace_stop"() : () -> ()
    %45 = vector.shape_cast %44 : vector<2x8x8xf32> to vector<1x2x8x8xf32>
    %46 = vector.extract_strided_slice %12 {offsets = [0, 80], sizes = [16, 16], strides = [1, 1]} : vector<16x128xf32> to vector<16x16xf32>
    %47 = vector.shape_cast %46 : vector<16x16xf32> to vector<2x8x16xf32>
    %48 = vector.extract_strided_slice %15 {offsets = [0, 80], sizes = [16, 16], strides = [1, 1]} : vector<16x128xf32> to vector<16x16xf32>
    %49 = vector.shape_cast %48 : vector<16x16xf32> to vector<2x8x16xf32>
    "tpu.trace_start"() <{level = 10 : i32, message = "bsd,btd->bst"}> : () -> ()
    %cst_12 = arith.constant dense<0.000000e+00> : vector<2x8x8xf32>
    %50 = tpu.matmul %47, %49, %cst_12 {dimension_numbers = #tpu.dot_dimension_numbers<[2], [2], [1], [1], [0, 0, 0, 1, 1, 1], [0], [0]>} : vector<2x8x16xf32>, vector<2x8x16xf32>, vector<2x8x8xf32> -> vector<2x8x8xf32>
    "tpu.trace_stop"() : () -> ()
    %51 = vector.shape_cast %50 : vector<2x8x8xf32> to vector<1x2x8x8xf32>
    %52 = vector.extract_strided_slice %12 {offsets = [0, 96], sizes = [16, 16], strides = [1, 1]} : vector<16x128xf32> to vector<16x16xf32>
    %53 = vector.shape_cast %52 : vector<16x16xf32> to vector<2x8x16xf32>
    %54 = vector.extract_strided_slice %15 {offsets = [0, 96], sizes = [16, 16], strides = [1, 1]} : vector<16x128xf32> to vector<16x16xf32>
    %55 = vector.shape_cast %54 : vector<16x16xf32> to vector<2x8x16xf32>
    "tpu.trace_start"() <{level = 10 : i32, message = "bsd,btd->bst"}> : () -> ()
    %cst_13 = arith.constant dense<0.000000e+00> : vector<2x8x8xf32>
    %56 = tpu.matmul %53, %55, %cst_13 {dimension_numbers = #tpu.dot_dimension_numbers<[2], [2], [1], [1], [0, 0, 0, 1, 1, 1], [0], [0]>} : vector<2x8x16xf32>, vector<2x8x16xf32>, vector<2x8x8xf32> -> vector<2x8x8xf32>
    "tpu.trace_stop"() : () -> ()
    %57 = vector.shape_cast %56 : vector<2x8x8xf32> to vector<1x2x8x8xf32>
    %58 = vector.extract_strided_slice %12 {offsets = [0, 112], sizes = [16, 16], strides = [1, 1]} : vector<16x128xf32> to vector<16x16xf32>
    %59 = vector.shape_cast %58 : vector<16x16xf32> to vector<2x8x16xf32>
    %60 = vector.extract_strided_slice %15 {offsets = [0, 112], sizes = [16, 16], strides = [1, 1]} : vector<16x128xf32> to vector<16x16xf32>
    %61 = vector.shape_cast %60 : vector<16x16xf32> to vector<2x8x16xf32>
    "tpu.trace_start"() <{level = 10 : i32, message = "bsd,btd->bst"}> : () -> ()
    %cst_14 = arith.constant dense<0.000000e+00> : vector<2x8x8xf32>
    %62 = tpu.matmul %59, %61, %cst_14 {dimension_numbers = #tpu.dot_dimension_numbers<[2], [2], [1], [1], [0, 0, 0, 1, 1, 1], [0], [0]>} : vector<2x8x16xf32>, vector<2x8x16xf32>, vector<2x8x8xf32> -> vector<2x8x8xf32>
    "tpu.trace_stop"() : () -> ()
    %63 = vector.shape_cast %62 : vector<2x8x8xf32> to vector<1x2x8x8xf32>
    %64 = tpu.concatenate %21, %27, %33, %39, %45, %51, %57, %63 in 0 : vector<1x2x8x8xf32>, vector<1x2x8x8xf32>, vector<1x2x8x8xf32>, vector<1x2x8x8xf32>, vector<1x2x8x8xf32>, vector<1x2x8x8xf32>, vector<1x2x8x8xf32>, vector<1x2x8x8xf32> -> vector<8x2x8x8xf32>
    %c0_15 = arith.constant 0 : index
    %c0_16 = arith.constant 0 : index
    %c0_17 = arith.constant 0 : index
    %65 = vector.load %arg5[%c0_15, %c0_16, %c0_17] : memref<2x8x8xf32, #tpu.memory_space<vmem>>, vector<2x8x8xf32>
    %66 = vector.shape_cast %65 : vector<2x8x8xf32> to vector<1x2x8x8xf32>
    %67 = vector.broadcast %66 : vector<1x2x8x8xf32> to vector<8x2x8x8xf32>
    %68 = arith.addf %64, %67 : vector<8x2x8x8xf32>
    %cst_18 = arith.constant dense<0xFF800000> : vector<8x2x8xf32>
    %69 = vector.multi_reduction <maximumf>, %68, %cst_18 [3] : vector<8x2x8x8xf32> to vector<8x2x8xf32>
    %70 = vector.shape_cast %69 : vector<8x2x8xf32> to vector<8x2x8x1xf32>
    %71 = vector.broadcast %70 : vector<8x2x8x1xf32> to vector<8x2x8x8xf32>
    %72 = arith.subf %68, %71 : vector<8x2x8x8xf32>
    %73 = math.exp %72 : vector<8x2x8x8xf32>
    %cst_19 = arith.constant dense<0.000000e+00> : vector<8x2x8xf32>
    %74 = vector.multi_reduction <add>, %73, %cst_19 [3] : vector<8x2x8x8xf32> to vector<8x2x8xf32>
    %75 = vector.shape_cast %74 : vector<8x2x8xf32> to vector<8x2x8x1xf32>
    %76 = tpu.reciprocal %75 {approx = true} : vector<8x2x8x1xf32> -> vector<8x2x8x1xf32>
    %77 = vector.broadcast %76 : vector<8x2x8x1xf32> to vector<8x2x8x8xf32>
    %78 = arith.mulf %73, %77 : vector<8x2x8x8xf32>
    %79 = tpu.iota {dimensions = array<i32: 0>} : vector<8x32xi32>
    %80 = tpu.iota {dimensions = array<i32: 1>} : vector<8x32xi32>
    %c4_i32 = arith.constant 4 : i32
    %81 = vector.broadcast %c4_i32 : i32 to vector<8x32xi32>
    %82 = arith.muli %81, %79 : vector<8x32xi32>
    %c0_i32 = arith.constant 0 : i32
    %83 = vector.broadcast %c0_i32 : i32 to vector<8x32xi32>
    %84 = arith.addi %82, %83 : vector<8x32xi32>
    %85 = arith.cmpi eq, %80, %84 : vector<8x32xi32>
    %86 = arith.extui %85 : vector<8x32xi1> to vector<8x32xi32>
    %87 = arith.sitofp %86 : vector<8x32xi32> to vector<8x32xf32>
    %c4_i32_20 = arith.constant 4 : i32
    %88 = vector.broadcast %c4_i32_20 : i32 to vector<8x32xi32>
    %89 = arith.muli %88, %79 : vector<8x32xi32>
    %c1_i32 = arith.constant 1 : i32
    %90 = vector.broadcast %c1_i32 : i32 to vector<8x32xi32>
    %91 = arith.addi %89, %90 : vector<8x32xi32>
    %92 = arith.cmpi eq, %80, %91 : vector<8x32xi32>
    %93 = arith.extui %92 : vector<8x32xi1> to vector<8x32xi32>
    %94 = arith.sitofp %93 : vector<8x32xi32> to vector<8x32xf32>
    %c4_i32_21 = arith.constant 4 : i32
    %95 = vector.broadcast %c4_i32_21 : i32 to vector<8x32xi32>
    %96 = arith.muli %95, %79 : vector<8x32xi32>
    %c2_i32 = arith.constant 2 : i32
    %97 = vector.broadcast %c2_i32 : i32 to vector<8x32xi32>
    %98 = arith.addi %96, %97 : vector<8x32xi32>
    %99 = arith.cmpi eq, %80, %98 : vector<8x32xi32>
    %100 = arith.extui %99 : vector<8x32xi1> to vector<8x32xi32>
    %101 = arith.sitofp %100 : vector<8x32xi32> to vector<8x32xf32>
    %c4_i32_22 = arith.constant 4 : i32
    %102 = vector.broadcast %c4_i32_22 : i32 to vector<8x32xi32>
    %103 = arith.muli %102, %79 : vector<8x32xi32>
    %c3_i32 = arith.constant 3 : i32
    %104 = vector.broadcast %c3_i32 : i32 to vector<8x32xi32>
    %105 = arith.addi %103, %104 : vector<8x32xi32>
    %106 = arith.cmpi eq, %80, %105 : vector<8x32xi32>
    %107 = arith.extui %106 : vector<8x32xi1> to vector<8x32xi32>
    %108 = arith.sitofp %107 : vector<8x32xi32> to vector<8x32xf32>
    %c0_23 = arith.constant 0 : index
    %c0_24 = arith.constant 0 : index
    %109 = vector.load %arg2[%c0_23, %c0_24] : memref<256x128xf32, #tpu.memory_space<vmem>>, vector<256x128xf32>
    %110 = vector.extract_strided_slice %78 {offsets = [0, 0, 0, 0], sizes = [4, 1, 8, 8], strides = [1, 1, 1, 1]} : vector<8x2x8x8xf32> to vector<4x1x8x8xf32>
    %111 = vector.shape_cast %110 : vector<4x1x8x8xf32> to vector<4x8x8xf32>
    %112 = vector.shape_cast %111 : vector<4x8x8xf32> to vector<32x8xf32>
    %113 = vector.extract_strided_slice %7 {offsets = [0, 0], sizes = [8, 32], strides = [1, 1]} : vector<16x64xf32> to vector<8x32xf32>
    %cst_25 = arith.constant dense<0.000000e+00> : vector<32x32xf32>
    %114 = tpu.matmul %112, %113, %cst_25 {dimension_numbers = #tpu.dot_dimension_numbers<[1], [0], [0], [1], [0, 0, 1, 1], [], []>} : vector<32x8xf32>, vector<8x32xf32>, vector<32x32xf32> -> vector<32x32xf32>
    %115 = vector.extract_strided_slice %78 {offsets = [4, 0, 0, 0], sizes = [4, 1, 8, 8], strides = [1, 1, 1, 1]} : vector<8x2x8x8xf32> to vector<4x1x8x8xf32>
    %116 = vector.shape_cast %115 : vector<4x1x8x8xf32> to vector<4x8x8xf32>
    %117 = vector.shape_cast %116 : vector<4x8x8xf32> to vector<32x8xf32>
    %118 = vector.extract_strided_slice %7 {offsets = [0, 32], sizes = [8, 32], strides = [1, 1]} : vector<16x64xf32> to vector<8x32xf32>
    %cst_26 = arith.constant dense<0.000000e+00> : vector<32x32xf32>
    %119 = tpu.matmul %117, %118, %cst_26 {dimension_numbers = #tpu.dot_dimension_numbers<[1], [0], [0], [1], [0, 0, 1, 1], [], []>} : vector<32x8xf32>, vector<8x32xf32>, vector<32x32xf32> -> vector<32x32xf32>
    %120 = tpu.concatenate %114, %119 in 1 : vector<32x32xf32>, vector<32x32xf32> -> vector<32x64xf32>
    %cst_27 = arith.constant dense<0.000000e+00> : vector<8x64xf32>
    %121 = tpu.matmul %87, %120, %cst_27 {dimension_numbers = #tpu.dot_dimension_numbers<[1], [0], [0], [1], [0, 0, 1, 1], [], []>} : vector<8x32xf32>, vector<32x64xf32>, vector<8x64xf32> -> vector<8x64xf32>
    %cst_28 = arith.constant dense<0.000000e+00> : vector<8x64xf32>
    %122 = tpu.matmul %94, %120, %cst_28 {dimension_numbers = #tpu.dot_dimension_numbers<[1], [0], [0], [1], [0, 0, 1, 1], [], []>} : vector<8x32xf32>, vector<32x64xf32>, vector<8x64xf32> -> vector<8x64xf32>
    %cst_29 = arith.constant dense<0.000000e+00> : vector<8x64xf32>
    %123 = tpu.matmul %101, %120, %cst_29 {dimension_numbers = #tpu.dot_dimension_numbers<[1], [0], [0], [1], [0, 0, 1, 1], [], []>} : vector<8x32xf32>, vector<32x64xf32>, vector<8x64xf32> -> vector<8x64xf32>
    %cst_30 = arith.constant dense<0.000000e+00> : vector<8x64xf32>
    %124 = tpu.matmul %108, %120, %cst_30 {dimension_numbers = #tpu.dot_dimension_numbers<[1], [0], [0], [1], [0, 0, 1, 1], [], []>} : vector<8x32xf32>, vector<32x64xf32>, vector<8x64xf32> -> vector<8x64xf32>
    %125 = tpu.concatenate %121, %122, %123, %124 in 1 : vector<8x64xf32>, vector<8x64xf32>, vector<8x64xf32>, vector<8x64xf32> -> vector<8x256xf32>
    %cst_31 = arith.constant dense<0.000000e+00> : vector<8x128xf32>
    %126 = tpu.matmul %125, %109, %cst_31 {dimension_numbers = #tpu.dot_dimension_numbers<[1], [0], [0], [1], [0, 0, 1, 1], [], []>} : vector<8x256xf32>, vector<256x128xf32>, vector<8x128xf32> -> vector<8x128xf32>
    %127 = vector.extract_strided_slice %78 {offsets = [0, 1, 0, 0], sizes = [4, 1, 8, 8], strides = [1, 1, 1, 1]} : vector<8x2x8x8xf32> to vector<4x1x8x8xf32>
    %128 = vector.shape_cast %127 : vector<4x1x8x8xf32> to vector<4x8x8xf32>
    %129 = vector.shape_cast %128 : vector<4x8x8xf32> to vector<32x8xf32>
    %130 = vector.extract_strided_slice %7 {offsets = [8, 0], sizes = [8, 32], strides = [1, 1]} : vector<16x64xf32> to vector<8x32xf32>
    %cst_32 = arith.constant dense<0.000000e+00> : vector<32x32xf32>
    %131 = tpu.matmul %129, %130, %cst_32 {dimension_numbers = #tpu.dot_dimension_numbers<[1], [0], [0], [1], [0, 0, 1, 1], [], []>} : vector<32x8xf32>, vector<8x32xf32>, vector<32x32xf32> -> vector<32x32xf32>
    %132 = vector.extract_strided_slice %78 {offsets = [4, 1, 0, 0], sizes = [4, 1, 8, 8], strides = [1, 1, 1, 1]} : vector<8x2x8x8xf32> to vector<4x1x8x8xf32>
    %133 = vector.shape_cast %132 : vector<4x1x8x8xf32> to vector<4x8x8xf32>
    %134 = vector.shape_cast %133 : vector<4x8x8xf32> to vector<32x8xf32>
    %135 = vector.extract_strided_slice %7 {offsets = [8, 32], sizes = [8, 32], strides = [1, 1]} : vector<16x64xf32> to vector<8x32xf32>
    %cst_33 = arith.constant dense<0.000000e+00> : vector<32x32xf32>
    %136 = tpu.matmul %134, %135, %cst_33 {dimension_numbers = #tpu.dot_dimension_numbers<[1], [0], [0], [1], [0, 0, 1, 1], [], []>} : vector<32x8xf32>, vector<8x32xf32>, vector<32x32xf32> -> vector<32x32xf32>
    %137 = tpu.concatenate %131, %136 in 1 : vector<32x32xf32>, vector<32x32xf32> -> vector<32x64xf32>
    %cst_34 = arith.constant dense<0.000000e+00> : vector<8x64xf32>
    %138 = tpu.matmul %87, %137, %cst_34 {dimension_numbers = #tpu.dot_dimension_numbers<[1], [0], [0], [1], [0, 0, 1, 1], [], []>} : vector<8x32xf32>, vector<32x64xf32>, vector<8x64xf32> -> vector<8x64xf32>
    %cst_35 = arith.constant dense<0.000000e+00> : vector<8x64xf32>
    %139 = tpu.matmul %94, %137, %cst_35 {dimension_numbers = #tpu.dot_dimension_numbers<[1], [0], [0], [1], [0, 0, 1, 1], [], []>} : vector<8x32xf32>, vector<32x64xf32>, vector<8x64xf32> -> vector<8x64xf32>
    %cst_36 = arith.constant dense<0.000000e+00> : vector<8x64xf32>
    %140 = tpu.matmul %101, %137, %cst_36 {dimension_numbers = #tpu.dot_dimension_numbers<[1], [0], [0], [1], [0, 0, 1, 1], [], []>} : vector<8x32xf32>, vector<32x64xf32>, vector<8x64xf32> -> vector<8x64xf32>
    %cst_37 = arith.constant dense<0.000000e+00> : vector<8x64xf32>
    %141 = tpu.matmul %108, %137, %cst_37 {dimension_numbers = #tpu.dot_dimension_numbers<[1], [0], [0], [1], [0, 0, 1, 1], [], []>} : vector<8x32xf32>, vector<32x64xf32>, vector<8x64xf32> -> vector<8x64xf32>
    %142 = tpu.concatenate %138, %139, %140, %141 in 1 : vector<8x64xf32>, vector<8x64xf32>, vector<8x64xf32>, vector<8x64xf32> -> vector<8x256xf32>
    %cst_38 = arith.constant dense<0.000000e+00> : vector<8x128xf32>
    %143 = tpu.matmul %142, %109, %cst_38 {dimension_numbers = #tpu.dot_dimension_numbers<[1], [0], [0], [1], [0, 0, 1, 1], [], []>} : vector<8x256xf32>, vector<256x128xf32>, vector<8x128xf32> -> vector<8x128xf32>
    %144 = tpu.concatenate %126, %143 in 0 : vector<8x128xf32>, vector<8x128xf32> -> vector<16x128xf32>
    %c0_39 = arith.constant 0 : index
    %c0_40 = arith.constant 0 : index
    %145 = vector.load %arg6[%c0_39, %c0_40] : memref<16x128xf32, #tpu.memory_space<vmem>>, vector<16x128xf32>
    tpu.vector_store %arg6[%c0_39, %c0_40], %144 {strides = array<i32>} : memref<16x128xf32, #tpu.memory_space<vmem>>, vector<16x128xf32>,
    return
  }
}

</mosaic_0001>

<llo_original>
// kernel: tile.14
$region0: #{tile.14}
  %s0 = inlined_call_operand.vmem [shape: f32[2,1,8,8,16], index: 0, kind: input, shape index: {}]
  %s1 = inlined_call_operand.vmem [shape: f32[16,128], index: 1, kind: output, shape index: {}]
  %v2 = vld [vmem:[%s0] ss:$8 sm:$0xf]
  %v3 = vld [vmem:[%s0] ss:$8 sm:$0xf0]
  %vm4 = vcmask 1047556
  %v5 = vsel %vm4, %v3, %v2
  %vm6 = vcmask 130048
  %7 = vst.msk [vmem:[%s1] sm:$0xff] %vm6, %v5
  %s8 = scalar_lea.vmem %s0, 64
  %v9 = vld [vmem:[%s8] ss:$8 sm:$0xf]
  %s10 = scalar_lea.vmem %s0, 64
  %v11 = vld [vmem:[%s10] ss:$8 sm:$0xf0]
  %vm12 = vcmask 1047556
  %v13 = vsel %vm12, %v11, %v9
  %vm14 = vcmask 130048
  %s15 = scalar_lea.vmem %s1, 8
  %16 = vst.msk [vmem:[%s15] sm:$0xff] %vm14, %v13
  %s17 = scalar_lea.vmem %s0, 7
  %v18 = vld [vmem:[%s17] ss:$8 sm:$0xf]
  %s19 = scalar_lea.vmem %s0, 7
  %v20 = vld [vmem:[%s19] ss:$8 sm:$0xf0]
  %vm21 = vcmask 1047556
  %v22 = vsel %vm21, %v20, %v18
  %23 = vrot.lane.b32.xlu0 %v22, 112
  %v24 = vpop.permute.xlu0 %23
  %vm25 = vcmask 1048448
  %26 = vst.msk [vmem:[%s1] sm:$0xff] %vm25, %v24
  %s27 = scalar_lea.vmem %s0, 71
  %v28 = vld [vmem:[%s27] ss:$8 sm:$0xf]
  %s29 = scalar_lea.vmem %s0, 71
  %v30 = vld [vmem:[%s29] ss:$8 sm:$0xf0]
  %vm31 = vcmask 1047556
  %v32 = vsel %vm31, %v30, %v28
  %33 = vrot.lane.b32.xlu0 %v32, 112
  %v34 = vpop.permute.xlu0 %33
  %vm35 = vcmask 1048448
  %s36 = scalar_lea.vmem %s1, 8
  %37 = vst.msk [vmem:[%s36] sm:$0xff] %vm35, %v34
  %s38 = scalar_lea.vmem %s0, 6
  %v39 = vld [vmem:[%s38] ss:$8 sm:$0xf]
  %s40 = scalar_lea.vmem %s0, 6
  %v41 = vld [vmem:[%s40] ss:$8 sm:$0xf0]
  %vm42 = vcmask 1047556
  %v43 = vsel %vm42, %v41, %v39
  %44 = vrot.lane.b32.xlu0 %v43, 96
  %v45 = vpop.permute.xlu0 %44
  %vm46 = vcmask 917248
  %47 = vst.msk [vmem:[%s1] sm:$0xff] %vm46, %v45
  %s48 = scalar_lea.vmem %s0, 70
  %v49 = vld [vmem:[%s48] ss:$8 sm:$0xf]
  %s50 = scalar_lea.vmem %s0, 70
  %v51 = vld [vmem:[%s50] ss:$8 sm:$0xf0]
  %vm52 = vcmask 1047556
  %v53 = vsel %vm52, %v51, %v49
  %54 = vrot.lane.b32.xlu0 %v53, 96
  %v55 = vpop.permute.xlu0 %54
  %vm56 = vcmask 917248
  %s57 = scalar_lea.vmem %s1, 8
  %58 = vst.msk [vmem:[%s57] sm:$0xff] %vm56, %v55
  %s59 = scalar_lea.vmem %s0, 5
  %v60 = vld [vmem:[%s59] ss:$8 sm:$0xf]
  %s61 = scalar_lea.vmem %s0, 5
  %v62 = vld [vmem:[%s61] ss:$8 sm:$0xf0]
  %vm63 = vcmask 1047556
  %v64 = vsel %vm63, %v62, %v60
  %65 = vrot.lane.b32.xlu0 %v64, 80
  %v66 = vpop.permute.xlu0 %65
  %vm67 = vcmask 786048
  %68 = vst.msk [vmem:[%s1] sm:$0xff] %vm67, %v66
  %s69 = scalar_lea.vmem %s0, 69
  %v70 = vld [vmem:[%s69] ss:$8 sm:$0xf]
  %s71 = scalar_lea.vmem %s0, 69
  %v72 = vld [vmem:[%s71] ss:$8 sm:$0xf0]
  %vm73 = vcmask 1047556
  %v74 = vsel %vm73, %v72, %v70
  %75 = vrot.lane.b32.xlu0 %v74, 80
  %v76 = vpop.permute.xlu0 %75
  %vm77 = vcmask 786048
  %s78 = scalar_lea.vmem %s1, 8
  %79 = vst.msk [vmem:[%s78] sm:$0xff] %vm77, %v76
  %s80 = scalar_lea.vmem %s0, 4
  %v81 = vld [vmem:[%s80] ss:$8 sm:$0xf]
  %s82 = scalar_lea.vmem %s0, 4
  %v83 = vld [vmem:[%s82] ss:$8 sm:$0xf0]
  %vm84 = vcmask 1047556
  %v85 = vsel %vm84, %v83, %v81
  %86 = vrot.lane.b32.xlu0 %v85, 64
  %v87 = vpop.permute.xlu0 %86
  %vm88 = vcmask 654848
  %89 = vst.msk [vmem:[%s1] sm:$0xff] %vm88, %v87
  %s90 = scalar_lea.vmem %s0, 68
  %v91 = vld [vmem:[%s90] ss:$8 sm:$0xf]
  %s92 = scalar_lea.vmem %s0, 68
  %v93 = vld [vmem:[%s92] ss:$8 sm:$0xf0]
  %vm94 = vcmask 1047556
  %v95 = vsel %vm94, %v93, %v91
  %96 = vrot.lane.b32.xlu0 %v95, 64
  %v97 = vpop.permute.xlu0 %96
  %vm98 = vcmask 654848
  %s99 = scalar_lea.vmem %s1, 8
  %100 = vst.msk [vmem:[%s99] sm:$0xff] %vm98, %v97
  %s101 = scalar_lea.vmem %s0, 3
  %v102 = vld [vmem:[%s101] ss:$8 sm:$0xf]
  %s103 = scalar_lea.vmem %s0, 3
  %v104 = vld [vmem:[%s103] ss:$8 sm:$0xf0]
  %vm105 = vcmask 1047556
  %v106 = vsel %vm105, %v104, %v102
  %107 = vrot.lane.b32.xlu0 %v106, 48
  %v108 = vpop.permute.xlu0 %107
  %vm109 = vcmask 523648
  %110 = vst.msk [vmem:[%s1] sm:$0xff] %vm109, %v108
  %s111 = scalar_lea.vmem %s0, 67
  %v112 = vld [vmem:[%s111] ss:$8 sm:$0xf]
  %s113 = scalar_lea.vmem %s0, 67
  %v114 = vld [vmem:[%s113] ss:$8 sm:$0xf0]
  %vm115 = vcmask 1047556
  %v116 = vsel %vm115, %v114, %v112
  %117 = vrot.lane.b32.xlu0 %v116, 48
  %v118 = vpop.permute.xlu0 %117
  %vm119 = vcmask 523648
  %s120 = scalar_lea.vmem %s1, 8
  %121 = vst.msk [vmem:[%s120] sm:$0xff] %vm119, %v118
  %s122 = scalar_lea.vmem %s0, 2
  %v123 = vld [vmem:[%s122] ss:$8 sm:$0xf]
  %s124 = scalar_lea.vmem %s0, 2
  %v125 = vld [vmem:[%s124] ss:$8 sm:$0xf0]
  %vm126 = vcmask 1047556
  %v127 = vsel %vm126, %v125, %v123
  %128 = vrot.lane.b32.xlu0 %v127, 32
  %v129 = vpop.permute.xlu0 %128
  %vm130 = vcmask 392448
  %131 = vst.msk [vmem:[%s1] sm:$0xff] %vm130, %v129
  %s132 = scalar_lea.vmem %s0, 66
  %v133 = vld [vmem:[%s132] ss:$8 sm:$0xf]
  %s134 = scalar_lea.vmem %s0, 66
  %v135 = vld [vmem:[%s134] ss:$8 sm:$0xf0]
  %vm136 = vcmask 1047556
  %v137 = vsel %vm136, %v135, %v133
  %138 = vrot.lane.b32.xlu0 %v137, 32
  %v139 = vpop.permute.xlu0 %138
  %vm140 = vcmask 392448
  %s141 = scalar_lea.vmem %s1, 8
  %142 = vst.msk [vmem:[%s141] sm:$0xff] %vm140, %v139
  %s143 = scalar_lea.vmem %s0, 1
  %v144 = vld [vmem:[%s143] ss:$8 sm:$0xf]
  %s145 = scalar_lea.vmem %s0, 1
  %v146 = vld [vmem:[%s145] ss:$8 sm:$0xf0]
  %vm147 = vcmask 1047556
  %v148 = vsel %vm147, %v146, %v144
  %149 = vrot.lane.b32.xlu0 %v148, 16
  %v150 = vpop.permute.xlu0 %149
  %vm151 = vcmask 261248
  %152 = vst.msk [vmem:[%s1] sm:$0xff] %vm151, %v150
  %s153 = scalar_lea.vmem %s0, 65
  %v154 = vld [vmem:[%s153] ss:$8 sm:$0xf]
  %s155 = scalar_lea.vmem %s0, 65
  %v156 = vld [vmem:[%s155] ss:$8 sm:$0xf0]
  %vm157 = vcmask 1047556
  %v158 = vsel %vm157, %v156, %v154
  %159 = vrot.lane.b32.xlu0 %v158, 16
  %v160 = vpop.permute.xlu0 %159
  %vm161 = vcmask 261248
  %s162 = scalar_lea.vmem %s1, 8
  %163 = vst.msk [vmem:[%s162] sm:$0xff] %vm161, %v160

// kernel: llama_attention_palu_forward.1
$region0: #{llama_attention_palu_forward.1}
  #allocation0 [shape = 'u32[]', space=smem, size = 0x4, offset = 0x4, fixed_abs, tag = 'smem constant byte address 0x4 - core index']
  #allocation1 [shape = 'u32[144,128]{1,0:T(1,128)}', space=vmem, size = 0x12000, scoped, tag = 'internal scratch']
  %s0 = inlined_call_operand.vmem [shape: f32[16,128], index: 0, kind: input, shape index: {}]
  %s1 = inlined_call_operand.vmem [shape: f32[128,576], index: 1, kind: input, shape index: {}]
  %s2 = inlined_call_operand.vmem [shape: f32[256,128], index: 2, kind: input, shape index: {}]
  %s3 = inlined_call_operand.vmem [shape: f32[16,128], index: 3, kind: input, shape index: {}]
  %s4 = inlined_call_operand.vmem [shape: f32[16,128], index: 4, kind: input, shape index: {}]
  %s5 = inlined_call_operand.vmem [shape: f32[2,8,8], index: 5, kind: input, shape index: {}]
  %s6 = inlined_call_operand.hbm [shape: f32[16,128], index: 6, kind: output, shape index: {}]
  %s7 = sld [smem:[#allocation0]]
  $region34: #{llama_attention_palu_forward.1} parent=0
    _
  %s9 = ssub.s32 1, %s7
  %s10 = scalar_select 0, %s9, %s7
  $region1: #{llama_attention_palu_forward.1} parent=0
    #allocation2 [shape = 'u8[8192]{0}', space=vmem, size = 0x2000, scoped, tag = 'output window, operand 0, single buffered']
    #allocation3 [shape = 's32[1]{0}', space=sflag, size = 0x4, scoped, tag = 'scoped memory for llama_attention_palu_forward.1']
    %11 = vsyncpa [#allocation3], 0
    // Predicated region
    $region2: #{llama_attention_palu_forward.1} parent=1 // pred_check
      _
    $region3: #{llama_attention_palu_forward.1} parent=1 // pred_check_branch
      %13 = sbr.rel (0) target = $region5
    $region4: #{llama_attention_palu_forward.1} parent=1 // pred_region
      _
    $region5: #{llama_attention_palu_forward.1} parent=1 // pred_fallthru
      _
    // Predicated region
    $region6: #{llama_attention_palu_forward.1} parent=1 // pred_check
      _
    $region7: #{llama_attention_palu_forward.1} parent=1 // pred_check_branch
      %15 = sbr.rel (0) target = $region9
    $region8: #{llama_attention_palu_forward.1} parent=1 // pred_region
      _
    $region9: #{llama_attention_palu_forward.1} parent=1 // pred_fallthru
      _
    // Predicated region
    $region10: #{llama_attention_palu_forward.1} parent=1 // pred_check
      _
    $region11: #{llama_attention_palu_forward.1} parent=1 // pred_check_branch
      %17 = sbr.rel (0) target = $region13
    $region12: #{llama_attention_palu_forward.1} parent=1 // pred_region
      _
    $region13: #{llama_attention_palu_forward.1} parent=1 // pred_fallthru
      _
    // Predicated region
    $region14: #{llama_attention_palu_forward.1} parent=1 // pred_check
      _
    $region15: #{llama_attention_palu_forward.1} parent=1 // pred_check_branch
      %19 = sbr.rel (0) target = $region17
    $region16: #{llama_attention_palu_forward.1} parent=1 // pred_region
      _
    $region17: #{llama_attention_palu_forward.1} parent=1 // pred_fallthru
      _
    // Predicated region
    $region18: #{llama_attention_palu_forward.1} parent=1 // pred_check
      _
    $region19: #{llama_attention_palu_forward.1} parent=1 // pred_check_branch
      %21 = sbr.rel (0) target = $region21
    $region20: #{llama_attention_palu_forward.1} parent=1 // pred_region
      _
    $region21: #{llama_attention_palu_forward.1} parent=1 // pred_fallthru
      _
    // Predicated region
    $region22: #{llama_attention_palu_forward.1} parent=1 // pred_check
      _
    $region23: #{llama_attention_palu_forward.1} parent=1 // pred_check_branch
      %23 = sbr.rel (0) target = $region25
    $region24: #{llama_attention_palu_forward.1} parent=1 // pred_region
      _
    $region25: #{llama_attention_palu_forward.1} parent=1 // pred_fallthru
      _
    %v24 = vld [vmem:[%s0] sm:$0xff]
    %v25 = vld [vmem:[%s0 + $0x8] sm:$0xff]
    %v26 = vld [vmem:[%s1] sm:$0xff]
    %v27 = vld [vmem:[%s1 + $0x8] sm:$0xff]
    %v28 = vld [vmem:[%s1 + $0x10] sm:$0xff]
    %v29 = vld [vmem:[%s1 + $0x18] sm:$0xff]
    %v30 = vld [vmem:[%s1 + $0x20] sm:$0xff]
    %v31 = vld [vmem:[%s1 + $0x28] sm:$0xff]
    %v32 = vld [vmem:[%s1 + $0x30] sm:$0xff]
    %v33 = vld [vmem:[%s1 + $0x38] sm:$0xff]
    %v34 = vld [vmem:[%s1 + $0x40] sm:$0xff]
    %v35 = vld [vmem:[%s1 + $0x48] sm:$0xff]
    %v36 = vld [vmem:[%s1 + $0x50] sm:$0xff]
    %v37 = vld [vmem:[%s1 + $0x58] sm:$0xff]
    %v38 = vld [vmem:[%s1 + $0x60] sm:$0xff]
    %v39 = vld [vmem:[%s1 + $0x68] sm:$0xff]
    %v40 = vld [vmem:[%s1 + $0x70] sm:$0xff]
    %v41 = vld [vmem:[%s1 + $0x78] sm:$0xff]
    %v42 = vld [vmem:[%s1 + $0x80] sm:$0xff]
    %v43 = vld [vmem:[%s1 + $0x88] sm:$0xff]
    %v44 = vld [vmem:[%s1 + $0x90] sm:$0xff]
    %v45 = vld [vmem:[%s1 + $0x98] sm:$0xff]
    %v46 = vld [vmem:[%s1 + $0xa0] sm:$0xff]
    %v47 = vld [vmem:[%s1 + $0xa8] sm:$0xff]
    %v48 = vld [vmem:[%s1 + $0xb0] sm:$0xff]
    %v49 = vld [vmem:[%s1 + $0xb8] sm:$0xff]
    %v50 = vld [vmem:[%s1 + $0xc0] sm:$0xff]
    %v51 = vld [vmem:[%s1 + $0xc8] sm:$0xff]
    %v52 = vld [vmem:[%s1 + $0xd0] sm:$0xff]
    %v53 = vld [vmem:[%s1 + $0xd8] sm:$0xff]
    %v54 = vld [vmem:[%s1 + $0xe0] sm:$0xff]
    %v55 = vld [vmem:[%s1 + $0xe8] sm:$0xff]
    %v56 = vld [vmem:[%s1 + $0xf0] sm:$0xff]
    %v57 = vld [vmem:[%s1 + $0xf8] sm:$0xff]
    %v58 = vld [vmem:[%s1 + $0x100] sm:$0xff]
    %v59 = vld [vmem:[%s1 + $0x108] sm:$0xff]
    %v60 = vld [vmem:[%s1 + $0x110] sm:$0xff]
    %v61 = vld [vmem:[%s1 + $0x118] sm:$0xff]
    %v62 = vld [vmem:[%s1 + $0x120] sm:$0xff]
    %v63 = vld [vmem:[%s1 + $0x128] sm:$0xff]
    %v64 = vld [vmem:[%s1 + $0x130] sm:$0xff]
    %v65 = vld [vmem:[%s1 + $0x138] sm:$0xff]
    %v66 = vld [vmem:[%s1 + $0x140] sm:$0xff]
    %v67 = vld [vmem:[%s1 + $0x148] sm:$0xff]
    %v68 = vld [vmem:[%s1 + $0x150] sm:$0xff]
    %v69 = vld [vmem:[%s1 + $0x158] sm:$0xff]
    %v70 = vld [vmem:[%s1 + $0x160] sm:$0xff]
    %v71 = vld [vmem:[%s1 + $0x168] sm:$0xff]
    %v72 = vld [vmem:[%s1 + $0x170] sm:$0xff]
    %v73 = vld [vmem:[%s1 + $0x178] sm:$0xff]
    %v74 = vld [vmem:[%s1 + $0x180] sm:$0xff]
    %v75 = vld [vmem:[%s1 + $0x188] sm:$0xff]
    %v76 = vld [vmem:[%s1 + $0x190] sm:$0xff]
    %v77 = vld [vmem:[%s1 + $0x198] sm:$0xff]
    %v78 = vld [vmem:[%s1 + $0x1a0] sm:$0xff]
    %v79 = vld [vmem:[%s1 + $0x1a8] sm:$0xff]
    %v80 = vld [vmem:[%s1 + $0x1b0] sm:$0xff]
    %v81 = vld [vmem:[%s1 + $0x1b8] sm:$0xff]
    %v82 = vld [vmem:[%s1 + $0x1c0] sm:$0xff]
    %v83 = vld [vmem:[%s1 + $0x1c8] sm:$0xff]
    %v84 = vld [vmem:[%s1 + $0x1d0] sm:$0xff]
    %v85 = vld [vmem:[%s1 + $0x1d8] sm:$0xff]
    %v86 = vld [vmem:[%s1 + $0x1e0] sm:$0xff]
    %v87 = vld [vmem:[%s1 + $0x1e8] sm:$0xff]
    %v88 = vld [vmem:[%s1 + $0x1f0] sm:$0xff]
    %v89 = vld [vmem:[%s1 + $0x1f8] sm:$0xff]
    %v90 = vld [vmem:[%s1 + $0x200] sm:$0xff]
    %v91 = vld [vmem:[%s1 + $0x208] sm:$0xff]
    %v92 = vld [vmem:[%s1 + $0x210] sm:$0xff]
    %v93 = vld [vmem:[%s1 + $0x218] sm:$0xff]
    %v94 = vld [vmem:[%s1 + $0x220] sm:$0xff]
    %v95 = vld [vmem:[%s1 + $0x228] sm:$0xff]
    %v96 = vld [vmem:[%s1 + $0x230] sm:$0xff]
    %v97 = vld [vmem:[%s1 + $0x238] sm:$0xff]
    %v98 = vld [vmem:[%s1 + $0x240] sm:$0xff]
    %v99 = vld [vmem:[%s1 + $0x248] sm:$0xff]
    %v100 = vld [vmem:[%s1 + $0x250] sm:$0xff]
    %v101 = vld [vmem:[%s1 + $0x258] sm:$0xff]
    %v102 = vld [vmem:[%s1 + $0x260] sm:$0xff]
    %v103 = vld [vmem:[%s1 + $0x268] sm:$0xff]
    %v104 = vld [vmem:[%s1 + $0x270] sm:$0xff]
    %v105 = vld [vmem:[%s1 + $0x278] sm:$0xff]
    %106 = vmatprep.subr.mxu0 %v102
    %107 = vmatpush1.msra.mxu0 %v101
    %108 = vmatprep.subr.mxu0 %v97
    %109 = vmatpush1.msra.mxu0 %v96
    %110 = vmatprep.subr.mxu0 %v92
    %111 = vmatpush1.msra.mxu0 %v91
    %112 = vmatprep.subr.mxu0 %v87
    %113 = vmatpush1.msra.mxu0 %v86
    %114 = vmatprep.subr.mxu0 %v82
    %115 = vmatpush1.msra.mxu0 %v81
    %116 = vmatprep.subr.mxu0 %v77
    %117 = vmatpush1.msra.mxu0 %v76
    %118 = vmatprep.subr.mxu0 %v72
    %119 = vmatpush1.msra.mxu0 %v71
    %120 = vmatprep.subr.mxu0 %v67
    %121 = vmatpush1.msra.mxu0 %v66
    %122 = vmatprep.subr.mxu0 %v62
    %123 = vmatpush1.msra.mxu0 %v61
    %124 = vmatprep.subr.mxu0 %v57
    %125 = vmatpush1.msra.mxu0 %v56
    %126 = vmatprep.subr.mxu0 %v52
    %127 = vmatpush1.msra.mxu0 %v51
    %128 = vmatprep.subr.mxu0 %v47
    %129 = vmatpush1.msra.mxu0 %v46
    %130 = vmatprep.subr.mxu0 %v42
    %131 = vmatpush1.msra.mxu0 %v41
    %132 = vmatprep.subr.mxu0 %v37
    %133 = vmatpush1.msra.mxu0 %v36
    %134 = vmatprep.subr.mxu0 %v32
    %135 = vmatpush1.msra.mxu0 %v31
    %136 = vmatprep.subr.mxu0 %v27
    %137 = vmatpush1.msra.mxu0 %v26
    %138 = vmatprep.subr.mxu0 0.0
    %139 = vmatpush2.msra.mxu0 0.0
    %140 = vmatprep.subr.mxu0 0.0
    %141 = vmatpush2.msra.mxu0 0.0
    %142 = vmatprep.subr.mxu0 0.0
    %143 = vmatpush2.msra.mxu0 0.0
    %144 = vmatprep.subr.mxu0 0.0
    %145 = vmatpush2.msra.mxu0 0.0
    %146 = vmatprep.subr.mxu0 0.0
    %147 = vmatpush2.msra.mxu0 0.0
    %148 = vmatprep.subr.mxu0 0.0
    %149 = vmatpush2.msra.mxu0 0.0
    %150 = vmatprep.subr.mxu0 0.0
    %151 = vmatpush2.msra.mxu0 0.0
    %152 = vmatprep.subr.mxu0 0.0
    %153 = vmatpush2.msra.mxu0 0.0
    %154 = vmatprep.subr.mxu0 0.0
    %155 = vmatpush2.msra.mxu0 0.0
    %156 = vmatprep.subr.mxu0 0.0
    %157 = vmatpush2.msra.mxu0 0.0
    %158 = vmatprep.subr.mxu0 0.0
    %159 = vmatpush2.msra.mxu0 0.0
    %160 = vmatprep.subr.mxu0 0.0
    %161 = vmatpush2.msra.mxu0 0.0
    %162 = vmatprep.subr.mxu0 0.0
    %163 = vmatpush2.msra.mxu0 0.0
    %164 = vmatprep.subr.mxu0 0.0
    %165 = vmatpush2.msra.mxu0 0.0
    %166 = vmatprep.subr.mxu0 0.0
    %167 = vmatpush2.msra.mxu0 0.0
    %168 = vmatprep.subr.mxu0 0.0
    %169 = vmatpush2.msra.mxu0 0.0
    %170 = vmatprep.mubr.f32.mxu0 0.0
    %171 = vmatmul.mubr.f32.gmra.mxu0 %v24
    %v172 = vpop.f32.mrf.mxu0
    %v173 = vadd.f32 0.0, %v172
    %v174 = vpop.f32.mrf.mxu0
    %v175 = vadd.f32 0.0, %v174
    %176 = vmatprep.mubr.f32.mxu0 0.0
    %177 = vmatmul.mubr.f32.gmra.mxu0 %v25
    %v178 = vpop.f32.mrf.mxu0
    %v179 = vadd.f32 0.0, %v178
    %v180 = vpop.f32.mrf.mxu0
    %v181 = vadd.f32 0.0, %v180
    %182 = vdwg.mxu0
    %183 = vmatprep.subr.mxu0 %v104
    %184 = vmatpush1.msra.mxu0 %v103
    %185 = vmatprep.subr.mxu0 %v99
    %186 = vmatpush1.msra.mxu0 %v98
    %187 = vmatprep.subr.mxu0 %v94
    %188 = vmatpush1.msra.mxu0 %v93
    %189 = vmatprep.subr.mxu0 %v89
    %190 = vmatpush1.msra.mxu0 %v88
    %191 = vmatprep.subr.mxu0 %v84
    %192 = vmatpush1.msra.mxu0 %v83
    %193 = vmatprep.subr.mxu0 %v79
    %194 = vmatpush1.msra.mxu0 %v78
    %195 = vmatprep.subr.mxu0 %v74
    %196 = vmatpush1.msra.mxu0 %v73
    %197 = vmatprep.subr.mxu0 %v69
    %198 = vmatpush1.msra.mxu0 %v68
    %199 = vmatprep.subr.mxu0 %v64
    %200 = vmatpush1.msra.mxu0 %v63
    %201 = vmatprep.subr.mxu0 %v59
    %202 = vmatpush1.msra.mxu0 %v58
    %203 = vmatprep.subr.mxu0 %v54
    %204 = vmatpush1.msra.mxu0 %v53
    %205 = vmatprep.subr.mxu0 %v49
    %206 = vmatpush1.msra.mxu0 %v48
    %207 = vmatprep.subr.mxu0 %v44
    %208 = vmatpush1.msra.mxu0 %v43
    %209 = vmatprep.subr.mxu0 %v39
    %210 = vmatpush1.msra.mxu0 %v38
    %211 = vmatprep.subr.mxu0 %v34
    %212 = vmatpush1.msra.mxu0 %v33
    %213 = vmatprep.subr.mxu0 %v29
    %214 = vmatpush1.msra.mxu0 %v28
    %215 = vmatprep.subr.mxu0 0.0
    %216 = vmatpush2.msra.mxu0 0.0
    %217 = vmatprep.subr.mxu0 0.0
    %218 = vmatpush2.msra.mxu0 0.0
    %219 = vmatprep.subr.mxu0 0.0
    %220 = vmatpush2.msra.mxu0 0.0
    %221 = vmatprep.subr.mxu0 0.0
    %222 = vmatpush2.msra.mxu0 0.0
    %223 = vmatprep.subr.mxu0 0.0
    %224 = vmatpush2.msra.mxu0 0.0
    %225 = vmatprep.subr.mxu0 0.0
    %226 = vmatpush2.msra.mxu0 0.0
    %227 = vmatprep.subr.mxu0 0.0
    %228 = vmatpush2.msra.mxu0 0.0
    %229 = vmatprep.subr.mxu0 0.0
    %230 = vmatpush2.msra.mxu0 0.0
    %231 = vmatprep.subr.mxu0 0.0
    %232 = vmatpush2.msra.mxu0 0.0
    %233 = vmatprep.subr.mxu0 0.0
    %234 = vmatpush2.msra.mxu0 0.0
    %235 = vmatprep.subr.mxu0 0.0
    %236 = vmatpush2.msra.mxu0 0.0
    %237 = vmatprep.subr.mxu0 0.0
    %238 = vmatpush2.msra.mxu0 0.0
    %239 = vmatprep.subr.mxu0 0.0
    %240 = vmatpush2.msra.mxu0 0.0
    %241 = vmatprep.subr.mxu0 0.0
    %242 = vmatpush2.msra.mxu0 0.0
    %243 = vmatprep.subr.mxu0 0.0
    %244 = vmatpush2.msra.mxu0 0.0
    %245 = vmatprep.subr.mxu0 0.0
    %246 = vmatpush2.msra.mxu0 0.0
    %247 = vmatprep.mubr.f32.mxu0 0.0
    %248 = vmatmul.mubr.f32.gmra.mxu0 %v24
    %v249 = vpop.f32.mrf.mxu0
    %v250 = vadd.f32 0.0, %v249
    %v251 = vpop.f32.mrf.mxu0
    %v252 = vadd.f32 0.0, %v251
    %253 = vmatprep.mubr.f32.mxu0 0.0
    %254 = vmatmul.mubr.f32.gmra.mxu0 %v25
    %v255 = vpop.f32.mrf.mxu0
    %v256 = vadd.f32 0.0, %v255
    %v257 = vpop.f32.mrf.mxu0
    %v258 = vadd.f32 0.0, %v257
    %259 = vdwg.mxu0
    %260 = vmatprep.subr.mxu0 0.0
    %261 = vmatpush1.msra.mxu0 %v105
    %262 = vmatprep.subr.mxu0 0.0
    %263 = vmatpush1.msra.mxu0 %v100
    %264 = vmatprep.subr.mxu0 0.0
    %265 = vmatpush1.msra.mxu0 %v95
    %266 = vmatprep.subr.mxu0 0.0
    %267 = vmatpush1.msra.mxu0 %v90
    %268 = vmatprep.subr.mxu0 0.0
    %269 = vmatpush1.msra.mxu0 %v85
    %270 = vmatprep.subr.mxu0 0.0
    %271 = vmatpush1.msra.mxu0 %v80
    %272 = vmatprep.subr.mxu0 0.0
    %273 = vmatpush1.msra.mxu0 %v75
    %274 = vmatprep.subr.mxu0 0.0
    %275 = vmatpush1.msra.mxu0 %v70
    %276 = vmatprep.subr.mxu0 0.0
    %277 = vmatpush1.msra.mxu0 %v65
    %278 = vmatprep.subr.mxu0 0.0
    %279 = vmatpush1.msra.mxu0 %v60
    %280 = vmatprep.subr.mxu0 0.0
    %281 = vmatpush1.msra.mxu0 %v55
    %282 = vmatprep.subr.mxu0 0.0
    %283 = vmatpush1.msra.mxu0 %v50
    %284 = vmatprep.subr.mxu0 0.0
    %285 = vmatpush1.msra.mxu0 %v45
    %286 = vmatprep.subr.mxu0 0.0
    %287 = vmatpush1.msra.mxu0 %v40
    %288 = vmatprep.subr.mxu0 0.0
    %289 = vmatpush1.msra.mxu0 %v35
    %290 = vmatprep.subr.mxu0 0.0
    %291 = vmatpush1.msra.mxu0 %v30
    %292 = vmatprep.subr.mxu0 0.0
    %293 = vmatpush2.msra.mxu0 0.0
    %294 = vmatprep.subr.mxu0 0.0
    %295 = vmatpush2.msra.mxu0 0.0
    %296 = vmatprep.subr.mxu0 0.0
    %297 = vmatpush2.msra.mxu0 0.0
    %298 = vmatprep.subr.mxu0 0.0
    %299 = vmatpush2.msra.mxu0 0.0
    %300 = vmatprep.subr.mxu0 0.0
    %301 = vmatpush2.msra.mxu0 0.0
    %302 = vmatprep.subr.mxu0 0.0
    %303 = vmatpush2.msra.mxu0 0.0
    %304 = vmatprep.subr.mxu0 0.0
    %305 = vmatpush2.msra.mxu0 0.0
    %306 = vmatprep.subr.mxu0 0.0
    %307 = vmatpush2.msra.mxu0 0.0
    %308 = vmatprep.subr.mxu0 0.0
    %309 = vmatpush2.msra.mxu0 0.0
    %310 = vmatprep.subr.mxu0 0.0
    %311 = vmatpush2.msra.mxu0 0.0
    %312 = vmatprep.subr.mxu0 0.0
    %313 = vmatpush2.msra.mxu0 0.0
    %314 = vmatprep.subr.mxu0 0.0
    %315 = vmatpush2.msra.mxu0 0.0
    %316 = vmatprep.subr.mxu0 0.0
    %317 = vmatpush2.msra.mxu0 0.0
    %318 = vmatprep.subr.mxu0 0.0
    %319 = vmatpush2.msra.mxu0 0.0
    %320 = vmatprep.subr.mxu0 0.0
    %321 = vmatpush2.msra.mxu0 0.0
    %322 = vmatprep.subr.mxu0 0.0
    %323 = vmatpush2.msra.mxu0 0.0
    %324 = vmatprep.mubr.f32.mxu0 0.0
    %325 = vmatmul.mubr.f32.gmra.mxu0 %v24
    %v326 = vpop.f32.mrf.mxu0
    %v327 = vadd.f32 0.0, %v326
    %v328 = vpop.f32.mrf.mxu0
    %329 = vmatprep.mubr.f32.mxu0 0.0
    %330 = vmatmul.mubr.f32.gmra.mxu0 %v25
    %v331 = vpop.f32.mrf.mxu0
    %v332 = vadd.f32 0.0, %v331
    %v333 = vpop.f32.mrf.mxu0
    %334 = vdwg.mxu0
    %v335 = vld [vmem:[%s3] sm:$0xff]
    %v336 = vld [vmem:[%s3 + $0x8] sm:$0xff]
    %v337 = vld [vmem:[%s4] sm:$0xff]
    %v338 = vld [vmem:[%s4 + $0x8] sm:$0xff]
    %v339 = vmul.f32 %v173, %v335
    %v340 = vmul.f32 %v179, %v336
    %v341 = vmul.f32 %v175, %v337
    %v342 = vmul.f32 %v181, %v338
    %v343 = vadd.f32 %v339, %v341
    %v344 = vadd.f32 %v340, %v342
    %v345 = vmul.f32 %v250, %v335
    %v346 = vmul.f32 %v256, %v336
    %v347 = vmul.f32 %v252, %v337
    %v348 = vmul.f32 %v258, %v338
    %v349 = vadd.f32 %v345, %v347
    %v350 = vadd.f32 %v346, %v348
    %vm351 = vcmask 130048
    %v353 = vsel %vm351, %v343, 0
    %v356 = vsel %vm351, %v349, 0
    %358 = vmatprep.subr.mxu0 0.0
    %359 = vmatpush1.xpose.msra.mxu0 0.0
    %360 = vmatprep.subr.mxu0 0.0
    %361 = vmatpush1.xpose.msra.mxu0 0.0
    %362 = vmatprep.subr.mxu0 0.0
    %363 = vmatpush1.xpose.msra.mxu0 0.0
    %364 = vmatprep.subr.mxu0 0.0
    %365 = vmatpush1.xpose.msra.mxu0 0.0
    %366 = vmatprep.subr.mxu0 0.0
    %367 = vmatpush1.xpose.msra.mxu0 0.0
    %368 = vmatprep.subr.mxu0 0.0
    %369 = vmatpush1.xpose.msra.mxu0 0.0
    %370 = vmatprep.subr.mxu0 0.0
    %371 = vmatpush1.xpose.msra.mxu0 0.0
    %372 = vmatprep.subr.mxu0 0.0
    %373 = vmatpush1.xpose.msra.mxu0 0.0
    %374 = vmatprep.subr.mxu0 0.0
    %375 = vmatpush1.xpose.msra.mxu0 0.0
    %376 = vmatprep.subr.mxu0 0.0
    %377 = vmatpush1.xpose.msra.mxu0 0.0
    %378 = vmatprep.subr.mxu0 0.0
    %379 = vmatpush1.xpose.msra.mxu0 0.0
    %380 = vmatprep.subr.mxu0 0.0
    %381 = vmatpush1.xpose.msra.mxu0 0.0
    %382 = vmatprep.subr.mxu0 0.0
    %383 = vmatpush1.xpose.msra.mxu0 0.0
    %384 = vmatprep.subr.mxu0 0.0
    %385 = vmatpush1.xpose.msra.mxu0 0.0
    %386 = vmatprep.subr.mxu0 0.0
    %387 = vmatpush1.xpose.msra.mxu0 0.0
    %388 = vmatprep.subr.mxu0 0.0
    %389 = vmatpush1.xpose.msra.mxu0 %v356
    %390 = vmatprep.subr.mxu0 0.0
    %391 = vmatpush2.xpose.msra.mxu0 0.0
    %392 = vmatprep.subr.mxu0 0.0
    %393 = vmatpush2.xpose.msra.mxu0 0.0
    %394 = vmatprep.subr.mxu0 0.0
    %395 = vmatpush2.xpose.msra.mxu0 0.0
    %396 = vmatprep.subr.mxu0 0.0
    %397 = vmatpush2.xpose.msra.mxu0 0.0
    %398 = vmatprep.subr.mxu0 0.0
    %399 = vmatpush2.xpose.msra.mxu0 0.0
    %400 = vmatprep.subr.mxu0 0.0
    %401 = vmatpush2.xpose.msra.mxu0 0.0
    %402 = vmatprep.subr.mxu0 0.0
    %403 = vmatpush2.xpose.msra.mxu0 0.0
    %404 = vmatprep.subr.mxu0 0.0
    %405 = vmatpush2.xpose.msra.mxu0 0.0
    %406 = vmatprep.subr.mxu0 0.0
    %407 = vmatpush2.xpose.msra.mxu0 0.0
    %408 = vmatprep.subr.mxu0 0.0
    %409 = vmatpush2.xpose.msra.mxu0 0.0
    %410 = vmatprep.subr.mxu0 0.0
    %411 = vmatpush2.xpose.msra.mxu0 0.0
    %412 = vmatprep.subr.mxu0 0.0
    %413 = vmatpush2.xpose.msra.mxu0 0.0
    %414 = vmatprep.subr.mxu0 0.0
    %415 = vmatpush2.xpose.msra.mxu0 0.0
    %416 = vmatprep.subr.mxu0 0.0
    %417 = vmatpush2.xpose.msra.mxu0 0.0
    %418 = vmatprep.subr.mxu0 0.0
    %419 = vmatpush2.xpose.msra.mxu0 0.0
    %420 = vmatprep.subr.mxu0 0.0
    %421 = vmatpush2.xpose.msra.mxu0 0.0
    %422 = vmatprep.mubr.f32.mxu0 0.0
    %423 = vmatmul.mubr.f32.gmra.mxu0 %v353
    %v424 = vpop.f32.mrf.mxu0
    %v425 = vadd.f32 0.0, %v424
    %v426 = vpop.f32.mrf.mxu0
    %427 = vdwg.mxu0
    %v429 = vsel %vm351, %v344, 0
    %v432 = vsel %vm351, %v350, 0
    %434 = vmatprep.subr.mxu0 0.0
    %435 = vmatpush1.xpose.msra.mxu0 0.0
    %436 = vmatprep.subr.mxu0 0.0
    %437 = vmatpush1.xpose.msra.mxu0 0.0
    %438 = vmatprep.subr.mxu0 0.0
    %439 = vmatpush1.xpose.msra.mxu0 0.0
    %440 = vmatprep.subr.mxu0 0.0
    %441 = vmatpush1.xpose.msra.mxu0 0.0
    %442 = vmatprep.subr.mxu0 0.0
    %443 = vmatpush1.xpose.msra.mxu0 0.0
    %444 = vmatprep.subr.mxu0 0.0
    %445 = vmatpush1.xpose.msra.mxu0 0.0
    %446 = vmatprep.subr.mxu0 0.0
    %447 = vmatpush1.xpose.msra.mxu0 0.0
    %448 = vmatprep.subr.mxu0 0.0
    %449 = vmatpush1.xpose.msra.mxu0 0.0
    %450 = vmatprep.subr.mxu0 0.0
    %451 = vmatpush1.xpose.msra.mxu0 0.0
    %452 = vmatprep.subr.mxu0 0.0
    %453 = vmatpush1.xpose.msra.mxu0 0.0
    %454 = vmatprep.subr.mxu0 0.0
    %455 = vmatpush1.xpose.msra.mxu0 0.0
    %456 = vmatprep.subr.mxu0 0.0
    %457 = vmatpush1.xpose.msra.mxu0 0.0
    %458 = vmatprep.subr.mxu0 0.0
    %459 = vmatpush1.xpose.msra.mxu0 0.0
    %460 = vmatprep.subr.mxu0 0.0
    %461 = vmatpush1.xpose.msra.mxu0 0.0
    %462 = vmatprep.subr.mxu0 0.0
    %463 = vmatpush1.xpose.msra.mxu0 0.0
    %464 = vmatprep.subr.mxu0 0.0
    %465 = vmatpush1.xpose.msra.mxu0 %v432
    %466 = vmatprep.subr.mxu0 0.0
    %467 = vmatpush2.xpose.msra.mxu0 0.0
    %468 = vmatprep.subr.mxu0 0.0
    %469 = vmatpush2.xpose.msra.mxu0 0.0
    %470 = vmatprep.subr.mxu0 0.0
    %471 = vmatpush2.xpose.msra.mxu0 0.0
    %472 = vmatprep.subr.mxu0 0.0
    %473 = vmatpush2.xpose.msra.mxu0 0.0
    %474 = vmatprep.subr.mxu0 0.0
    %475 = vmatpush2.xpose.msra.mxu0 0.0
    %476 = vmatprep.subr.mxu0 0.0
    %477 = vmatpush2.xpose.msra.mxu0 0.0
    %478 = vmatprep.subr.mxu0 0.0
    %479 = vmatpush2.xpose.msra.mxu0 0.0
    %480 = vmatprep.subr.mxu0 0.0
    %481 = vmatpush2.xpose.msra.mxu0 0.0
    %482 = vmatprep.subr.mxu0 0.0
    %483 = vmatpush2.xpose.msra.mxu0 0.0
    %484 = vmatprep.subr.mxu0 0.0
    %485 = vmatpush2.xpose.msra.mxu0 0.0
    %486 = vmatprep.subr.mxu0 0.0
    %487 = vmatpush2.xpose.msra.mxu0 0.0
    %488 = vmatprep.subr.mxu0 0.0
    %489 = vmatpush2.xpose.msra.mxu0 0.0
    %490 = vmatprep.subr.mxu0 0.0
    %491 = vmatpush2.xpose.msra.mxu0 0.0
    %492 = vmatprep.subr.mxu0 0.0
    %493 = vmatpush2.xpose.msra.mxu0 0.0
    %494 = vmatprep.subr.mxu0 0.0
    %495 = vmatpush2.xpose.msra.mxu0 0.0
    %496 = vmatprep.subr.mxu0 0.0
    %497 = vmatpush2.xpose.msra.mxu0 0.0
    %498 = vmatprep.mubr.f32.mxu0 0.0
    %499 = vmatmul.mubr.f32.gmra.mxu0 %v429
    %v500 = vpop.f32.mrf.mxu0
    %v501 = vadd.f32 0.0, %v500
    %v502 = vpop.f32.mrf.mxu0
    %503 = vdwg.mxu0
    %504 = vrot.lane.b32.xlu0 %v343, 112
    %v505 = vpop.permute.xlu0 %504
    %506 = vrot.lane.b32.xlu0 %v349, 112
    %v507 = vpop.permute.xlu0 %506
    %v508 = vsel %vm351, %v505, 0
    %v510 = vsel %vm351, %v507, 0
    %512 = vmatprep.subr.mxu0 0.0
    %513 = vmatpush1.xpose.msra.mxu0 0.0
    %514 = vmatprep.subr.mxu0 0.0
    %515 = vmatpush1.xpose.msra.mxu0 0.0
    %516 = vmatprep.subr.mxu0 0.0
    %517 = vmatpush1.xpose.msra.mxu0 0.0
    %518 = vmatprep.subr.mxu0 0.0
    %519 = vmatpush1.xpose.msra.mxu0 0.0
    %520 = vmatprep.subr.mxu0 0.0
    %521 = vmatpush1.xpose.msra.mxu0 0.0
    %522 = vmatprep.subr.mxu0 0.0
    %523 = vmatpush1.xpose.msra.mxu0 0.0
    %524 = vmatprep.subr.mxu0 0.0
    %525 = vmatpush1.xpose.msra.mxu0 0.0
    %526 = vmatprep.subr.mxu0 0.0
    %527 = vmatpush1.xpose.msra.mxu0 0.0
    %528 = vmatprep.subr.mxu0 0.0
    %529 = vmatpush1.xpose.msra.mxu0 0.0
    %530 = vmatprep.subr.mxu0 0.0
    %531 = vmatpush1.xpose.msra.mxu0 0.0
    %532 = vmatprep.subr.mxu0 0.0
    %533 = vmatpush1.xpose.msra.mxu0 0.0
    %534 = vmatprep.subr.mxu0 0.0
    %535 = vmatpush1.xpose.msra.mxu0 0.0
    %536 = vmatprep.subr.mxu0 0.0
    %537 = vmatpush1.xpose.msra.mxu0 0.0
    %538 = vmatprep.subr.mxu0 0.0
    %539 = vmatpush1.xpose.msra.mxu0 0.0
    %540 = vmatprep.subr.mxu0 0.0
    %541 = vmatpush1.xpose.msra.mxu0 0.0
    %542 = vmatprep.subr.mxu0 0.0
    %543 = vmatpush1.xpose.msra.mxu0 %v510
    %544 = vmatprep.subr.mxu0 0.0
    %545 = vmatpush2.xpose.msra.mxu0 0.0
    %546 = vmatprep.subr.mxu0 0.0
    %547 = vmatpush2.xpose.msra.mxu0 0.0
    %548 = vmatprep.subr.mxu0 0.0
    %549 = vmatpush2.xpose.msra.mxu0 0.0
    %550 = vmatprep.subr.mxu0 0.0
    %551 = vmatpush2.xpose.msra.mxu0 0.0
    %552 = vmatprep.subr.mxu0 0.0
    %553 = vmatpush2.xpose.msra.mxu0 0.0
    %554 = vmatprep.subr.mxu0 0.0
    %555 = vmatpush2.xpose.msra.mxu0 0.0
    %556 = vmatprep.subr.mxu0 0.0
    %557 = vmatpush2.xpose.msra.mxu0 0.0
    %558 = vmatprep.subr.mxu0 0.0
    %559 = vmatpush2.xpose.msra.mxu0 0.0
    %560 = vmatprep.subr.mxu0 0.0
    %561 = vmatpush2.xpose.msra.mxu0 0.0
    %562 = vmatprep.subr.mxu0 0.0
    %563 = vmatpush2.xpose.msra.mxu0 0.0
    %564 = vmatprep.subr.mxu0 0.0
    %565 = vmatpush2.xpose.msra.mxu0 0.0
    %566 = vmatprep.subr.mxu0 0.0
    %567 = vmatpush2.xpose.msra.mxu0 0.0
    %568 = vmatprep.subr.mxu0 0.0
    %569 = vmatpush2.xpose.msra.mxu0 0.0
    %570 = vmatprep.subr.mxu0 0.0
    %571 = vmatpush2.xpose.msra.mxu0 0.0
    %572 = vmatprep.subr.mxu0 0.0
    %573 = vmatpush2.xpose.msra.mxu0 0.0
    %574 = vmatprep.subr.mxu0 0.0
    %575 = vmatpush2.xpose.msra.mxu0 0.0
    %576 = vmatprep.mubr.f32.mxu0 0.0
    %577 = vmatmul.mubr.f32.gmra.mxu0 %v508
    %v578 = vpop.f32.mrf.mxu0
    %v579 = vadd.f32 0.0, %v578
    %v580 = vpop.f32.mrf.mxu0
    %581 = vdwg.mxu0
    %582 = vrot.lane.b32.xlu0 %v344, 112
    %v583 = vpop.permute.xlu0 %582
    %584 = vrot.lane.b32.xlu0 %v350, 112
    %v585 = vpop.permute.xlu0 %584
    %v586 = vsel %vm351, %v583, 0
    %v588 = vsel %vm351, %v585, 0
    %590 = vmatprep.subr.mxu0 0.0
    %591 = vmatpush1.xpose.msra.mxu0 0.0
    %592 = vmatprep.subr.mxu0 0.0
    %593 = vmatpush1.xpose.msra.mxu0 0.0
    %594 = vmatprep.subr.mxu0 0.0
    %595 = vmatpush1.xpose.msra.mxu0 0.0
    %596 = vmatprep.subr.mxu0 0.0
    %597 = vmatpush1.xpose.msra.mxu0 0.0
    %598 = vmatprep.subr.mxu0 0.0
    %599 = vmatpush1.xpose.msra.mxu0 0.0
    %600 = vmatprep.subr.mxu0 0.0
    %601 = vmatpush1.xpose.msra.mxu0 0.0
    %602 = vmatprep.subr.mxu0 0.0
    %603 = vmatpush1.xpose.msra.mxu0 0.0
    %604 = vmatprep.subr.mxu0 0.0
    %605 = vmatpush1.xpose.msra.mxu0 0.0
    %606 = vmatprep.subr.mxu0 0.0
    %607 = vmatpush1.xpose.msra.mxu0 0.0
    %608 = vmatprep.subr.mxu0 0.0
    %609 = vmatpush1.xpose.msra.mxu0 0.0
    %610 = vmatprep.subr.mxu0 0.0
    %611 = vmatpush1.xpose.msra.mxu0 0.0
    %612 = vmatprep.subr.mxu0 0.0
    %613 = vmatpush1.xpose.msra.mxu0 0.0
    %614 = vmatprep.subr.mxu0 0.0
    %615 = vmatpush1.xpose.msra.mxu0 0.0
    %616 = vmatprep.subr.mxu0 0.0
    %617 = vmatpush1.xpose.msra.mxu0 0.0
    %618 = vmatprep.subr.mxu0 0.0
    %619 = vmatpush1.xpose.msra.mxu0 0.0
    %620 = vmatprep.subr.mxu0 0.0
    %621 = vmatpush1.xpose.msra.mxu0 %v588
    %622 = vmatprep.subr.mxu0 0.0
    %623 = vmatpush2.xpose.msra.mxu0 0.0
    %624 = vmatprep.subr.mxu0 0.0
    %625 = vmatpush2.xpose.msra.mxu0 0.0
    %626 = vmatprep.subr.mxu0 0.0
    %627 = vmatpush2.xpose.msra.mxu0 0.0
    %628 = vmatprep.subr.mxu0 0.0
    %629 = vmatpush2.xpose.msra.mxu0 0.0
    %630 = vmatprep.subr.mxu0 0.0
    %631 = vmatpush2.xpose.msra.mxu0 0.0
    %632 = vmatprep.subr.mxu0 0.0
    %633 = vmatpush2.xpose.msra.mxu0 0.0
    %634 = vmatprep.subr.mxu0 0.0
    %635 = vmatpush2.xpose.msra.mxu0 0.0
    %636 = vmatprep.subr.mxu0 0.0
    %637 = vmatpush2.xpose.msra.mxu0 0.0
    %638 = vmatprep.subr.mxu0 0.0
    %639 = vmatpush2.xpose.msra.mxu0 0.0
    %640 = vmatprep.subr.mxu0 0.0
    %641 = vmatpush2.xpose.msra.mxu0 0.0
    %642 = vmatprep.subr.mxu0 0.0
    %643 = vmatpush2.xpose.msra.mxu0 0.0
    %644 = vmatprep.subr.mxu0 0.0
    %645 = vmatpush2.xpose.msra.mxu0 0.0
    %646 = vmatprep.subr.mxu0 0.0
    %647 = vmatpush2.xpose.msra.mxu0 0.0
    %648 = vmatprep.subr.mxu0 0.0
    %649 = vmatpush2.xpose.msra.mxu0 0.0
    %650 = vmatprep.subr.mxu0 0.0
    %651 = vmatpush2.xpose.msra.mxu0 0.0
    %652 = vmatprep.subr.mxu0 0.0
    %653 = vmatpush2.xpose.msra.mxu0 0.0
    %654 = vmatprep.mubr.f32.mxu0 0.0
    %655 = vmatmul.mubr.f32.gmra.mxu0 %v586
    %v656 = vpop.f32.mrf.mxu0
    %v657 = vadd.f32 0.0, %v656
    %v658 = vpop.f32.mrf.mxu0
    %659 = vdwg.mxu0
    %660 = vrot.lane.b32.xlu0 %v343, 96
    %v661 = vpop.permute.xlu0 %660
    %662 = vrot.lane.b32.xlu0 %v349, 96
    %v663 = vpop.permute.xlu0 %662
    %v664 = vsel %vm351, %v661, 0
    %v666 = vsel %vm351, %v663, 0
    %668 = vmatprep.subr.mxu0 0.0
    %669 = vmatpush1.xpose.msra.mxu0 0.0
    %670 = vmatprep.subr.mxu0 0.0
    %671 = vmatpush1.xpose.msra.mxu0 0.0
    %672 = vmatprep.subr.mxu0 0.0
    %673 = vmatpush1.xpose.msra.mxu0 0.0
    %674 = vmatprep.subr.mxu0 0.0
    %675 = vmatpush1.xpose.msra.mxu0 0.0
    %676 = vmatprep.subr.mxu0 0.0
    %677 = vmatpush1.xpose.msra.mxu0 0.0
    %678 = vmatprep.subr.mxu0 0.0
    %679 = vmatpush1.xpose.msra.mxu0 0.0
    %680 = vmatprep.subr.mxu0 0.0
    %681 = vmatpush1.xpose.msra.mxu0 0.0
    %682 = vmatprep.subr.mxu0 0.0
    %683 = vmatpush1.xpose.msra.mxu0 0.0
    %684 = vmatprep.subr.mxu0 0.0
    %685 = vmatpush1.xpose.msra.mxu0 0.0
    %686 = vmatprep.subr.mxu0 0.0
    %687 = vmatpush1.xpose.msra.mxu0 0.0
    %688 = vmatprep.subr.mxu0 0.0
    %689 = vmatpush1.xpose.msra.mxu0 0.0
    %690 = vmatprep.subr.mxu0 0.0
    %691 = vmatpush1.xpose.msra.mxu0 0.0
    %692 = vmatprep.subr.mxu0 0.0
    %693 = vmatpush1.xpose.msra.mxu0 0.0
    %694 = vmatprep.subr.mxu0 0.0
    %695 = vmatpush1.xpose.msra.mxu0 0.0
    %696 = vmatprep.subr.mxu0 0.0
    %697 = vmatpush1.xpose.msra.mxu0 0.0
    %698 = vmatprep.subr.mxu0 0.0
    %699 = vmatpush1.xpose.msra.mxu0 %v666
    %700 = vmatprep.subr.mxu0 0.0
    %701 = vmatpush2.xpose.msra.mxu0 0.0
    %702 = vmatprep.subr.mxu0 0.0
    %703 = vmatpush2.xpose.msra.mxu0 0.0
    %704 = vmatprep.subr.mxu0 0.0
    %705 = vmatpush2.xpose.msra.mxu0 0.0
    %706 = vmatprep.subr.mxu0 0.0
    %707 = vmatpush2.xpose.msra.mxu0 0.0
    %708 = vmatprep.subr.mxu0 0.0
    %709 = vmatpush2.xpose.msra.mxu0 0.0
    %710 = vmatprep.subr.mxu0 0.0
    %711 = vmatpush2.xpose.msra.mxu0 0.0
    %712 = vmatprep.subr.mxu0 0.0
    %713 = vmatpush2.xpose.msra.mxu0 0.0
    %714 = vmatprep.subr.mxu0 0.0
    %715 = vmatpush2.xpose.msra.mxu0 0.0
    %716 = vmatprep.subr.mxu0 0.0
    %717 = vmatpush2.xpose.msra.mxu0 0.0
    %718 = vmatprep.subr.mxu0 0.0
    %719 = vmatpush2.xpose.msra.mxu0 0.0
    %720 = vmatprep.subr.mxu0 0.0
    %721 = vmatpush2.xpose.msra.mxu0 0.0
    %722 = vmatprep.subr.mxu0 0.0
    %723 = vmatpush2.xpose.msra.mxu0 0.0
    %724 = vmatprep.subr.mxu0 0.0
    %725 = vmatpush2.xpose.msra.mxu0 0.0
    %726 = vmatprep.subr.mxu0 0.0
    %727 = vmatpush2.xpose.msra.mxu0 0.0
    %728 = vmatprep.subr.mxu0 0.0
    %729 = vmatpush2.xpose.msra.mxu0 0.0
    %730 = vmatprep.subr.mxu0 0.0
    %731 = vmatpush2.xpose.msra.mxu0 0.0
    %732 = vmatprep.mubr.f32.mxu0 0.0
    %733 = vmatmul.mubr.f32.gmra.mxu0 %v664
    %v734 = vpop.f32.mrf.mxu0
    %v735 = vadd.f32 0.0, %v734
    %v736 = vpop.f32.mrf.mxu0
    %737 = vdwg.mxu0
    %738 = vrot.lane.b32.xlu0 %v344, 96
    %v739 = vpop.permute.xlu0 %738
    %740 = vrot.lane.b32.xlu0 %v350, 96
    %v741 = vpop.permute.xlu0 %740
    %v742 = vsel %vm351, %v739, 0
    %v744 = vsel %vm351, %v741, 0
    %746 = vmatprep.subr.mxu0 0.0
    %747 = vmatpush1.xpose.msra.mxu0 0.0
    %748 = vmatprep.subr.mxu0 0.0
    %749 = vmatpush1.xpose.msra.mxu0 0.0
    %750 = vmatprep.subr.mxu0 0.0
    %751 = vmatpush1.xpose.msra.mxu0 0.0
    %752 = vmatprep.subr.mxu0 0.0
    %753 = vmatpush1.xpose.msra.mxu0 0.0
    %754 = vmatprep.subr.mxu0 0.0
    %755 = vmatpush1.xpose.msra.mxu0 0.0
    %756 = vmatprep.subr.mxu0 0.0
    %757 = vmatpush1.xpose.msra.mxu0 0.0
    %758 = vmatprep.subr.mxu0 0.0
    %759 = vmatpush1.xpose.msra.mxu0 0.0
    %760 = vmatprep.subr.mxu0 0.0
    %761 = vmatpush1.xpose.msra.mxu0 0.0
    %762 = vmatprep.subr.mxu0 0.0
    %763 = vmatpush1.xpose.msra.mxu0 0.0
    %764 = vmatprep.subr.mxu0 0.0
    %765 = vmatpush1.xpose.msra.mxu0 0.0
    %766 = vmatprep.subr.mxu0 0.0
    %767 = vmatpush1.xpose.msra.mxu0 0.0
    %768 = vmatprep.subr.mxu0 0.0
    %769 = vmatpush1.xpose.msra.mxu0 0.0
    %770 = vmatprep.subr.mxu0 0.0
    %771 = vmatpush1.xpose.msra.mxu0 0.0
    %772 = vmatprep.subr.mxu0 0.0
    %773 = vmatpush1.xpose.msra.mxu0 0.0
    %774 = vmatprep.subr.mxu0 0.0
    %775 = vmatpush1.xpose.msra.mxu0 0.0
    %776 = vmatprep.subr.mxu0 0.0
    %777 = vmatpush1.xpose.msra.mxu0 %v744
    %778 = vmatprep.subr.mxu0 0.0
    %779 = vmatpush2.xpose.msra.mxu0 0.0
    %780 = vmatprep.subr.mxu0 0.0
    %781 = vmatpush2.xpose.msra.mxu0 0.0
    %782 = vmatprep.subr.mxu0 0.0
    %783 = vmatpush2.xpose.msra.mxu0 0.0
    %784 = vmatprep.subr.mxu0 0.0
    %785 = vmatpush2.xpose.msra.mxu0 0.0
    %786 = vmatprep.subr.mxu0 0.0
    %787 = vmatpush2.xpose.msra.mxu0 0.0
    %788 = vmatprep.subr.mxu0 0.0
    %789 = vmatpush2.xpose.msra.mxu0 0.0
    %790 = vmatprep.subr.mxu0 0.0
    %791 = vmatpush2.xpose.msra.mxu0 0.0
    %792 = vmatprep.subr.mxu0 0.0
    %793 = vmatpush2.xpose.msra.mxu0 0.0
    %794 = vmatprep.subr.mxu0 0.0
    %795 = vmatpush2.xpose.msra.mxu0 0.0
    %796 = vmatprep.subr.mxu0 0.0
    %797 = vmatpush2.xpose.msra.mxu0 0.0
    %798 = vmatprep.subr.mxu0 0.0
    %799 = vmatpush2.xpose.msra.mxu0 0.0
    %800 = vmatprep.subr.mxu0 0.0
    %801 = vmatpush2.xpose.msra.mxu0 0.0
    %802 = vmatprep.subr.mxu0 0.0
    %803 = vmatpush2.xpose.msra.mxu0 0.0
    %804 = vmatprep.subr.mxu0 0.0
    %805 = vmatpush2.xpose.msra.mxu0 0.0
    %806 = vmatprep.subr.mxu0 0.0
    %807 = vmatpush2.xpose.msra.mxu0 0.0
    %808 = vmatprep.subr.mxu0 0.0
    %809 = vmatpush2.xpose.msra.mxu0 0.0
    %810 = vmatprep.mubr.f32.mxu0 0.0
    %811 = vmatmul.mubr.f32.gmra.mxu0 %v742
    %v812 = vpop.f32.mrf.mxu0
    %v813 = vadd.f32 0.0, %v812
    %v814 = vpop.f32.mrf.mxu0
    %815 = vdwg.mxu0
    %816 = vrot.lane.b32.xlu0 %v343, 80
    %v817 = vpop.permute.xlu0 %816
    %818 = vrot.lane.b32.xlu0 %v349, 80
    %v819 = vpop.permute.xlu0 %818
    %v820 = vsel %vm351, %v817, 0
    %v822 = vsel %vm351, %v819, 0
    %824 = vmatprep.subr.mxu0 0.0
    %825 = vmatpush1.xpose.msra.mxu0 0.0
    %826 = vmatprep.subr.mxu0 0.0
    %827 = vmatpush1.xpose.msra.mxu0 0.0
    %828 = vmatprep.subr.mxu0 0.0
    %829 = vmatpush1.xpose.msra.mxu0 0.0
    %830 = vmatprep.subr.mxu0 0.0
    %831 = vmatpush1.xpose.msra.mxu0 0.0
    %832 = vmatprep.subr.mxu0 0.0
    %833 = vmatpush1.xpose.msra.mxu0 0.0
    %834 = vmatprep.subr.mxu0 0.0
    %835 = vmatpush1.xpose.msra.mxu0 0.0
    %836 = vmatprep.subr.mxu0 0.0
    %837 = vmatpush1.xpose.msra.mxu0 0.0
    %838 = vmatprep.subr.mxu0 0.0
    %839 = vmatpush1.xpose.msra.mxu0 0.0
    %840 = vmatprep.subr.mxu0 0.0
    %841 = vmatpush1.xpose.msra.mxu0 0.0
    %842 = vmatprep.subr.mxu0 0.0
    %843 = vmatpush1.xpose.msra.mxu0 0.0
    %844 = vmatprep.subr.mxu0 0.0
    %845 = vmatpush1.xpose.msra.mxu0 0.0
    %846 = vmatprep.subr.mxu0 0.0
    %847 = vmatpush1.xpose.msra.mxu0 0.0
    %848 = vmatprep.subr.mxu0 0.0
    %849 = vmatpush1.xpose.msra.mxu0 0.0
    %850 = vmatprep.subr.mxu0 0.0
    %851 = vmatpush1.xpose.msra.mxu0 0.0
    %852 = vmatprep.subr.mxu0 0.0
    %853 = vmatpush1.xpose.msra.mxu0 0.0
    %854 = vmatprep.subr.mxu0 0.0
    %855 = vmatpush1.xpose.msra.mxu0 %v822
    %856 = vmatprep.subr.mxu0 0.0
    %857 = vmatpush2.xpose.msra.mxu0 0.0
    %858 = vmatprep.subr.mxu0 0.0
    %859 = vmatpush2.xpose.msra.mxu0 0.0
    %860 = vmatprep.subr.mxu0 0.0
    %861 = vmatpush2.xpose.msra.mxu0 0.0
    %862 = vmatprep.subr.mxu0 0.0
    %863 = vmatpush2.xpose.msra.mxu0 0.0
    %864 = vmatprep.subr.mxu0 0.0
    %865 = vmatpush2.xpose.msra.mxu0 0.0
    %866 = vmatprep.subr.mxu0 0.0
    %867 = vmatpush2.xpose.msra.mxu0 0.0
    %868 = vmatprep.subr.mxu0 0.0
    %869 = vmatpush2.xpose.msra.mxu0 0.0
    %870 = vmatprep.subr.mxu0 0.0
    %871 = vmatpush2.xpose.msra.mxu0 0.0
    %872 = vmatprep.subr.mxu0 0.0
    %873 = vmatpush2.xpose.msra.mxu0 0.0
    %874 = vmatprep.subr.mxu0 0.0
    %875 = vmatpush2.xpose.msra.mxu0 0.0
    %876 = vmatprep.subr.mxu0 0.0
    %877 = vmatpush2.xpose.msra.mxu0 0.0
    %878 = vmatprep.subr.mxu0 0.0
    %879 = vmatpush2.xpose.msra.mxu0 0.0
    %880 = vmatprep.subr.mxu0 0.0
    %881 = vmatpush2.xpose.msra.mxu0 0.0
    %882 = vmatprep.subr.mxu0 0.0
    %883 = vmatpush2.xpose.msra.mxu0 0.0
    %884 = vmatprep.subr.mxu0 0.0
    %885 = vmatpush2.xpose.msra.mxu0 0.0
    %886 = vmatprep.subr.mxu0 0.0
    %887 = vmatpush2.xpose.msra.mxu0 0.0
    %888 = vmatprep.mubr.f32.mxu0 0.0
    %889 = vmatmul.mubr.f32.gmra.mxu0 %v820
    %v890 = vpop.f32.mrf.mxu0
    %v891 = vadd.f32 0.0, %v890
    %v892 = vpop.f32.mrf.mxu0
    %893 = vdwg.mxu0
    %894 = vrot.lane.b32.xlu0 %v344, 80
    %v895 = vpop.permute.xlu0 %894
    %896 = vrot.lane.b32.xlu0 %v350, 80
    %v897 = vpop.permute.xlu0 %896
    %v898 = vsel %vm351, %v895, 0
    %v900 = vsel %vm351, %v897, 0
    %902 = vmatprep.subr.mxu0 0.0
    %903 = vmatpush1.xpose.msra.mxu0 0.0
    %904 = vmatprep.subr.mxu0 0.0
    %905 = vmatpush1.xpose.msra.mxu0 0.0
    %906 = vmatprep.subr.mxu0 0.0
    %907 = vmatpush1.xpose.msra.mxu0 0.0
    %908 = vmatprep.subr.mxu0 0.0
    %909 = vmatpush1.xpose.msra.mxu0 0.0
    %910 = vmatprep.subr.mxu0 0.0
    %911 = vmatpush1.xpose.msra.mxu0 0.0
    %912 = vmatprep.subr.mxu0 0.0
    %913 = vmatpush1.xpose.msra.mxu0 0.0
    %914 = vmatprep.subr.mxu0 0.0
    %915 = vmatpush1.xpose.msra.mxu0 0.0
    %916 = vmatprep.subr.mxu0 0.0
    %917 = vmatpush1.xpose.msra.mxu0 0.0
    %918 = vmatprep.subr.mxu0 0.0
    %919 = vmatpush1.xpose.msra.mxu0 0.0
    %920 = vmatprep.subr.mxu0 0.0
    %921 = vmatpush1.xpose.msra.mxu0 0.0
    %922 = vmatprep.subr.mxu0 0.0
    %923 = vmatpush1.xpose.msra.mxu0 0.0
    %924 = vmatprep.subr.mxu0 0.0
    %925 = vmatpush1.xpose.msra.mxu0 0.0
    %926 = vmatprep.subr.mxu0 0.0
    %927 = vmatpush1.xpose.msra.mxu0 0.0
    %928 = vmatprep.subr.mxu0 0.0
    %929 = vmatpush1.xpose.msra.mxu0 0.0
    %930 = vmatprep.subr.mxu0 0.0
    %931 = vmatpush1.xpose.msra.mxu0 0.0
    %932 = vmatprep.subr.mxu0 0.0
    %933 = vmatpush1.xpose.msra.mxu0 %v900
    %934 = vmatprep.subr.mxu0 0.0
    %935 = vmatpush2.xpose.msra.mxu0 0.0
    %936 = vmatprep.subr.mxu0 0.0
    %937 = vmatpush2.xpose.msra.mxu0 0.0
    %938 = vmatprep.subr.mxu0 0.0
    %939 = vmatpush2.xpose.msra.mxu0 0.0
    %940 = vmatprep.subr.mxu0 0.0
    %941 = vmatpush2.xpose.msra.mxu0 0.0
    %942 = vmatprep.subr.mxu0 0.0
    %943 = vmatpush2.xpose.msra.mxu0 0.0
    %944 = vmatprep.subr.mxu0 0.0
    %945 = vmatpush2.xpose.msra.mxu0 0.0
    %946 = vmatprep.subr.mxu0 0.0
    %947 = vmatpush2.xpose.msra.mxu0 0.0
    %948 = vmatprep.subr.mxu0 0.0
    %949 = vmatpush2.xpose.msra.mxu0 0.0
    %950 = vmatprep.subr.mxu0 0.0
    %951 = vmatpush2.xpose.msra.mxu0 0.0
    %952 = vmatprep.subr.mxu0 0.0
    %953 = vmatpush2.xpose.msra.mxu0 0.0
    %954 = vmatprep.subr.mxu0 0.0
    %955 = vmatpush2.xpose.msra.mxu0 0.0
    %956 = vmatprep.subr.mxu0 0.0
    %957 = vmatpush2.xpose.msra.mxu0 0.0
    %958 = vmatprep.subr.mxu0 0.0
    %959 = vmatpush2.xpose.msra.mxu0 0.0
    %960 = vmatprep.subr.mxu0 0.0
    %961 = vmatpush2.xpose.msra.mxu0 0.0
    %962 = vmatprep.subr.mxu0 0.0
    %963 = vmatpush2.xpose.msra.mxu0 0.0
    %964 = vmatprep.subr.mxu0 0.0
    %965 = vmatpush2.xpose.msra.mxu0 0.0
    %966 = vmatprep.mubr.f32.mxu0 0.0
    %967 = vmatmul.mubr.f32.gmra.mxu0 %v898
    %v968 = vpop.f32.mrf.mxu0
    %v969 = vadd.f32 0.0, %v968
    %v970 = vpop.f32.mrf.mxu0
    %971 = vdwg.mxu0
    %972 = vrot.lane.b32.xlu0 %v343, 64
    %v973 = vpop.permute.xlu0 %972
    %974 = vrot.lane.b32.xlu0 %v349, 64
    %v975 = vpop.permute.xlu0 %974
    %v976 = vsel %vm351, %v973, 0
    %v978 = vsel %vm351, %v975, 0
    %980 = vmatprep.subr.mxu0 0.0
    %981 = vmatpush1.xpose.msra.mxu0 0.0
    %982 = vmatprep.subr.mxu0 0.0
    %983 = vmatpush1.xpose.msra.mxu0 0.0
    %984 = vmatprep.subr.mxu0 0.0
    %985 = vmatpush1.xpose.msra.mxu0 0.0
    %986 = vmatprep.subr.mxu0 0.0
    %987 = vmatpush1.xpose.msra.mxu0 0.0
    %988 = vmatprep.subr.mxu0 0.0
    %989 = vmatpush1.xpose.msra.mxu0 0.0
    %990 = vmatprep.subr.mxu0 0.0
    %991 = vmatpush1.xpose.msra.mxu0 0.0
    %992 = vmatprep.subr.mxu0 0.0
    %993 = vmatpush1.xpose.msra.mxu0 0.0
    %994 = vmatprep.subr.mxu0 0.0
    %995 = vmatpush1.xpose.msra.mxu0 0.0
    %996 = vmatprep.subr.mxu0 0.0
    %997 = vmatpush1.xpose.msra.mxu0 0.0
    %998 = vmatprep.subr.mxu0 0.0
    %999 = vmatpush1.xpose.msra.mxu0 0.0
    %1000 = vmatprep.subr.mxu0 0.0
    %1001 = vmatpush1.xpose.msra.mxu0 0.0
    %1002 = vmatprep.subr.mxu0 0.0
    %1003 = vmatpush1.xpose.msra.mxu0 0.0
    %1004 = vmatprep.subr.mxu0 0.0
    %1005 = vmatpush1.xpose.msra.mxu0 0.0
    %1006 = vmatprep.subr.mxu0 0.0
    %1007 = vmatpush1.xpose.msra.mxu0 0.0
    %1008 = vmatprep.subr.mxu0 0.0
    %1009 = vmatpush1.xpose.msra.mxu0 0.0
    %1010 = vmatprep.subr.mxu0 0.0
    %1011 = vmatpush1.xpose.msra.mxu0 %v978
    %1012 = vmatprep.subr.mxu0 0.0
    %1013 = vmatpush2.xpose.msra.mxu0 0.0
    %1014 = vmatprep.subr.mxu0 0.0
    %1015 = vmatpush2.xpose.msra.mxu0 0.0
    %1016 = vmatprep.subr.mxu0 0.0
    %1017 = vmatpush2.xpose.msra.mxu0 0.0
    %1018 = vmatprep.subr.mxu0 0.0
    %1019 = vmatpush2.xpose.msra.mxu0 0.0
    %1020 = vmatprep.subr.mxu0 0.0
    %1021 = vmatpush2.xpose.msra.mxu0 0.0
    %1022 = vmatprep.subr.mxu0 0.0
    %1023 = vmatpush2.xpose.msra.mxu0 0.0
    %1024 = vmatprep.subr.mxu0 0.0
    %1025 = vmatpush2.xpose.msra.mxu0 0.0
    %1026 = vmatprep.subr.mxu0 0.0
    %1027 = vmatpush2.xpose.msra.mxu0 0.0
    %1028 = vmatprep.subr.mxu0 0.0
    %1029 = vmatpush2.xpose.msra.mxu0 0.0
    %1030 = vmatprep.subr.mxu0 0.0
    %1031 = vmatpush2.xpose.msra.mxu0 0.0
    %1032 = vmatprep.subr.mxu0 0.0
    %1033 = vmatpush2.xpose.msra.mxu0 0.0
    %1034 = vmatprep.subr.mxu0 0.0
    %1035 = vmatpush2.xpose.msra.mxu0 0.0
    %1036 = vmatprep.subr.mxu0 0.0
    %1037 = vmatpush2.xpose.msra.mxu0 0.0
    %1038 = vmatprep.subr.mxu0 0.0
    %1039 = vmatpush2.xpose.msra.mxu0 0.0
    %1040 = vmatprep.subr.mxu0 0.0
    %1041 = vmatpush2.xpose.msra.mxu0 0.0
    %1042 = vmatprep.subr.mxu0 0.0
    %1043 = vmatpush2.xpose.msra.mxu0 0.0
    %1044 = vmatprep.mubr.f32.mxu0 0.0
    %1045 = vmatmul.mubr.f32.gmra.mxu0 %v976
    %v1046 = vpop.f32.mrf.mxu0
    %v1047 = vadd.f32 0.0, %v1046
    %v1048 = vpop.f32.mrf.mxu0
    %1049 = vdwg.mxu0
    %1050 = vrot.lane.b32.xlu0 %v344, 64
    %v1051 = vpop.permute.xlu0 %1050
    %1052 = vrot.lane.b32.xlu0 %v350, 64
    %v1053 = vpop.permute.xlu0 %1052
    %v1054 = vsel %vm351, %v1051, 0
    %v1056 = vsel %vm351, %v1053, 0
    %1058 = vmatprep.subr.mxu0 0.0
    %1059 = vmatpush1.xpose.msra.mxu0 0.0
    %1060 = vmatprep.subr.mxu0 0.0
    %1061 = vmatpush1.xpose.msra.mxu0 0.0
    %1062 = vmatprep.subr.mxu0 0.0
    %1063 = vmatpush1.xpose.msra.mxu0 0.0
    %1064 = vmatprep.subr.mxu0 0.0
    %1065 = vmatpush1.xpose.msra.mxu0 0.0
    %1066 = vmatprep.subr.mxu0 0.0
    %1067 = vmatpush1.xpose.msra.mxu0 0.0
    %1068 = vmatprep.subr.mxu0 0.0
    %1069 = vmatpush1.xpose.msra.mxu0 0.0
    %1070 = vmatprep.subr.mxu0 0.0
    %1071 = vmatpush1.xpose.msra.mxu0 0.0
    %1072 = vmatprep.subr.mxu0 0.0
    %1073 = vmatpush1.xpose.msra.mxu0 0.0
    %1074 = vmatprep.subr.mxu0 0.0
    %1075 = vmatpush1.xpose.msra.mxu0 0.0
    %1076 = vmatprep.subr.mxu0 0.0
    %1077 = vmatpush1.xpose.msra.mxu0 0.0
    %1078 = vmatprep.subr.mxu0 0.0
    %1079 = vmatpush1.xpose.msra.mxu0 0.0
    %1080 = vmatprep.subr.mxu0 0.0
    %1081 = vmatpush1.xpose.msra.mxu0 0.0
    %1082 = vmatprep.subr.mxu0 0.0
    %1083 = vmatpush1.xpose.msra.mxu0 0.0
    %1084 = vmatprep.subr.mxu0 0.0
    %1085 = vmatpush1.xpose.msra.mxu0 0.0
    %1086 = vmatprep.subr.mxu0 0.0
    %1087 = vmatpush1.xpose.msra.mxu0 0.0
    %1088 = vmatprep.subr.mxu0 0.0
    %1089 = vmatpush1.xpose.msra.mxu0 %v1056
    %1090 = vmatprep.subr.mxu0 0.0
    %1091 = vmatpush2.xpose.msra.mxu0 0.0
    %1092 = vmatprep.subr.mxu0 0.0
    %1093 = vmatpush2.xpose.msra.mxu0 0.0
    %1094 = vmatprep.subr.mxu0 0.0
    %1095 = vmatpush2.xpose.msra.mxu0 0.0
    %1096 = vmatprep.subr.mxu0 0.0
    %1097 = vmatpush2.xpose.msra.mxu0 0.0
    %1098 = vmatprep.subr.mxu0 0.0
    %1099 = vmatpush2.xpose.msra.mxu0 0.0
    %1100 = vmatprep.subr.mxu0 0.0
    %1101 = vmatpush2.xpose.msra.mxu0 0.0
    %1102 = vmatprep.subr.mxu0 0.0
    %1103 = vmatpush2.xpose.msra.mxu0 0.0
    %1104 = vmatprep.subr.mxu0 0.0
    %1105 = vmatpush2.xpose.msra.mxu0 0.0
    %1106 = vmatprep.subr.mxu0 0.0
    %1107 = vmatpush2.xpose.msra.mxu0 0.0
    %1108 = vmatprep.subr.mxu0 0.0
    %1109 = vmatpush2.xpose.msra.mxu0 0.0
    %1110 = vmatprep.subr.mxu0 0.0
    %1111 = vmatpush2.xpose.msra.mxu0 0.0
    %1112 = vmatprep.subr.mxu0 0.0
    %1113 = vmatpush2.xpose.msra.mxu0 0.0
    %1114 = vmatprep.subr.mxu0 0.0
    %1115 = vmatpush2.xpose.msra.mxu0 0.0
    %1116 = vmatprep.subr.mxu0 0.0
    %1117 = vmatpush2.xpose.msra.mxu0 0.0
    %1118 = vmatprep.subr.mxu0 0.0
    %1119 = vmatpush2.xpose.msra.mxu0 0.0
    %1120 = vmatprep.subr.mxu0 0.0
    %1121 = vmatpush2.xpose.msra.mxu0 0.0
    %1122 = vmatprep.mubr.f32.mxu0 0.0
    %1123 = vmatmul.mubr.f32.gmra.mxu0 %v1054
    %v1124 = vpop.f32.mrf.mxu0
    %v1125 = vadd.f32 0.0, %v1124
    %v1126 = vpop.f32.mrf.mxu0
    %1127 = vdwg.mxu0
    %1128 = vrot.lane.b32.xlu0 %v343, 48
    %v1129 = vpop.permute.xlu0 %1128
    %1130 = vrot.lane.b32.xlu0 %v349, 48
    %v1131 = vpop.permute.xlu0 %1130
    %v1132 = vsel %vm351, %v1129, 0
    %v1134 = vsel %vm351, %v1131, 0
    %1136 = vmatprep.subr.mxu0 0.0
    %1137 = vmatpush1.xpose.msra.mxu0 0.0
    %1138 = vmatprep.subr.mxu0 0.0
    %1139 = vmatpush1.xpose.msra.mxu0 0.0
    %1140 = vmatprep.subr.mxu0 0.0
    %1141 = vmatpush1.xpose.msra.mxu0 0.0
    %1142 = vmatprep.subr.mxu0 0.0
    %1143 = vmatpush1.xpose.msra.mxu0 0.0
    %1144 = vmatprep.subr.mxu0 0.0
    %1145 = vmatpush1.xpose.msra.mxu0 0.0
    %1146 = vmatprep.subr.mxu0 0.0
    %1147 = vmatpush1.xpose.msra.mxu0 0.0
    %1148 = vmatprep.subr.mxu0 0.0
    %1149 = vmatpush1.xpose.msra.mxu0 0.0
    %1150 = vmatprep.subr.mxu0 0.0
    %1151 = vmatpush1.xpose.msra.mxu0 0.0
    %1152 = vmatprep.subr.mxu0 0.0
    %1153 = vmatpush1.xpose.msra.mxu0 0.0
    %1154 = vmatprep.subr.mxu0 0.0
    %1155 = vmatpush1.xpose.msra.mxu0 0.0
    %1156 = vmatprep.subr.mxu0 0.0
    %1157 = vmatpush1.xpose.msra.mxu0 0.0
    %1158 = vmatprep.subr.mxu0 0.0
    %1159 = vmatpush1.xpose.msra.mxu0 0.0
    %1160 = vmatprep.subr.mxu0 0.0
    %1161 = vmatpush1.xpose.msra.mxu0 0.0
    %1162 = vmatprep.subr.mxu0 0.0
    %1163 = vmatpush1.xpose.msra.mxu0 0.0
    %1164 = vmatprep.subr.mxu0 0.0
    %1165 = vmatpush1.xpose.msra.mxu0 0.0
    %1166 = vmatprep.subr.mxu0 0.0
    %1167 = vmatpush1.xpose.msra.mxu0 %v1134
    %1168 = vmatprep.subr.mxu0 0.0
    %1169 = vmatpush2.xpose.msra.mxu0 0.0
    %1170 = vmatprep.subr.mxu0 0.0
    %1171 = vmatpush2.xpose.msra.mxu0 0.0
    %1172 = vmatprep.subr.mxu0 0.0
    %1173 = vmatpush2.xpose.msra.mxu0 0.0
    %1174 = vmatprep.subr.mxu0 0.0
    %1175 = vmatpush2.xpose.msra.mxu0 0.0
    %1176 = vmatprep.subr.mxu0 0.0
    %1177 = vmatpush2.xpose.msra.mxu0 0.0
    %1178 = vmatprep.subr.mxu0 0.0
    %1179 = vmatpush2.xpose.msra.mxu0 0.0
    %1180 = vmatprep.subr.mxu0 0.0
    %1181 = vmatpush2.xpose.msra.mxu0 0.0
    %1182 = vmatprep.subr.mxu0 0.0
    %1183 = vmatpush2.xpose.msra.mxu0 0.0
    %1184 = vmatprep.subr.mxu0 0.0
    %1185 = vmatpush2.xpose.msra.mxu0 0.0
    %1186 = vmatprep.subr.mxu0 0.0
    %1187 = vmatpush2.xpose.msra.mxu0 0.0
    %1188 = vmatprep.subr.mxu0 0.0
    %1189 = vmatpush2.xpose.msra.mxu0 0.0
    %1190 = vmatprep.subr.mxu0 0.0
    %1191 = vmatpush2.xpose.msra.mxu0 0.0
    %1192 = vmatprep.subr.mxu0 0.0
    %1193 = vmatpush2.xpose.msra.mxu0 0.0
    %1194 = vmatprep.subr.mxu0 0.0
    %1195 = vmatpush2.xpose.msra.mxu0 0.0
    %1196 = vmatprep.subr.mxu0 0.0
    %1197 = vmatpush2.xpose.msra.mxu0 0.0
    %1198 = vmatprep.subr.mxu0 0.0
    %1199 = vmatpush2.xpose.msra.mxu0 0.0
    %1200 = vmatprep.mubr.f32.mxu0 0.0
    %1201 = vmatmul.mubr.f32.gmra.mxu0 %v1132
    %v1202 = vpop.f32.mrf.mxu0
    %v1203 = vadd.f32 0.0, %v1202
    %v1204 = vpop.f32.mrf.mxu0
    %1205 = vdwg.mxu0
    %1206 = vrot.lane.b32.xlu0 %v344, 48
    %v1207 = vpop.permute.xlu0 %1206
    %1208 = vrot.lane.b32.xlu0 %v350, 48
    %v1209 = vpop.permute.xlu0 %1208
    %v1210 = vsel %vm351, %v1207, 0
    %v1212 = vsel %vm351, %v1209, 0
    %1214 = vmatprep.subr.mxu0 0.0
    %1215 = vmatpush1.xpose.msra.mxu0 0.0
    %1216 = vmatprep.subr.mxu0 0.0
    %1217 = vmatpush1.xpose.msra.mxu0 0.0
    %1218 = vmatprep.subr.mxu0 0.0
    %1219 = vmatpush1.xpose.msra.mxu0 0.0
    %1220 = vmatprep.subr.mxu0 0.0
    %1221 = vmatpush1.xpose.msra.mxu0 0.0
    %1222 = vmatprep.subr.mxu0 0.0
    %1223 = vmatpush1.xpose.msra.mxu0 0.0
    %1224 = vmatprep.subr.mxu0 0.0
    %1225 = vmatpush1.xpose.msra.mxu0 0.0
    %1226 = vmatprep.subr.mxu0 0.0
    %1227 = vmatpush1.xpose.msra.mxu0 0.0
    %1228 = vmatprep.subr.mxu0 0.0
    %1229 = vmatpush1.xpose.msra.mxu0 0.0
    %1230 = vmatprep.subr.mxu0 0.0
    %1231 = vmatpush1.xpose.msra.mxu0 0.0
    %1232 = vmatprep.subr.mxu0 0.0
    %1233 = vmatpush1.xpose.msra.mxu0 0.0
    %1234 = vmatprep.subr.mxu0 0.0
    %1235 = vmatpush1.xpose.msra.mxu0 0.0
    %1236 = vmatprep.subr.mxu0 0.0
    %1237 = vmatpush1.xpose.msra.mxu0 0.0
    %1238 = vmatprep.subr.mxu0 0.0
    %1239 = vmatpush1.xpose.msra.mxu0 0.0
    %1240 = vmatprep.subr.mxu0 0.0
    %1241 = vmatpush1.xpose.msra.mxu0 0.0
    %1242 = vmatprep.subr.mxu0 0.0
    %1243 = vmatpush1.xpose.msra.mxu0 0.0
    %1244 = vmatprep.subr.mxu0 0.0
    %1245 = vmatpush1.xpose.msra.mxu0 %v1212
    %1246 = vmatprep.subr.mxu0 0.0
    %1247 = vmatpush2.xpose.msra.mxu0 0.0
    %1248 = vmatprep.subr.mxu0 0.0
    %1249 = vmatpush2.xpose.msra.mxu0 0.0
    %1250 = vmatprep.subr.mxu0 0.0
    %1251 = vmatpush2.xpose.msra.mxu0 0.0
    %1252 = vmatprep.subr.mxu0 0.0
    %1253 = vmatpush2.xpose.msra.mxu0 0.0
    %1254 = vmatprep.subr.mxu0 0.0
    %1255 = vmatpush2.xpose.msra.mxu0 0.0
    %1256 = vmatprep.subr.mxu0 0.0
    %1257 = vmatpush2.xpose.msra.mxu0 0.0
    %1258 = vmatprep.subr.mxu0 0.0
    %1259 = vmatpush2.xpose.msra.mxu0 0.0
    %1260 = vmatprep.subr.mxu0 0.0
    %1261 = vmatpush2.xpose.msra.mxu0 0.0
    %1262 = vmatprep.subr.mxu0 0.0
    %1263 = vmatpush2.xpose.msra.mxu0 0.0
    %1264 = vmatprep.subr.mxu0 0.0
    %1265 = vmatpush2.xpose.msra.mxu0 0.0
    %1266 = vmatprep.subr.mxu0 0.0
    %1267 = vmatpush2.xpose.msra.mxu0 0.0
    %1268 = vmatprep.subr.mxu0 0.0
    %1269 = vmatpush2.xpose.msra.mxu0 0.0
    %1270 = vmatprep.subr.mxu0 0.0
    %1271 = vmatpush2.xpose.msra.mxu0 0.0
    %1272 = vmatprep.subr.mxu0 0.0
    %1273 = vmatpush2.xpose.msra.mxu0 0.0
    %1274 = vmatprep.subr.mxu0 0.0
    %1275 = vmatpush2.xpose.msra.mxu0 0.0
    %1276 = vmatprep.subr.mxu0 0.0
    %1277 = vmatpush2.xpose.msra.mxu0 0.0
    %1278 = vmatprep.mubr.f32.mxu0 0.0
    %1279 = vmatmul.mubr.f32.gmra.mxu0 %v1210
    %v1280 = vpop.f32.mrf.mxu0
    %v1281 = vadd.f32 0.0, %v1280
    %v1282 = vpop.f32.mrf.mxu0
    %1283 = vdwg.mxu0
    %1284 = vrot.lane.b32.xlu0 %v343, 32
    %v1285 = vpop.permute.xlu0 %1284
    %1286 = vrot.lane.b32.xlu0 %v349, 32
    %v1287 = vpop.permute.xlu0 %1286
    %v1288 = vsel %vm351, %v1285, 0
    %v1290 = vsel %vm351, %v1287, 0
    %1292 = vmatprep.subr.mxu0 0.0
    %1293 = vmatpush1.xpose.msra.mxu0 0.0
    %1294 = vmatprep.subr.mxu0 0.0
    %1295 = vmatpush1.xpose.msra.mxu0 0.0
    %1296 = vmatprep.subr.mxu0 0.0
    %1297 = vmatpush1.xpose.msra.mxu0 0.0
    %1298 = vmatprep.subr.mxu0 0.0
    %1299 = vmatpush1.xpose.msra.mxu0 0.0
    %1300 = vmatprep.subr.mxu0 0.0
    %1301 = vmatpush1.xpose.msra.mxu0 0.0
    %1302 = vmatprep.subr.mxu0 0.0
    %1303 = vmatpush1.xpose.msra.mxu0 0.0
    %1304 = vmatprep.subr.mxu0 0.0
    %1305 = vmatpush1.xpose.msra.mxu0 0.0
    %1306 = vmatprep.subr.mxu0 0.0
    %1307 = vmatpush1.xpose.msra.mxu0 0.0
    %1308 = vmatprep.subr.mxu0 0.0
    %1309 = vmatpush1.xpose.msra.mxu0 0.0
    %1310 = vmatprep.subr.mxu0 0.0
    %1311 = vmatpush1.xpose.msra.mxu0 0.0
    %1312 = vmatprep.subr.mxu0 0.0
    %1313 = vmatpush1.xpose.msra.mxu0 0.0
    %1314 = vmatprep.subr.mxu0 0.0
    %1315 = vmatpush1.xpose.msra.mxu0 0.0
    %1316 = vmatprep.subr.mxu0 0.0
    %1317 = vmatpush1.xpose.msra.mxu0 0.0
    %1318 = vmatprep.subr.mxu0 0.0
    %1319 = vmatpush1.xpose.msra.mxu0 0.0
    %1320 = vmatprep.subr.mxu0 0.0
    %1321 = vmatpush1.xpose.msra.mxu0 0.0
    %1322 = vmatprep.subr.mxu0 0.0
    %1323 = vmatpush1.xpose.msra.mxu0 %v1290
    %1324 = vmatprep.subr.mxu0 0.0
    %1325 = vmatpush2.xpose.msra.mxu0 0.0
    %1326 = vmatprep.subr.mxu0 0.0
    %1327 = vmatpush2.xpose.msra.mxu0 0.0
    %1328 = vmatprep.subr.mxu0 0.0
    %1329 = vmatpush2.xpose.msra.mxu0 0.0
    %1330 = vmatprep.subr.mxu0 0.0
    %1331 = vmatpush2.xpose.msra.mxu0 0.0
    %1332 = vmatprep.subr.mxu0 0.0
    %1333 = vmatpush2.xpose.msra.mxu0 0.0
    %1334 = vmatprep.subr.mxu0 0.0
    %1335 = vmatpush2.xpose.msra.mxu0 0.0
    %1336 = vmatprep.subr.mxu0 0.0
    %1337 = vmatpush2.xpose.msra.mxu0 0.0
    %1338 = vmatprep.subr.mxu0 0.0
    %1339 = vmatpush2.xpose.msra.mxu0 0.0
    %1340 = vmatprep.subr.mxu0 0.0
    %1341 = vmatpush2.xpose.msra.mxu0 0.0
    %1342 = vmatprep.subr.mxu0 0.0
    %1343 = vmatpush2.xpose.msra.mxu0 0.0
    %1344 = vmatprep.subr.mxu0 0.0
    %1345 = vmatpush2.xpose.msra.mxu0 0.0
    %1346 = vmatprep.subr.mxu0 0.0
    %1347 = vmatpush2.xpose.msra.mxu0 0.0
    %1348 = vmatprep.subr.mxu0 0.0
    %1349 = vmatpush2.xpose.msra.mxu0 0.0
    %1350 = vmatprep.subr.mxu0 0.0
    %1351 = vmatpush2.xpose.msra.mxu0 0.0
    %1352 = vmatprep.subr.mxu0 0.0
    %1353 = vmatpush2.xpose.msra.mxu0 0.0
    %1354 = vmatprep.subr.mxu0 0.0
    %1355 = vmatpush2.xpose.msra.mxu0 0.0
    %1356 = vmatprep.mubr.f32.mxu0 0.0
    %1357 = vmatmul.mubr.f32.gmra.mxu0 %v1288
    %v1358 = vpop.f32.mrf.mxu0
    %v1359 = vadd.f32 0.0, %v1358
    %v1360 = vpop.f32.mrf.mxu0
    %1361 = vdwg.mxu0
    %1362 = vrot.lane.b32.xlu0 %v344, 32
    %v1363 = vpop.permute.xlu0 %1362
    %1364 = vrot.lane.b32.xlu0 %v350, 32
    %v1365 = vpop.permute.xlu0 %1364
    %v1366 = vsel %vm351, %v1363, 0
    %v1368 = vsel %vm351, %v1365, 0
    %1370 = vmatprep.subr.mxu0 0.0
    %1371 = vmatpush1.xpose.msra.mxu0 0.0
    %1372 = vmatprep.subr.mxu0 0.0
    %1373 = vmatpush1.xpose.msra.mxu0 0.0
    %1374 = vmatprep.subr.mxu0 0.0
    %1375 = vmatpush1.xpose.msra.mxu0 0.0
    %1376 = vmatprep.subr.mxu0 0.0
    %1377 = vmatpush1.xpose.msra.mxu0 0.0
    %1378 = vmatprep.subr.mxu0 0.0
    %1379 = vmatpush1.xpose.msra.mxu0 0.0
    %1380 = vmatprep.subr.mxu0 0.0
    %1381 = vmatpush1.xpose.msra.mxu0 0.0
    %1382 = vmatprep.subr.mxu0 0.0
    %1383 = vmatpush1.xpose.msra.mxu0 0.0
    %1384 = vmatprep.subr.mxu0 0.0
    %1385 = vmatpush1.xpose.msra.mxu0 0.0
    %1386 = vmatprep.subr.mxu0 0.0
    %1387 = vmatpush1.xpose.msra.mxu0 0.0
    %1388 = vmatprep.subr.mxu0 0.0
    %1389 = vmatpush1.xpose.msra.mxu0 0.0
    %1390 = vmatprep.subr.mxu0 0.0
    %1391 = vmatpush1.xpose.msra.mxu0 0.0
    %1392 = vmatprep.subr.mxu0 0.0
    %1393 = vmatpush1.xpose.msra.mxu0 0.0
    %1394 = vmatprep.subr.mxu0 0.0
    %1395 = vmatpush1.xpose.msra.mxu0 0.0
    %1396 = vmatprep.subr.mxu0 0.0
    %1397 = vmatpush1.xpose.msra.mxu0 0.0
    %1398 = vmatprep.subr.mxu0 0.0
    %1399 = vmatpush1.xpose.msra.mxu0 0.0
    %1400 = vmatprep.subr.mxu0 0.0
    %1401 = vmatpush1.xpose.msra.mxu0 %v1368
    %1402 = vmatprep.subr.mxu0 0.0
    %1403 = vmatpush2.xpose.msra.mxu0 0.0
    %1404 = vmatprep.subr.mxu0 0.0
    %1405 = vmatpush2.xpose.msra.mxu0 0.0
    %1406 = vmatprep.subr.mxu0 0.0
    %1407 = vmatpush2.xpose.msra.mxu0 0.0
    %1408 = vmatprep.subr.mxu0 0.0
    %1409 = vmatpush2.xpose.msra.mxu0 0.0
    %1410 = vmatprep.subr.mxu0 0.0
    %1411 = vmatpush2.xpose.msra.mxu0 0.0
    %1412 = vmatprep.subr.mxu0 0.0
    %1413 = vmatpush2.xpose.msra.mxu0 0.0
    %1414 = vmatprep.subr.mxu0 0.0
    %1415 = vmatpush2.xpose.msra.mxu0 0.0
    %1416 = vmatprep.subr.mxu0 0.0
    %1417 = vmatpush2.xpose.msra.mxu0 0.0
    %1418 = vmatprep.subr.mxu0 0.0
    %1419 = vmatpush2.xpose.msra.mxu0 0.0
    %1420 = vmatprep.subr.mxu0 0.0
    %1421 = vmatpush2.xpose.msra.mxu0 0.0
    %1422 = vmatprep.subr.mxu0 0.0
    %1423 = vmatpush2.xpose.msra.mxu0 0.0
    %1424 = vmatprep.subr.mxu0 0.0
    %1425 = vmatpush2.xpose.msra.mxu0 0.0
    %1426 = vmatprep.subr.mxu0 0.0
    %1427 = vmatpush2.xpose.msra.mxu0 0.0
    %1428 = vmatprep.subr.mxu0 0.0
    %1429 = vmatpush2.xpose.msra.mxu0 0.0
    %1430 = vmatprep.subr.mxu0 0.0
    %1431 = vmatpush2.xpose.msra.mxu0 0.0
    %1432 = vmatprep.subr.mxu0 0.0
    %1433 = vmatpush2.xpose.msra.mxu0 0.0
    %1434 = vmatprep.mubr.f32.mxu0 0.0
    %1435 = vmatmul.mubr.f32.gmra.mxu0 %v1366
    %v1436 = vpop.f32.mrf.mxu0
    %v1437 = vadd.f32 0.0, %v1436
    %v1438 = vpop.f32.mrf.mxu0
    %1439 = vdwg.mxu0
    %1440 = vrot.lane.b32.xlu0 %v343, 16
    %v1441 = vpop.permute.xlu0 %1440
    %1442 = vrot.lane.b32.xlu0 %v349, 16
    %v1443 = vpop.permute.xlu0 %1442
    %v1444 = vsel %vm351, %v1441, 0
    %v1446 = vsel %vm351, %v1443, 0
    %1448 = vmatprep.subr.mxu0 0.0
    %1449 = vmatpush1.xpose.msra.mxu0 0.0
    %1450 = vmatprep.subr.mxu0 0.0
    %1451 = vmatpush1.xpose.msra.mxu0 0.0
    %1452 = vmatprep.subr.mxu0 0.0
    %1453 = vmatpush1.xpose.msra.mxu0 0.0
    %1454 = vmatprep.subr.mxu0 0.0
    %1455 = vmatpush1.xpose.msra.mxu0 0.0
    %1456 = vmatprep.subr.mxu0 0.0
    %1457 = vmatpush1.xpose.msra.mxu0 0.0
    %1458 = vmatprep.subr.mxu0 0.0
    %1459 = vmatpush1.xpose.msra.mxu0 0.0
    %1460 = vmatprep.subr.mxu0 0.0
    %1461 = vmatpush1.xpose.msra.mxu0 0.0
    %1462 = vmatprep.subr.mxu0 0.0
    %1463 = vmatpush1.xpose.msra.mxu0 0.0
    %1464 = vmatprep.subr.mxu0 0.0
    %1465 = vmatpush1.xpose.msra.mxu0 0.0
    %1466 = vmatprep.subr.mxu0 0.0
    %1467 = vmatpush1.xpose.msra.mxu0 0.0
    %1468 = vmatprep.subr.mxu0 0.0
    %1469 = vmatpush1.xpose.msra.mxu0 0.0
    %1470 = vmatprep.subr.mxu0 0.0
    %1471 = vmatpush1.xpose.msra.mxu0 0.0
    %1472 = vmatprep.subr.mxu0 0.0
    %1473 = vmatpush1.xpose.msra.mxu0 0.0
    %1474 = vmatprep.subr.mxu0 0.0
    %1475 = vmatpush1.xpose.msra.mxu0 0.0
    %1476 = vmatprep.subr.mxu0 0.0
    %1477 = vmatpush1.xpose.msra.mxu0 0.0
    %1478 = vmatprep.subr.mxu0 0.0
    %1479 = vmatpush1.xpose.msra.mxu0 %v1446
    %1480 = vmatprep.subr.mxu0 0.0
    %1481 = vmatpush2.xpose.msra.mxu0 0.0
    %1482 = vmatprep.subr.mxu0 0.0
    %1483 = vmatpush2.xpose.msra.mxu0 0.0
    %1484 = vmatprep.subr.mxu0 0.0
    %1485 = vmatpush2.xpose.msra.mxu0 0.0
    %1486 = vmatprep.subr.mxu0 0.0
    %1487 = vmatpush2.xpose.msra.mxu0 0.0
    %1488 = vmatprep.subr.mxu0 0.0
    %1489 = vmatpush2.xpose.msra.mxu0 0.0
    %1490 = vmatprep.subr.mxu0 0.0
    %1491 = vmatpush2.xpose.msra.mxu0 0.0
    %1492 = vmatprep.subr.mxu0 0.0
    %1493 = vmatpush2.xpose.msra.mxu0 0.0
    %1494 = vmatprep.subr.mxu0 0.0
    %1495 = vmatpush2.xpose.msra.mxu0 0.0
    %1496 = vmatprep.subr.mxu0 0.0
    %1497 = vmatpush2.xpose.msra.mxu0 0.0
    %1498 = vmatprep.subr.mxu0 0.0
    %1499 = vmatpush2.xpose.msra.mxu0 0.0
    %1500 = vmatprep.subr.mxu0 0.0
    %1501 = vmatpush2.xpose.msra.mxu0 0.0
    %1502 = vmatprep.subr.mxu0 0.0
    %1503 = vmatpush2.xpose.msra.mxu0 0.0
    %1504 = vmatprep.subr.mxu0 0.0
    %1505 = vmatpush2.xpose.msra.mxu0 0.0
    %1506 = vmatprep.subr.mxu0 0.0
    %1507 = vmatpush2.xpose.msra.mxu0 0.0
    %1508 = vmatprep.subr.mxu0 0.0
    %1509 = vmatpush2.xpose.msra.mxu0 0.0
    %1510 = vmatprep.subr.mxu0 0.0
    %1511 = vmatpush2.xpose.msra.mxu0 0.0
    %1512 = vmatprep.mubr.f32.mxu0 0.0
    %1513 = vmatmul.mubr.f32.gmra.mxu0 %v1444
    %v1514 = vpop.f32.mrf.mxu0
    %v1515 = vadd.f32 0.0, %v1514
    %v1516 = vpop.f32.mrf.mxu0
    %1517 = vdwg.mxu0
    %1518 = vrot.lane.b32.xlu0 %v344, 16
    %v1519 = vpop.permute.xlu0 %1518
    %1520 = vrot.lane.b32.xlu0 %v350, 16
    %v1521 = vpop.permute.xlu0 %1520
    %v1522 = vsel %vm351, %v1519, 0
    %v1524 = vsel %vm351, %v1521, 0
    %1526 = vmatprep.subr.mxu0 0.0
    %1527 = vmatpush1.xpose.msra.mxu0 0.0
    %1528 = vmatprep.subr.mxu0 0.0
    %1529 = vmatpush1.xpose.msra.mxu0 0.0
    %1530 = vmatprep.subr.mxu0 0.0
    %1531 = vmatpush1.xpose.msra.mxu0 0.0
    %1532 = vmatprep.subr.mxu0 0.0
    %1533 = vmatpush1.xpose.msra.mxu0 0.0
    %1534 = vmatprep.subr.mxu0 0.0
    %1535 = vmatpush1.xpose.msra.mxu0 0.0
    %1536 = vmatprep.subr.mxu0 0.0
    %1537 = vmatpush1.xpose.msra.mxu0 0.0
    %1538 = vmatprep.subr.mxu0 0.0
    %1539 = vmatpush1.xpose.msra.mxu0 0.0
    %1540 = vmatprep.subr.mxu0 0.0
    %1541 = vmatpush1.xpose.msra.mxu0 0.0
    %1542 = vmatprep.subr.mxu0 0.0
    %1543 = vmatpush1.xpose.msra.mxu0 0.0
    %1544 = vmatprep.subr.mxu0 0.0
    %1545 = vmatpush1.xpose.msra.mxu0 0.0
    %1546 = vmatprep.subr.mxu0 0.0
    %1547 = vmatpush1.xpose.msra.mxu0 0.0
    %1548 = vmatprep.subr.mxu0 0.0
    %1549 = vmatpush1.xpose.msra.mxu0 0.0
    %1550 = vmatprep.subr.mxu0 0.0
    %1551 = vmatpush1.xpose.msra.mxu0 0.0
    %1552 = vmatprep.subr.mxu0 0.0
    %1553 = vmatpush1.xpose.msra.mxu0 0.0
    %1554 = vmatprep.subr.mxu0 0.0
    %1555 = vmatpush1.xpose.msra.mxu0 0.0
    %1556 = vmatprep.subr.mxu0 0.0
    %1557 = vmatpush1.xpose.msra.mxu0 %v1524
    %1558 = vmatprep.subr.mxu0 0.0
    %1559 = vmatpush2.xpose.msra.mxu0 0.0
    %1560 = vmatprep.subr.mxu0 0.0
    %1561 = vmatpush2.xpose.msra.mxu0 0.0
    %1562 = vmatprep.subr.mxu0 0.0
    %1563 = vmatpush2.xpose.msra.mxu0 0.0
    %1564 = vmatprep.subr.mxu0 0.0
    %1565 = vmatpush2.xpose.msra.mxu0 0.0
    %1566 = vmatprep.subr.mxu0 0.0
    %1567 = vmatpush2.xpose.msra.mxu0 0.0
    %1568 = vmatprep.subr.mxu0 0.0
    %1569 = vmatpush2.xpose.msra.mxu0 0.0
    %1570 = vmatprep.subr.mxu0 0.0
    %1571 = vmatpush2.xpose.msra.mxu0 0.0
    %1572 = vmatprep.subr.mxu0 0.0
    %1573 = vmatpush2.xpose.msra.mxu0 0.0
    %1574 = vmatprep.subr.mxu0 0.0
    %1575 = vmatpush2.xpose.msra.mxu0 0.0
    %1576 = vmatprep.subr.mxu0 0.0
    %1577 = vmatpush2.xpose.msra.mxu0 0.0
    %1578 = vmatprep.subr.mxu0 0.0
    %1579 = vmatpush2.xpose.msra.mxu0 0.0
    %1580 = vmatprep.subr.mxu0 0.0
    %1581 = vmatpush2.xpose.msra.mxu0 0.0
    %1582 = vmatprep.subr.mxu0 0.0
    %1583 = vmatpush2.xpose.msra.mxu0 0.0
    %1584 = vmatprep.subr.mxu0 0.0
    %1585 = vmatpush2.xpose.msra.mxu0 0.0
    %1586 = vmatprep.subr.mxu0 0.0
    %1587 = vmatpush2.xpose.msra.mxu0 0.0
    %1588 = vmatprep.subr.mxu0 0.0
    %1589 = vmatpush2.xpose.msra.mxu0 0.0
    %1590 = vmatprep.mubr.f32.mxu0 0.0
    %1591 = vmatmul.mubr.f32.gmra.mxu0 %v1522
    %v1592 = vpop.f32.mrf.mxu0
    %v1593 = vadd.f32 0.0, %v1592
    %v1594 = vpop.f32.mrf.mxu0
    %1595 = vdwg.mxu0
    %v1596 = vld [vmem:[%s5] sm:$0xff]
    %v1597 = vld [vmem:[%s5 + $0x8] sm:$0xff]
    %v1598 = vadd.f32 %v425, %v1596
    %v1599 = vadd.f32 %v501, %v1597
    %v1600 = vadd.f32 %v579, %v1596
    %v1601 = vadd.f32 %v657, %v1597
    %v1602 = vadd.f32 %v735, %v1596
    %v1603 = vadd.f32 %v813, %v1597
    %v1604 = vadd.f32 %v891, %v1596
    %v1605 = vadd.f32 %v969, %v1597
    %v1606 = vadd.f32 %v1047, %v1596
    %v1607 = vadd.f32 %v1125, %v1597
    %v1608 = vadd.f32 %v1203, %v1596
    %v1609 = vadd.f32 %v1281, %v1597
    %v1610 = vadd.f32 %v1359, %v1596
    %v1611 = vadd.f32 %v1437, %v1597
    %v1612 = vadd.f32 %v1515, %v1596
    %v1613 = vadd.f32 %v1593, %v1597
    %vm1614 = vcmask 64512
    %v1615 = vsel %vm1614, %v1598, -inf
    %1616 = vmax.xlane.f32.xlu0 %v1615
    %v1617 = vpop.xlane.xlu0 %1616
    %v1618 = vsel %vm1614, %v1599, -inf
    %1619 = vmax.xlane.f32.xlu0 %v1618
    %v1620 = vpop.xlane.xlu0 %1619
    %v1621 = vsel %vm1614, %v1600, -inf
    %1622 = vmax.xlane.f32.xlu0 %v1621
    %v1623 = vpop.xlane.xlu0 %1622
    %v1624 = vsel %vm1614, %v1601, -inf
    %1625 = vmax.xlane.f32.xlu0 %v1624
    %v1626 = vpop.xlane.xlu0 %1625
    %v1627 = vsel %vm1614, %v1602, -inf
    %1628 = vmax.xlane.f32.xlu0 %v1627
    %v1629 = vpop.xlane.xlu0 %1628
    %v1630 = vsel %vm1614, %v1603, -inf
    %1631 = vmax.xlane.f32.xlu0 %v1630
    %v1632 = vpop.xlane.xlu0 %1631
    %v1633 = vsel %vm1614, %v1604, -inf
    %1634 = vmax.xlane.f32.xlu0 %v1633
    %v1635 = vpop.xlane.xlu0 %1634
    %v1636 = vsel %vm1614, %v1605, -inf
    %1637 = vmax.xlane.f32.xlu0 %v1636
    %v1638 = vpop.xlane.xlu0 %1637
    %v1639 = vsel %vm1614, %v1606, -inf
    %1640 = vmax.xlane.f32.xlu0 %v1639
    %v1641 = vpop.xlane.xlu0 %1640
    %v1642 = vsel %vm1614, %v1607, -inf
    %1643 = vmax.xlane.f32.xlu0 %v1642
    %v1644 = vpop.xlane.xlu0 %1643
    %v1645 = vsel %vm1614, %v1608, -inf
    %1646 = vmax.xlane.f32.xlu0 %v1645
    %v1647 = vpop.xlane.xlu0 %1646
    %v1648 = vsel %vm1614, %v1609, -inf
    %1649 = vmax.xlane.f32.xlu0 %v1648
    %v1650 = vpop.xlane.xlu0 %1649
    %v1651 = vsel %vm1614, %v1610, -inf
    %1652 = vmax.xlane.f32.xlu0 %v1651
    %v1653 = vpop.xlane.xlu0 %1652
    %v1654 = vsel %vm1614, %v1611, -inf
    %1655 = vmax.xlane.f32.xlu0 %v1654
    %v1656 = vpop.xlane.xlu0 %1655
    %v1657 = vsel %vm1614, %v1612, -inf
    %1658 = vmax.xlane.f32.xlu0 %v1657
    %v1659 = vpop.xlane.xlu0 %1658
    %v1660 = vsel %vm1614, %v1613, -inf
    %1661 = vmax.xlane.f32.xlu0 %v1660
    %v1662 = vpop.xlane.xlu0 %1661
    %v1663 = vsub.f32 %v1598, %v1617
    %v1664 = vsub.f32 %v1599, %v1620
    %v1665 = vsub.f32 %v1600, %v1623
    %v1666 = vsub.f32 %v1601, %v1626
    %v1667 = vsub.f32 %v1602, %v1629
    %v1668 = vsub.f32 %v1603, %v1632
    %v1669 = vsub.f32 %v1604, %v1635
    %v1670 = vsub.f32 %v1605, %v1638
    %v1671 = vsub.f32 %v1606, %v1641
    %v1672 = vsub.f32 %v1607, %v1644
    %v1673 = vsub.f32 %v1608, %v1647
    %v1674 = vsub.f32 %v1609, %v1650
    %v1675 = vsub.f32 %v1610, %v1653
    %v1676 = vsub.f32 %v1611, %v1656
    %v1677 = vsub.f32 %v1612, %v1659
    %v1678 = vsub.f32 %v1613, %v1662
    %v1679 = vmul.f32 %v1663, 1.442695
    %v1680 = vpow.pop %v1679
    %v1681 = vmul.f32 %v1664, 1.442695
    %v1682 = vpow.pop %v1681
    %v1683 = vmul.f32 %v1665, 1.442695
    %v1684 = vpow.pop %v1683
    %v1685 = vmul.f32 %v1666, 1.442695
    %v1686 = vpow.pop %v1685
    %v1687 = vmul.f32 %v1667, 1.442695
    %v1688 = vpow.pop %v1687
    %v1689 = vmul.f32 %v1668, 1.442695
    %v1690 = vpow.pop %v1689
    %v1691 = vmul.f32 %v1669, 1.442695
    %v1692 = vpow.pop %v1691
    %v1693 = vmul.f32 %v1670, 1.442695
    %v1694 = vpow.pop %v1693
    %v1695 = vmul.f32 %v1671, 1.442695
    %v1696 = vpow.pop %v1695
    %v1697 = vmul.f32 %v1672, 1.442695
    %v1698 = vpow.pop %v1697
    %v1699 = vmul.f32 %v1673, 1.442695
    %v1700 = vpow.pop %v1699
    %v1701 = vmul.f32 %v1674, 1.442695
    %v1702 = vpow.pop %v1701
    %v1703 = vmul.f32 %v1675, 1.442695
    %v1704 = vpow.pop %v1703
    %v1705 = vmul.f32 %v1676, 1.442695
    %v1706 = vpow.pop %v1705
    %v1707 = vmul.f32 %v1677, 1.442695
    %v1708 = vpow.pop %v1707
    %v1709 = vmul.f32 %v1678, 1.442695
    %v1710 = vpow.pop %v1709
    %v1711 = vsel %vm1614, %v1680, 0.0
    %1712 = vadd.xlane.f32.xlu0 %v1711
    %v1713 = vpop.xlane.xlu0 %1712
    %v1714 = vsel %vm1614, %v1682, 0.0
    %1715 = vadd.xlane.f32.xlu0 %v1714
    %v1716 = vpop.xlane.xlu0 %1715
    %v1717 = vsel %vm1614, %v1684, 0.0
    %1718 = vadd.xlane.f32.xlu0 %v1717
    %v1719 = vpop.xlane.xlu0 %1718
    %v1720 = vsel %vm1614, %v1686, 0.0
    %1721 = vadd.xlane.f32.xlu0 %v1720
    %v1722 = vpop.xlane.xlu0 %1721
    %v1723 = vsel %vm1614, %v1688, 0.0
    %1724 = vadd.xlane.f32.xlu0 %v1723
    %v1725 = vpop.xlane.xlu0 %1724
    %v1726 = vsel %vm1614, %v1690, 0.0
    %1727 = vadd.xlane.f32.xlu0 %v1726
    %v1728 = vpop.xlane.xlu0 %1727
    %v1729 = vsel %vm1614, %v1692, 0.0
    %1730 = vadd.xlane.f32.xlu0 %v1729
    %v1731 = vpop.xlane.xlu0 %1730
    %v1732 = vsel %vm1614, %v1694, 0.0
    %1733 = vadd.xlane.f32.xlu0 %v1732
    %v1734 = vpop.xlane.xlu0 %1733
    %v1735 = vsel %vm1614, %v1696, 0.0
    %1736 = vadd.xlane.f32.xlu0 %v1735
    %v1737 = vpop.xlane.xlu0 %1736
    %v1738 = vsel %vm1614, %v1698, 0.0
    %1739 = vadd.xlane.f32.xlu0 %v1738
    %v1740 = vpop.xlane.xlu0 %1739
    %v1741 = vsel %vm1614, %v1700, 0.0
    %1742 = vadd.xlane.f32.xlu0 %v1741
    %v1743 = vpop.xlane.xlu0 %1742
    %v1744 = vsel %vm1614, %v1702, 0.0
    %1745 = vadd.xlane.f32.xlu0 %v1744
    %v1746 = vpop.xlane.xlu0 %1745
    %v1747 = vsel %vm1614, %v1704, 0.0
    %1748 = vadd.xlane.f32.xlu0 %v1747
    %v1749 = vpop.xlane.xlu0 %1748
    %v1750 = vsel %vm1614, %v1706, 0.0
    %1751 = vadd.xlane.f32.xlu0 %v1750
    %v1752 = vpop.xlane.xlu0 %1751
    %v1753 = vsel %vm1614, %v1708, 0.0
    %1754 = vadd.xlane.f32.xlu0 %v1753
    %v1755 = vpop.xlane.xlu0 %1754
    %v1756 = vsel %vm1614, %v1710, 0.0
    %1757 = vadd.xlane.f32.xlu0 %v1756
    %v1758 = vpop.xlane.xlu0 %1757
    %v1759 = vrcp.pop %v1713
    %v1760 = vrcp.pop %v1716
    %v1761 = vrcp.pop %v1719
    %v1762 = vrcp.pop %v1722
    %v1763 = vrcp.pop %v1725
    %v1764 = vrcp.pop %v1728
    %v1765 = vrcp.pop %v1731
    %v1766 = vrcp.pop %v1734
    %v1767 = vrcp.pop %v1737
    %v1768 = vrcp.pop %v1740
    %v1769 = vrcp.pop %v1743
    %v1770 = vrcp.pop %v1746
    %v1771 = vrcp.pop %v1749
    %v1772 = vrcp.pop %v1752
    %v1773 = vrcp.pop %v1755
    %v1774 = vrcp.pop %v1758
    %v1775 = vmul.f32 %v1680, %v1759
    %v1776 = vmul.f32 %v1682, %v1760
    %v1777 = vmul.f32 %v1684, %v1761
    %v1778 = vmul.f32 %v1686, %v1762
    %v1779 = vmul.f32 %v1688, %v1763
    %v1780 = vmul.f32 %v1690, %v1764
    %v1781 = vmul.f32 %v1692, %v1765
    %v1782 = vmul.f32 %v1694, %v1766
    %v1783 = vmul.f32 %v1696, %v1767
    %v1784 = vmul.f32 %v1698, %v1768
    %v1785 = vmul.f32 %v1700, %v1769
    %v1786 = vmul.f32 %v1702, %v1770
    %v1787 = vmul.f32 %v1704, %v1771
    %v1788 = vmul.f32 %v1706, %v1772
    %v1789 = vmul.f32 %v1708, %v1773
    %v1790 = vmul.f32 %v1710, %v1774
    %v1791 = vlaneseq
    %v1792 = vshrl.u32 %v1791, 7
    %v1793 = vlaneseq
    %v1794 = vand.u32 %v1793, 127
    %v1795 = vmul.u32 %v1792, 4
    %vm1796 = vcmp.eq.s32.totalorder %v1794, %v1795
    %v1797 = vsel %vm1796, 1, 0
    %v1798 = vcvt.s32.f32 %v1797
    %v1799 = vadd.s32 %v1795, 1
    %vm1800 = vcmp.eq.s32.totalorder %v1794, %v1799
    %v1801 = vsel %vm1800, 1, 0
    %v1802 = vcvt.s32.f32 %v1801
    %v1803 = vadd.s32 %v1795, 2
    %vm1804 = vcmp.eq.s32.totalorder %v1794, %v1803
    %v1805 = vsel %vm1804, 1, 0
    %v1806 = vcvt.s32.f32 %v1805
    %v1807 = vadd.s32 %v1795, 3
    %vm1808 = vcmp.eq.s32.totalorder %v1794, %v1807
    %v1809 = vsel %vm1808, 1, 0
    %v1810 = vcvt.s32.f32 %v1809
    %v1811 = vld [vmem:[%s2] sm:$0xff]
    %v1812 = vld [vmem:[%s2 + $0x8] sm:$0xff]
    %v1813 = vld [vmem:[%s2 + $0x10] sm:$0xff]
    %v1814 = vld [vmem:[%s2 + $0x18] sm:$0xff]
    %v1815 = vld [vmem:[%s2 + $0x20] sm:$0xff]
    %v1816 = vld [vmem:[%s2 + $0x28] sm:$0xff]
    %v1817 = vld [vmem:[%s2 + $0x30] sm:$0xff]
    %v1818 = vld [vmem:[%s2 + $0x38] sm:$0xff]
    %v1819 = vld [vmem:[%s2 + $0x40] sm:$0xff]
    %v1820 = vld [vmem:[%s2 + $0x48] sm:$0xff]
    %v1821 = vld [vmem:[%s2 + $0x50] sm:$0xff]
    %v1822 = vld [vmem:[%s2 + $0x58] sm:$0xff]
    %v1823 = vld [vmem:[%s2 + $0x60] sm:$0xff]
    %v1824 = vld [vmem:[%s2 + $0x68] sm:$0xff]
    %v1825 = vld [vmem:[%s2 + $0x70] sm:$0xff]
    %v1826 = vld [vmem:[%s2 + $0x78] sm:$0xff]
    %v1827 = vld [vmem:[%s2 + $0x80] sm:$0xff]
    %v1828 = vld [vmem:[%s2 + $0x88] sm:$0xff]
    %v1829 = vld [vmem:[%s2 + $0x90] sm:$0xff]
    %v1830 = vld [vmem:[%s2 + $0x98] sm:$0xff]
    %v1831 = vld [vmem:[%s2 + $0xa0] sm:$0xff]
    %v1832 = vld [vmem:[%s2 + $0xa8] sm:$0xff]
    %v1833 = vld [vmem:[%s2 + $0xb0] sm:$0xff]
    %v1834 = vld [vmem:[%s2 + $0xb8] sm:$0xff]
    %v1835 = vld [vmem:[%s2 + $0xc0] sm:$0xff]
    %v1836 = vld [vmem:[%s2 + $0xc8] sm:$0xff]
    %v1837 = vld [vmem:[%s2 + $0xd0] sm:$0xff]
    %v1838 = vld [vmem:[%s2 + $0xd8] sm:$0xff]
    %v1839 = vld [vmem:[%s2 + $0xe0] sm:$0xff]
    %v1840 = vld [vmem:[%s2 + $0xe8] sm:$0xff]
    %v1841 = vld [vmem:[%s2 + $0xf0] sm:$0xff]
    %v1842 = vld [vmem:[%s2 + $0xf8] sm:$0xff]
    %v1844 = vsel %vm1614, %v1775, 0
    %v1847 = vsel %vm1614, %v1777, 0
    %v1850 = vsel %vm1614, %v1779, 0
    %v1853 = vsel %vm1614, %v1781, 0
    %1855 = vmatprep.subr.mxu0 0.0
    %1856 = vmatpush1.msra.mxu0 0.0
    %1857 = vmatprep.subr.mxu0 0.0
    %1858 = vmatpush1.msra.mxu0 0.0
    %1859 = vmatprep.subr.mxu0 0.0
    %1860 = vmatpush1.msra.mxu0 0.0
    %1861 = vmatprep.subr.mxu0 0.0
    %1862 = vmatpush1.msra.mxu0 0.0
    %1863 = vmatprep.subr.mxu0 0.0
    %1864 = vmatpush1.msra.mxu0 0.0
    %1865 = vmatprep.subr.mxu0 0.0
    %1866 = vmatpush1.msra.mxu0 0.0
    %1867 = vmatprep.subr.mxu0 0.0
    %1868 = vmatpush1.msra.mxu0 0.0
    %1869 = vmatprep.subr.mxu0 0.0
    %1870 = vmatpush1.msra.mxu0 0.0
    %1871 = vmatprep.subr.mxu0 0.0
    %1872 = vmatpush1.msra.mxu0 0.0
    %1873 = vmatprep.subr.mxu0 0.0
    %1874 = vmatpush1.msra.mxu0 0.0
    %1875 = vmatprep.subr.mxu0 0.0
    %1876 = vmatpush1.msra.mxu0 0.0
    %1877 = vmatprep.subr.mxu0 0.0
    %1878 = vmatpush1.msra.mxu0 0.0
    %1879 = vmatprep.subr.mxu0 0.0
    %1880 = vmatpush1.msra.mxu0 0.0
    %1881 = vmatprep.subr.mxu0 0.0
    %1882 = vmatpush1.msra.mxu0 0.0
    %1883 = vmatprep.subr.mxu0 0.0
    %1884 = vmatpush1.msra.mxu0 0.0
    %1885 = vmatprep.subr.mxu0 0.0
    %1886 = vmatpush1.msra.mxu0 %v327
    %1887 = vmatprep.subr.mxu0 0.0
    %1888 = vmatpush2.msra.mxu0 0.0
    %1889 = vmatprep.subr.mxu0 0.0
    %1890 = vmatpush2.msra.mxu0 0.0
    %1891 = vmatprep.subr.mxu0 0.0
    %1892 = vmatpush2.msra.mxu0 0.0
    %1893 = vmatprep.subr.mxu0 0.0
    %1894 = vmatpush2.msra.mxu0 0.0
    %1895 = vmatprep.subr.mxu0 0.0
    %1896 = vmatpush2.msra.mxu0 0.0
    %1897 = vmatprep.subr.mxu0 0.0
    %1898 = vmatpush2.msra.mxu0 0.0
    %1899 = vmatprep.subr.mxu0 0.0
    %1900 = vmatpush2.msra.mxu0 0.0
    %1901 = vmatprep.subr.mxu0 0.0
    %1902 = vmatpush2.msra.mxu0 0.0
    %1903 = vmatprep.subr.mxu0 0.0
    %1904 = vmatpush2.msra.mxu0 0.0
    %1905 = vmatprep.subr.mxu0 0.0
    %1906 = vmatpush2.msra.mxu0 0.0
    %1907 = vmatprep.subr.mxu0 0.0
    %1908 = vmatpush2.msra.mxu0 0.0
    %1909 = vmatprep.subr.mxu0 0.0
    %1910 = vmatpush2.msra.mxu0 0.0
    %1911 = vmatprep.subr.mxu0 0.0
    %1912 = vmatpush2.msra.mxu0 0.0
    %1913 = vmatprep.subr.mxu0 0.0
    %1914 = vmatpush2.msra.mxu0 0.0
    %1915 = vmatprep.subr.mxu0 0.0
    %1916 = vmatpush2.msra.mxu0 0.0
    %1917 = vmatprep.subr.mxu0 0.0
    %1918 = vmatpush2.msra.mxu0 0.0
    %1919 = vmatprep.mubr.f32.mxu0 0.0
    %1920 = vmatmul.mubr.f32.gmra.mxu0 %v1844
    %v1921 = vpop.f32.mrf.mxu0
    %v1922 = vadd.f32 0.0, %v1921
    %v1923 = vpop.f32.mrf.mxu0
    %1924 = vmatprep.mubr.f32.mxu0 0.0
    %1925 = vmatmul.mubr.f32.gmra.mxu0 %v1847
    %v1926 = vpop.f32.mrf.mxu0
    %v1927 = vadd.f32 0.0, %v1926
    %v1928 = vpop.f32.mrf.mxu0
    %1929 = vmatprep.mubr.f32.mxu0 0.0
    %1930 = vmatmul.mubr.f32.gmra.mxu0 %v1850
    %v1931 = vpop.f32.mrf.mxu0
    %v1932 = vadd.f32 0.0, %v1931
    %v1933 = vpop.f32.mrf.mxu0
    %1934 = vmatprep.mubr.f32.mxu0 0.0
    %1935 = vmatmul.mubr.f32.gmra.mxu0 %v1853
    %v1936 = vpop.f32.mrf.mxu0
    %v1937 = vadd.f32 0.0, %v1936
    %v1938 = vpop.f32.mrf.mxu0
    %1939 = vdwg.mxu0
    %1941 = vrot.lane.b32.xlu0 %v327, 96
    %v1942 = vpop.permute.xlu0 %1941
    %v1945 = vsel %vm1614, %v1783, 0
    %v1948 = vsel %vm1614, %v1785, 0
    %v1951 = vsel %vm1614, %v1787, 0
    %v1954 = vsel %vm1614, %v1789, 0
    %1956 = vmatprep.subr.mxu0 0.0
    %1957 = vmatpush1.msra.mxu0 0.0
    %1958 = vmatprep.subr.mxu0 0.0
    %1959 = vmatpush1.msra.mxu0 0.0
    %1960 = vmatprep.subr.mxu0 0.0
    %1961 = vmatpush1.msra.mxu0 0.0
    %1962 = vmatprep.subr.mxu0 0.0
    %1963 = vmatpush1.msra.mxu0 0.0
    %1964 = vmatprep.subr.mxu0 0.0
    %1965 = vmatpush1.msra.mxu0 0.0
    %1966 = vmatprep.subr.mxu0 0.0
    %1967 = vmatpush1.msra.mxu0 0.0
    %1968 = vmatprep.subr.mxu0 0.0
    %1969 = vmatpush1.msra.mxu0 0.0
    %1970 = vmatprep.subr.mxu0 0.0
    %1971 = vmatpush1.msra.mxu0 0.0
    %1972 = vmatprep.subr.mxu0 0.0
    %1973 = vmatpush1.msra.mxu0 0.0
    %1974 = vmatprep.subr.mxu0 0.0
    %1975 = vmatpush1.msra.mxu0 0.0
    %1976 = vmatprep.subr.mxu0 0.0
    %1977 = vmatpush1.msra.mxu0 0.0
    %1978 = vmatprep.subr.mxu0 0.0
    %1979 = vmatpush1.msra.mxu0 0.0
    %1980 = vmatprep.subr.mxu0 0.0
    %1981 = vmatpush1.msra.mxu0 0.0
    %1982 = vmatprep.subr.mxu0 0.0
    %1983 = vmatpush1.msra.mxu0 0.0
    %1984 = vmatprep.subr.mxu0 0.0
    %1985 = vmatpush1.msra.mxu0 0.0
    %1986 = vmatprep.subr.mxu0 0.0
    %1987 = vmatpush1.msra.mxu0 %v1942
    %1988 = vmatprep.subr.mxu0 0.0
    %1989 = vmatpush2.msra.mxu0 0.0
    %1990 = vmatprep.subr.mxu0 0.0
    %1991 = vmatpush2.msra.mxu0 0.0
    %1992 = vmatprep.subr.mxu0 0.0
    %1993 = vmatpush2.msra.mxu0 0.0
    %1994 = vmatprep.subr.mxu0 0.0
    %1995 = vmatpush2.msra.mxu0 0.0
    %1996 = vmatprep.subr.mxu0 0.0
    %1997 = vmatpush2.msra.mxu0 0.0
    %1998 = vmatprep.subr.mxu0 0.0
    %1999 = vmatpush2.msra.mxu0 0.0
    %2000 = vmatprep.subr.mxu0 0.0
    %2001 = vmatpush2.msra.mxu0 0.0
    %2002 = vmatprep.subr.mxu0 0.0
    %2003 = vmatpush2.msra.mxu0 0.0
    %2004 = vmatprep.subr.mxu0 0.0
    %2005 = vmatpush2.msra.mxu0 0.0
    %2006 = vmatprep.subr.mxu0 0.0
    %2007 = vmatpush2.msra.mxu0 0.0
    %2008 = vmatprep.subr.mxu0 0.0
    %2009 = vmatpush2.msra.mxu0 0.0
    %2010 = vmatprep.subr.mxu0 0.0
    %2011 = vmatpush2.msra.mxu0 0.0
    %2012 = vmatprep.subr.mxu0 0.0
    %2013 = vmatpush2.msra.mxu0 0.0
    %2014 = vmatprep.subr.mxu0 0.0
    %2015 = vmatpush2.msra.mxu0 0.0
    %2016 = vmatprep.subr.mxu0 0.0
    %2017 = vmatpush2.msra.mxu0 0.0
    %2018 = vmatprep.subr.mxu0 0.0
    %2019 = vmatpush2.msra.mxu0 0.0
    %2020 = vmatprep.mubr.f32.mxu0 0.0
    %2021 = vmatmul.mubr.f32.gmra.mxu0 %v1945
    %v2022 = vpop.f32.mrf.mxu0
    %v2023 = vadd.f32 0.0, %v2022
    %v2024 = vpop.f32.mrf.mxu0
    %2025 = vmatprep.mubr.f32.mxu0 0.0
    %2026 = vmatmul.mubr.f32.gmra.mxu0 %v1948
    %v2027 = vpop.f32.mrf.mxu0
    %v2028 = vadd.f32 0.0, %v2027
    %v2029 = vpop.f32.mrf.mxu0
    %2030 = vmatprep.mubr.f32.mxu0 0.0
    %2031 = vmatmul.mubr.f32.gmra.mxu0 %v1951
    %v2032 = vpop.f32.mrf.mxu0
    %v2033 = vadd.f32 0.0, %v2032
    %v2034 = vpop.f32.mrf.mxu0
    %2035 = vmatprep.mubr.f32.mxu0 0.0
    %2036 = vmatmul.mubr.f32.gmra.mxu0 %v1954
    %v2037 = vpop.f32.mrf.mxu0
    %v2038 = vadd.f32 0.0, %v2037
    %v2039 = vpop.f32.mrf.mxu0
    %2040 = vdwg.mxu0
    %2045 = vrot.lane.b32.xlu0 %v2023, 32
    %v2046 = vpop.permute.xlu0 %2045
    %2047 = vrot.lane.b32.xlu0 %v2028, 32
    %v2048 = vpop.permute.xlu0 %2047
    %2049 = vrot.lane.b32.xlu0 %v2033, 32
    %v2050 = vpop.permute.xlu0 %2049
    %2051 = vrot.lane.b32.xlu0 %v2038, 32
    %v2052 = vpop.permute.xlu0 %2051
    %vm2057 = vcmask 261120
    %v2058 = vsel %vm2057, %v1922, %v2046
    %v2059 = vsel %vm2057, %v1927, %v2048
    %v2060 = vsel %vm2057, %v1932, %v2050
    %v2061 = vsel %vm2057, %v1937, %v2052
    %v2063 = vsel %vm2057, %v1798, 0
    %2065 = vmatprep.subr.mxu0 0.0
    %2066 = vmatpush1.msra.mxu0 0.0
    %2067 = vmatprep.subr.mxu0 0.0
    %2068 = vmatpush1.msra.mxu0 0.0
    %2069 = vmatprep.subr.mxu0 0.0
    %2070 = vmatpush1.msra.mxu0 0.0
    %2071 = vmatprep.subr.mxu0 0.0
    %2072 = vmatpush1.msra.mxu0 0.0
    %2073 = vmatprep.subr.mxu0 0.0
    %2074 = vmatpush1.msra.mxu0 0.0
    %2075 = vmatprep.subr.mxu0 0.0
    %2076 = vmatpush1.msra.mxu0 0.0
    %2077 = vmatprep.subr.mxu0 0.0
    %2078 = vmatpush1.msra.mxu0 0.0
    %2079 = vmatprep.subr.mxu0 0.0
    %2080 = vmatpush1.msra.mxu0 0.0
    %2081 = vmatprep.subr.mxu0 0.0
    %2082 = vmatpush1.msra.mxu0 0.0
    %2083 = vmatprep.subr.mxu0 0.0
    %2084 = vmatpush1.msra.mxu0 0.0
    %2085 = vmatprep.subr.mxu0 0.0
    %2086 = vmatpush1.msra.mxu0 0.0
    %2087 = vmatprep.subr.mxu0 0.0
    %2088 = vmatpush1.msra.mxu0 0.0
    %2089 = vmatprep.subr.mxu0 0.0
    %2090 = vmatpush1.msra.mxu0 %v2061
    %2091 = vmatprep.subr.mxu0 0.0
    %2092 = vmatpush1.msra.mxu0 %v2060
    %2093 = vmatprep.subr.mxu0 0.0
    %2094 = vmatpush1.msra.mxu0 %v2059
    %2095 = vmatprep.subr.mxu0 0.0
    %2096 = vmatpush1.msra.mxu0 %v2058
    %2097 = vmatprep.subr.mxu0 0.0
    %2098 = vmatpush2.msra.mxu0 0.0
    %2099 = vmatprep.subr.mxu0 0.0
    %2100 = vmatpush2.msra.mxu0 0.0
    %2101 = vmatprep.subr.mxu0 0.0
    %2102 = vmatpush2.msra.mxu0 0.0
    %2103 = vmatprep.subr.mxu0 0.0
    %2104 = vmatpush2.msra.mxu0 0.0
    %2105 = vmatprep.subr.mxu0 0.0
    %2106 = vmatpush2.msra.mxu0 0.0
    %2107 = vmatprep.subr.mxu0 0.0
    %2108 = vmatpush2.msra.mxu0 0.0
    %2109 = vmatprep.subr.mxu0 0.0
    %2110 = vmatpush2.msra.mxu0 0.0
    %2111 = vmatprep.subr.mxu0 0.0
    %2112 = vmatpush2.msra.mxu0 0.0
    %2113 = vmatprep.subr.mxu0 0.0
    %2114 = vmatpush2.msra.mxu0 0.0
    %2115 = vmatprep.subr.mxu0 0.0
    %2116 = vmatpush2.msra.mxu0 0.0
    %2117 = vmatprep.subr.mxu0 0.0
    %2118 = vmatpush2.msra.mxu0 0.0
    %2119 = vmatprep.subr.mxu0 0.0
    %2120 = vmatpush2.msra.mxu0 0.0
    %2121 = vmatprep.subr.mxu0 0.0
    %2122 = vmatpush2.msra.mxu0 0.0
    %2123 = vmatprep.subr.mxu0 0.0
    %2124 = vmatpush2.msra.mxu0 0.0
    %2125 = vmatprep.subr.mxu0 0.0
    %2126 = vmatpush2.msra.mxu0 0.0
    %2127 = vmatprep.subr.mxu0 0.0
    %2128 = vmatpush2.msra.mxu0 0.0
    %2129 = vmatprep.mubr.f32.mxu0 0.0
    %2130 = vmatmul.mubr.f32.gmra.mxu0 %v2063
    %v2131 = vpop.f32.mrf.mxu0
    %v2132 = vadd.f32 0.0, %v2131
    %v2133 = vpop.f32.mrf.mxu0
    %2134 = vdwg.mxu0
    %v2136 = vsel %vm2057, %v1802, 0
    %2138 = vmatprep.subr.mxu0 0.0
    %2139 = vmatpush1.msra.mxu0 0.0
    %2140 = vmatprep.subr.mxu0 0.0
    %2141 = vmatpush1.msra.mxu0 0.0
    %2142 = vmatprep.subr.mxu0 0.0
    %2143 = vmatpush1.msra.mxu0 0.0
    %2144 = vmatprep.subr.mxu0 0.0
    %2145 = vmatpush1.msra.mxu0 0.0
    %2146 = vmatprep.subr.mxu0 0.0
    %2147 = vmatpush1.msra.mxu0 0.0
    %2148 = vmatprep.subr.mxu0 0.0
    %2149 = vmatpush1.msra.mxu0 0.0
    %2150 = vmatprep.subr.mxu0 0.0
    %2151 = vmatpush1.msra.mxu0 0.0
    %2152 = vmatprep.subr.mxu0 0.0
    %2153 = vmatpush1.msra.mxu0 0.0
    %2154 = vmatprep.subr.mxu0 0.0
    %2155 = vmatpush1.msra.mxu0 0.0
    %2156 = vmatprep.subr.mxu0 0.0
    %2157 = vmatpush1.msra.mxu0 0.0
    %2158 = vmatprep.subr.mxu0 0.0
    %2159 = vmatpush1.msra.mxu0 0.0
    %2160 = vmatprep.subr.mxu0 0.0
    %2161 = vmatpush1.msra.mxu0 0.0
    %2162 = vmatprep.subr.mxu0 0.0
    %2163 = vmatpush1.msra.mxu0 %v2061
    %2164 = vmatprep.subr.mxu0 0.0
    %2165 = vmatpush1.msra.mxu0 %v2060
    %2166 = vmatprep.subr.mxu0 0.0
    %2167 = vmatpush1.msra.mxu0 %v2059
    %2168 = vmatprep.subr.mxu0 0.0
    %2169 = vmatpush1.msra.mxu0 %v2058
    %2170 = vmatprep.subr.mxu0 0.0
    %2171 = vmatpush2.msra.mxu0 0.0
    %2172 = vmatprep.subr.mxu0 0.0
    %2173 = vmatpush2.msra.mxu0 0.0
    %2174 = vmatprep.subr.mxu0 0.0
    %2175 = vmatpush2.msra.mxu0 0.0
    %2176 = vmatprep.subr.mxu0 0.0
    %2177 = vmatpush2.msra.mxu0 0.0
    %2178 = vmatprep.subr.mxu0 0.0
    %2179 = vmatpush2.msra.mxu0 0.0
    %2180 = vmatprep.subr.mxu0 0.0
    %2181 = vmatpush2.msra.mxu0 0.0
    %2182 = vmatprep.subr.mxu0 0.0
    %2183 = vmatpush2.msra.mxu0 0.0
    %2184 = vmatprep.subr.mxu0 0.0
    %2185 = vmatpush2.msra.mxu0 0.0
    %2186 = vmatprep.subr.mxu0 0.0
    %2187 = vmatpush2.msra.mxu0 0.0
    %2188 = vmatprep.subr.mxu0 0.0
    %2189 = vmatpush2.msra.mxu0 0.0
    %2190 = vmatprep.subr.mxu0 0.0
    %2191 = vmatpush2.msra.mxu0 0.0
    %2192 = vmatprep.subr.mxu0 0.0
    %2193 = vmatpush2.msra.mxu0 0.0
    %2194 = vmatprep.subr.mxu0 0.0
    %2195 = vmatpush2.msra.mxu0 0.0
    %2196 = vmatprep.subr.mxu0 0.0
    %2197 = vmatpush2.msra.mxu0 0.0
    %2198 = vmatprep.subr.mxu0 0.0
    %2199 = vmatpush2.msra.mxu0 0.0
    %2200 = vmatprep.subr.mxu0 0.0
    %2201 = vmatpush2.msra.mxu0 0.0
    %2202 = vmatprep.mubr.f32.mxu0 0.0
    %2203 = vmatmul.mubr.f32.gmra.mxu0 %v2136
    %v2204 = vpop.f32.mrf.mxu0
    %v2205 = vadd.f32 0.0, %v2204
    %v2206 = vpop.f32.mrf.mxu0
    %2207 = vdwg.mxu0
    %v2209 = vsel %vm2057, %v1806, 0
    %2211 = vmatprep.subr.mxu0 0.0
    %2212 = vmatpush1.msra.mxu0 0.0
    %2213 = vmatprep.subr.mxu0 0.0
    %2214 = vmatpush1.msra.mxu0 0.0
    %2215 = vmatprep.subr.mxu0 0.0
    %2216 = vmatpush1.msra.mxu0 0.0
    %2217 = vmatprep.subr.mxu0 0.0
    %2218 = vmatpush1.msra.mxu0 0.0
    %2219 = vmatprep.subr.mxu0 0.0
    %2220 = vmatpush1.msra.mxu0 0.0
    %2221 = vmatprep.subr.mxu0 0.0
    %2222 = vmatpush1.msra.mxu0 0.0
    %2223 = vmatprep.subr.mxu0 0.0
    %2224 = vmatpush1.msra.mxu0 0.0
    %2225 = vmatprep.subr.mxu0 0.0
    %2226 = vmatpush1.msra.mxu0 0.0
    %2227 = vmatprep.subr.mxu0 0.0
    %2228 = vmatpush1.msra.mxu0 0.0
    %2229 = vmatprep.subr.mxu0 0.0
    %2230 = vmatpush1.msra.mxu0 0.0
    %2231 = vmatprep.subr.mxu0 0.0
    %2232 = vmatpush1.msra.mxu0 0.0
    %2233 = vmatprep.subr.mxu0 0.0
    %2234 = vmatpush1.msra.mxu0 0.0
    %2235 = vmatprep.subr.mxu0 0.0
    %2236 = vmatpush1.msra.mxu0 %v2061
    %2237 = vmatprep.subr.mxu0 0.0
    %2238 = vmatpush1.msra.mxu0 %v2060
    %2239 = vmatprep.subr.mxu0 0.0
    %2240 = vmatpush1.msra.mxu0 %v2059
    %2241 = vmatprep.subr.mxu0 0.0
    %2242 = vmatpush1.msra.mxu0 %v2058
    %2243 = vmatprep.subr.mxu0 0.0
    %2244 = vmatpush2.msra.mxu0 0.0
    %2245 = vmatprep.subr.mxu0 0.0
    %2246 = vmatpush2.msra.mxu0 0.0
    %2247 = vmatprep.subr.mxu0 0.0
    %2248 = vmatpush2.msra.mxu0 0.0
    %2249 = vmatprep.subr.mxu0 0.0
    %2250 = vmatpush2.msra.mxu0 0.0
    %2251 = vmatprep.subr.mxu0 0.0
    %2252 = vmatpush2.msra.mxu0 0.0
    %2253 = vmatprep.subr.mxu0 0.0
    %2254 = vmatpush2.msra.mxu0 0.0
    %2255 = vmatprep.subr.mxu0 0.0
    %2256 = vmatpush2.msra.mxu0 0.0
    %2257 = vmatprep.subr.mxu0 0.0
    %2258 = vmatpush2.msra.mxu0 0.0
    %2259 = vmatprep.subr.mxu0 0.0
    %2260 = vmatpush2.msra.mxu0 0.0
    %2261 = vmatprep.subr.mxu0 0.0
    %2262 = vmatpush2.msra.mxu0 0.0
    %2263 = vmatprep.subr.mxu0 0.0
    %2264 = vmatpush2.msra.mxu0 0.0
    %2265 = vmatprep.subr.mxu0 0.0
    %2266 = vmatpush2.msra.mxu0 0.0
    %2267 = vmatprep.subr.mxu0 0.0
    %2268 = vmatpush2.msra.mxu0 0.0
    %2269 = vmatprep.subr.mxu0 0.0
    %2270 = vmatpush2.msra.mxu0 0.0
    %2271 = vmatprep.subr.mxu0 0.0
    %2272 = vmatpush2.msra.mxu0 0.0
    %2273 = vmatprep.subr.mxu0 0.0
    %2274 = vmatpush2.msra.mxu0 0.0
    %2275 = vmatprep.mubr.f32.mxu0 0.0
    %2276 = vmatmul.mubr.f32.gmra.mxu0 %v2209
    %v2277 = vpop.f32.mrf.mxu0
    %v2278 = vadd.f32 0.0, %v2277
    %v2279 = vpop.f32.mrf.mxu0
    %2280 = vdwg.mxu0
    %v2282 = vsel %vm2057, %v1810, 0
    %2284 = vmatprep.subr.mxu0 0.0
    %2285 = vmatpush1.msra.mxu0 0.0
    %2286 = vmatprep.subr.mxu0 0.0
    %2287 = vmatpush1.msra.mxu0 0.0
    %2288 = vmatprep.subr.mxu0 0.0
    %2289 = vmatpush1.msra.mxu0 0.0
    %2290 = vmatprep.subr.mxu0 0.0
    %2291 = vmatpush1.msra.mxu0 0.0
    %2292 = vmatprep.subr.mxu0 0.0
    %2293 = vmatpush1.msra.mxu0 0.0
    %2294 = vmatprep.subr.mxu0 0.0
    %2295 = vmatpush1.msra.mxu0 0.0
    %2296 = vmatprep.subr.mxu0 0.0
    %2297 = vmatpush1.msra.mxu0 0.0
    %2298 = vmatprep.subr.mxu0 0.0
    %2299 = vmatpush1.msra.mxu0 0.0
    %2300 = vmatprep.subr.mxu0 0.0
    %2301 = vmatpush1.msra.mxu0 0.0
    %2302 = vmatprep.subr.mxu0 0.0
    %2303 = vmatpush1.msra.mxu0 0.0
    %2304 = vmatprep.subr.mxu0 0.0
    %2305 = vmatpush1.msra.mxu0 0.0
    %2306 = vmatprep.subr.mxu0 0.0
    %2307 = vmatpush1.msra.mxu0 0.0
    %2308 = vmatprep.subr.mxu0 0.0
    %2309 = vmatpush1.msra.mxu0 %v2061
    %2310 = vmatprep.subr.mxu0 0.0
    %2311 = vmatpush1.msra.mxu0 %v2060
    %2312 = vmatprep.subr.mxu0 0.0
    %2313 = vmatpush1.msra.mxu0 %v2059
    %2314 = vmatprep.subr.mxu0 0.0
    %2315 = vmatpush1.msra.mxu0 %v2058
    %2316 = vmatprep.subr.mxu0 0.0
    %2317 = vmatpush2.msra.mxu0 0.0
    %2318 = vmatprep.subr.mxu0 0.0
    %2319 = vmatpush2.msra.mxu0 0.0
    %2320 = vmatprep.subr.mxu0 0.0
    %2321 = vmatpush2.msra.mxu0 0.0
    %2322 = vmatprep.subr.mxu0 0.0
    %2323 = vmatpush2.msra.mxu0 0.0
    %2324 = vmatprep.subr.mxu0 0.0
    %2325 = vmatpush2.msra.mxu0 0.0
    %2326 = vmatprep.subr.mxu0 0.0
    %2327 = vmatpush2.msra.mxu0 0.0
    %2328 = vmatprep.subr.mxu0 0.0
    %2329 = vmatpush2.msra.mxu0 0.0
    %2330 = vmatprep.subr.mxu0 0.0
    %2331 = vmatpush2.msra.mxu0 0.0
    %2332 = vmatprep.subr.mxu0 0.0
    %2333 = vmatpush2.msra.mxu0 0.0
    %2334 = vmatprep.subr.mxu0 0.0
    %2335 = vmatpush2.msra.mxu0 0.0
    %2336 = vmatprep.subr.mxu0 0.0
    %2337 = vmatpush2.msra.mxu0 0.0
    %2338 = vmatprep.subr.mxu0 0.0
    %2339 = vmatpush2.msra.mxu0 0.0
    %2340 = vmatprep.subr.mxu0 0.0
    %2341 = vmatpush2.msra.mxu0 0.0
    %2342 = vmatprep.subr.mxu0 0.0
    %2343 = vmatpush2.msra.mxu0 0.0
    %2344 = vmatprep.subr.mxu0 0.0
    %2345 = vmatpush2.msra.mxu0 0.0
    %2346 = vmatprep.subr.mxu0 0.0
    %2347 = vmatpush2.msra.mxu0 0.0
    %2348 = vmatprep.mubr.f32.mxu0 0.0
    %2349 = vmatmul.mubr.f32.gmra.mxu0 %v2282
    %v2350 = vpop.f32.mrf.mxu0
    %v2351 = vadd.f32 0.0, %v2350
    %v2352 = vpop.f32.mrf.mxu0
    %2353 = vdwg.mxu0
    %2355 = vrot.lane.b32.xlu0 %v2205, 64
    %v2356 = vpop.permute.xlu0 %2355
    %2359 = vrot.lane.b32.xlu0 %v2351, 64
    %v2360 = vpop.permute.xlu0 %2359
    %vm2362 = vcmask 523264
    %v2363 = vsel %vm2362, %v2132, %v2356
    %v2364 = vsel %vm2362, %v2278, %v2360
    %2365 = vmatprep.subr.mxu0 0.0
    %2366 = vmatpush1.msra.mxu0 %v1826
    %2367 = vmatprep.subr.mxu0 0.0
    %2368 = vmatpush1.msra.mxu0 %v1825
    %2369 = vmatprep.subr.mxu0 0.0
    %2370 = vmatpush1.msra.mxu0 %v1824
    %2371 = vmatprep.subr.mxu0 0.0
    %2372 = vmatpush1.msra.mxu0 %v1823
    %2373 = vmatprep.subr.mxu0 0.0
    %2374 = vmatpush1.msra.mxu0 %v1822
    %2375 = vmatprep.subr.mxu0 0.0
    %2376 = vmatpush1.msra.mxu0 %v1821
    %2377 = vmatprep.subr.mxu0 0.0
    %2378 = vmatpush1.msra.mxu0 %v1820
    %2379 = vmatprep.subr.mxu0 0.0
    %2380 = vmatpush1.msra.mxu0 %v1819
    %2381 = vmatprep.subr.mxu0 0.0
    %2382 = vmatpush1.msra.mxu0 %v1818
    %2383 = vmatprep.subr.mxu0 0.0
    %2384 = vmatpush1.msra.mxu0 %v1817
    %2385 = vmatprep.subr.mxu0 0.0
    %2386 = vmatpush1.msra.mxu0 %v1816
    %2387 = vmatprep.subr.mxu0 0.0
    %2388 = vmatpush1.msra.mxu0 %v1815
    %2389 = vmatprep.subr.mxu0 0.0
    %2390 = vmatpush1.msra.mxu0 %v1814
    %2391 = vmatprep.subr.mxu0 0.0
    %2392 = vmatpush1.msra.mxu0 %v1813
    %2393 = vmatprep.subr.mxu0 0.0
    %2394 = vmatpush1.msra.mxu0 %v1812
    %2395 = vmatprep.subr.mxu0 0.0
    %2396 = vmatpush1.msra.mxu0 %v1811
    %2397 = vmatprep.subr.mxu0 0.0
    %2398 = vmatpush2.msra.mxu0 %v1842
    %2399 = vmatprep.subr.mxu0 0.0
    %2400 = vmatpush2.msra.mxu0 %v1841
    %2401 = vmatprep.subr.mxu0 0.0
    %2402 = vmatpush2.msra.mxu0 %v1840
    %2403 = vmatprep.subr.mxu0 0.0
    %2404 = vmatpush2.msra.mxu0 %v1839
    %2405 = vmatprep.subr.mxu0 0.0
    %2406 = vmatpush2.msra.mxu0 %v1838
    %2407 = vmatprep.subr.mxu0 0.0
    %2408 = vmatpush2.msra.mxu0 %v1837
    %2409 = vmatprep.subr.mxu0 0.0
    %2410 = vmatpush2.msra.mxu0 %v1836
    %2411 = vmatprep.subr.mxu0 0.0
    %2412 = vmatpush2.msra.mxu0 %v1835
    %2413 = vmatprep.subr.mxu0 0.0
    %2414 = vmatpush2.msra.mxu0 %v1834
    %2415 = vmatprep.subr.mxu0 0.0
    %2416 = vmatpush2.msra.mxu0 %v1833
    %2417 = vmatprep.subr.mxu0 0.0
    %2418 = vmatpush2.msra.mxu0 %v1832
    %2419 = vmatprep.subr.mxu0 0.0
    %2420 = vmatpush2.msra.mxu0 %v1831
    %2421 = vmatprep.subr.mxu0 0.0
    %2422 = vmatpush2.msra.mxu0 %v1830
    %2423 = vmatprep.subr.mxu0 0.0
    %2424 = vmatpush2.msra.mxu0 %v1829
    %2425 = vmatprep.subr.mxu0 0.0
    %2426 = vmatpush2.msra.mxu0 %v1828
    %2427 = vmatprep.subr.mxu0 0.0
    %2428 = vmatpush2.msra.mxu0 %v1827
    %2429 = vmatprep.mubr.f32.mxu0 %v2364
    %2430 = vmatmul.mubr.f32.gmra.mxu0 %v2363
    %v2431 = vpop.f32.mrf.mxu0
    %v2432 = vadd.f32 0.0, %v2431
    %v2433 = vpop.f32.mrf.mxu0
    %2434 = vdwg.mxu0
    %v2436 = vsel %vm1614, %v1776, 0
    %v2439 = vsel %vm1614, %v1778, 0
    %v2442 = vsel %vm1614, %v1780, 0
    %v2445 = vsel %vm1614, %v1782, 0
    %2447 = vmatprep.subr.mxu0 0.0
    %2448 = vmatpush1.msra.mxu0 0.0
    %2449 = vmatprep.subr.mxu0 0.0
    %2450 = vmatpush1.msra.mxu0 0.0
    %2451 = vmatprep.subr.mxu0 0.0
    %2452 = vmatpush1.msra.mxu0 0.0
    %2453 = vmatprep.subr.mxu0 0.0
    %2454 = vmatpush1.msra.mxu0 0.0
    %2455 = vmatprep.subr.mxu0 0.0
    %2456 = vmatpush1.msra.mxu0 0.0
    %2457 = vmatprep.subr.mxu0 0.0
    %2458 = vmatpush1.msra.mxu0 0.0
    %2459 = vmatprep.subr.mxu0 0.0
    %2460 = vmatpush1.msra.mxu0 0.0
    %2461 = vmatprep.subr.mxu0 0.0
    %2462 = vmatpush1.msra.mxu0 0.0
    %2463 = vmatprep.subr.mxu0 0.0
    %2464 = vmatpush1.msra.mxu0 0.0
    %2465 = vmatprep.subr.mxu0 0.0
    %2466 = vmatpush1.msra.mxu0 0.0
    %2467 = vmatprep.subr.mxu0 0.0
    %2468 = vmatpush1.msra.mxu0 0.0
    %2469 = vmatprep.subr.mxu0 0.0
    %2470 = vmatpush1.msra.mxu0 0.0
    %2471 = vmatprep.subr.mxu0 0.0
    %2472 = vmatpush1.msra.mxu0 0.0
    %2473 = vmatprep.subr.mxu0 0.0
    %2474 = vmatpush1.msra.mxu0 0.0
    %2475 = vmatprep.subr.mxu0 0.0
    %2476 = vmatpush1.msra.mxu0 0.0
    %2477 = vmatprep.subr.mxu0 0.0
    %2478 = vmatpush1.msra.mxu0 %v332
    %2479 = vmatprep.subr.mxu0 0.0
    %2480 = vmatpush2.msra.mxu0 0.0
    %2481 = vmatprep.subr.mxu0 0.0
    %2482 = vmatpush2.msra.mxu0 0.0
    %2483 = vmatprep.subr.mxu0 0.0
    %2484 = vmatpush2.msra.mxu0 0.0
    %2485 = vmatprep.subr.mxu0 0.0
    %2486 = vmatpush2.msra.mxu0 0.0
    %2487 = vmatprep.subr.mxu0 0.0
    %2488 = vmatpush2.msra.mxu0 0.0
    %2489 = vmatprep.subr.mxu0 0.0
    %2490 = vmatpush2.msra.mxu0 0.0
    %2491 = vmatprep.subr.mxu0 0.0
    %2492 = vmatpush2.msra.mxu0 0.0
    %2493 = vmatprep.subr.mxu0 0.0
    %2494 = vmatpush2.msra.mxu0 0.0
    %2495 = vmatprep.subr.mxu0 0.0
    %2496 = vmatpush2.msra.mxu0 0.0
    %2497 = vmatprep.subr.mxu0 0.0
    %2498 = vmatpush2.msra.mxu0 0.0
    %2499 = vmatprep.subr.mxu0 0.0
    %2500 = vmatpush2.msra.mxu0 0.0
    %2501 = vmatprep.subr.mxu0 0.0
    %2502 = vmatpush2.msra.mxu0 0.0
    %2503 = vmatprep.subr.mxu0 0.0
    %2504 = vmatpush2.msra.mxu0 0.0
    %2505 = vmatprep.subr.mxu0 0.0
    %2506 = vmatpush2.msra.mxu0 0.0
    %2507 = vmatprep.subr.mxu0 0.0
    %2508 = vmatpush2.msra.mxu0 0.0
    %2509 = vmatprep.subr.mxu0 0.0
    %2510 = vmatpush2.msra.mxu0 0.0
    %2511 = vmatprep.mubr.f32.mxu0 0.0
    %2512 = vmatmul.mubr.f32.gmra.mxu0 %v2436
    %v2513 = vpop.f32.mrf.mxu0
    %v2514 = vadd.f32 0.0, %v2513
    %v2515 = vpop.f32.mrf.mxu0
    %2516 = vmatprep.mubr.f32.mxu0 0.0
    %2517 = vmatmul.mubr.f32.gmra.mxu0 %v2439
    %v2518 = vpop.f32.mrf.mxu0
    %v2519 = vadd.f32 0.0, %v2518
    %v2520 = vpop.f32.mrf.mxu0
    %2521 = vmatprep.mubr.f32.mxu0 0.0
    %2522 = vmatmul.mubr.f32.gmra.mxu0 %v2442
    %v2523 = vpop.f32.mrf.mxu0
    %v2524 = vadd.f32 0.0, %v2523
    %v2525 = vpop.f32.mrf.mxu0
    %2526 = vmatprep.mubr.f32.mxu0 0.0
    %2527 = vmatmul.mubr.f32.gmra.mxu0 %v2445
    %v2528 = vpop.f32.mrf.mxu0
    %v2529 = vadd.f32 0.0, %v2528
    %v2530 = vpop.f32.mrf.mxu0
    %2531 = vdwg.mxu0
    %2533 = vrot.lane.b32.xlu0 %v332, 96
    %v2534 = vpop.permute.xlu0 %2533
    %v2537 = vsel %vm1614, %v1784, 0
    %v2540 = vsel %vm1614, %v1786, 0
    %v2543 = vsel %vm1614, %v1788, 0
    %v2546 = vsel %vm1614, %v1790, 0
    %2548 = vmatprep.subr.mxu0 0.0
    %2549 = vmatpush1.msra.mxu0 0.0
    %2550 = vmatprep.subr.mxu0 0.0
    %2551 = vmatpush1.msra.mxu0 0.0
    %2552 = vmatprep.subr.mxu0 0.0
    %2553 = vmatpush1.msra.mxu0 0.0
    %2554 = vmatprep.subr.mxu0 0.0
    %2555 = vmatpush1.msra.mxu0 0.0
    %2556 = vmatprep.subr.mxu0 0.0
    %2557 = vmatpush1.msra.mxu0 0.0
    %2558 = vmatprep.subr.mxu0 0.0
    %2559 = vmatpush1.msra.mxu0 0.0
    %2560 = vmatprep.subr.mxu0 0.0
    %2561 = vmatpush1.msra.mxu0 0.0
    %2562 = vmatprep.subr.mxu0 0.0
    %2563 = vmatpush1.msra.mxu0 0.0
    %2564 = vmatprep.subr.mxu0 0.0
    %2565 = vmatpush1.msra.mxu0 0.0
    %2566 = vmatprep.subr.mxu0 0.0
    %2567 = vmatpush1.msra.mxu0 0.0
    %2568 = vmatprep.subr.mxu0 0.0
    %2569 = vmatpush1.msra.mxu0 0.0
    %2570 = vmatprep.subr.mxu0 0.0
    %2571 = vmatpush1.msra.mxu0 0.0
    %2572 = vmatprep.subr.mxu0 0.0
    %2573 = vmatpush1.msra.mxu0 0.0
    %2574 = vmatprep.subr.mxu0 0.0
    %2575 = vmatpush1.msra.mxu0 0.0
    %2576 = vmatprep.subr.mxu0 0.0
    %2577 = vmatpush1.msra.mxu0 0.0
    %2578 = vmatprep.subr.mxu0 0.0
    %2579 = vmatpush1.msra.mxu0 %v2534
    %2580 = vmatprep.subr.mxu0 0.0
    %2581 = vmatpush2.msra.mxu0 0.0
    %2582 = vmatprep.subr.mxu0 0.0
    %2583 = vmatpush2.msra.mxu0 0.0
    %2584 = vmatprep.subr.mxu0 0.0
    %2585 = vmatpush2.msra.mxu0 0.0
    %2586 = vmatprep.subr.mxu0 0.0
    %2587 = vmatpush2.msra.mxu0 0.0
    %2588 = vmatprep.subr.mxu0 0.0
    %2589 = vmatpush2.msra.mxu0 0.0
    %2590 = vmatprep.subr.mxu0 0.0
    %2591 = vmatpush2.msra.mxu0 0.0
    %2592 = vmatprep.subr.mxu0 0.0
    %2593 = vmatpush2.msra.mxu0 0.0
    %2594 = vmatprep.subr.mxu0 0.0
    %2595 = vmatpush2.msra.mxu0 0.0
    %2596 = vmatprep.subr.mxu0 0.0
    %2597 = vmatpush2.msra.mxu0 0.0
    %2598 = vmatprep.subr.mxu0 0.0
    %2599 = vmatpush2.msra.mxu0 0.0
    %2600 = vmatprep.subr.mxu0 0.0
    %2601 = vmatpush2.msra.mxu0 0.0
    %2602 = vmatprep.subr.mxu0 0.0
    %2603 = vmatpush2.msra.mxu0 0.0
    %2604 = vmatprep.subr.mxu0 0.0
    %2605 = vmatpush2.msra.mxu0 0.0
    %2606 = vmatprep.subr.mxu0 0.0
    %2607 = vmatpush2.msra.mxu0 0.0
    %2608 = vmatprep.subr.mxu0 0.0
    %2609 = vmatpush2.msra.mxu0 0.0
    %2610 = vmatprep.subr.mxu0 0.0
    %2611 = vmatpush2.msra.mxu0 0.0
    %2612 = vmatprep.mubr.f32.mxu0 0.0
    %2613 = vmatmul.mubr.f32.gmra.mxu0 %v2537
    %v2614 = vpop.f32.mrf.mxu0
    %v2615 = vadd.f32 0.0, %v2614
    %v2616 = vpop.f32.mrf.mxu0
    %2617 = vmatprep.mubr.f32.mxu0 0.0
    %2618 = vmatmul.mubr.f32.gmra.mxu0 %v2540
    %v2619 = vpop.f32.mrf.mxu0
    %v2620 = vadd.f32 0.0, %v2619
    %v2621 = vpop.f32.mrf.mxu0
    %2622 = vmatprep.mubr.f32.mxu0 0.0
    %2623 = vmatmul.mubr.f32.gmra.mxu0 %v2543
    %v2624 = vpop.f32.mrf.mxu0
    %v2625 = vadd.f32 0.0, %v2624
    %v2626 = vpop.f32.mrf.mxu0
    %2627 = vmatprep.mubr.f32.mxu0 0.0
    %2628 = vmatmul.mubr.f32.gmra.mxu0 %v2546
    %v2629 = vpop.f32.mrf.mxu0
    %v2630 = vadd.f32 0.0, %v2629
    %v2631 = vpop.f32.mrf.mxu0
    %2632 = vdwg.mxu0
    %2637 = vrot.lane.b32.xlu0 %v2615, 32
    %v2638 = vpop.permute.xlu0 %2637
    %2639 = vrot.lane.b32.xlu0 %v2620, 32
    %v2640 = vpop.permute.xlu0 %2639
    %2641 = vrot.lane.b32.xlu0 %v2625, 32
    %v2642 = vpop.permute.xlu0 %2641
    %2643 = vrot.lane.b32.xlu0 %v2630, 32
    %v2644 = vpop.permute.xlu0 %2643
    %v2649 = vsel %vm2057, %v2514, %v2638
    %v2650 = vsel %vm2057, %v2519, %v2640
    %v2651 = vsel %vm2057, %v2524, %v2642
    %v2652 = vsel %vm2057, %v2529, %v2644
    %2653 = vmatprep.subr.mxu0 0.0
    %2654 = vmatpush1.msra.mxu0 0.0
    %2655 = vmatprep.subr.mxu0 0.0
    %2656 = vmatpush1.msra.mxu0 0.0
    %2657 = vmatprep.subr.mxu0 0.0
    %2658 = vmatpush1.msra.mxu0 0.0
    %2659 = vmatprep.subr.mxu0 0.0
    %2660 = vmatpush1.msra.mxu0 0.0
    %2661 = vmatprep.subr.mxu0 0.0
    %2662 = vmatpush1.msra.mxu0 0.0
    %2663 = vmatprep.subr.mxu0 0.0
    %2664 = vmatpush1.msra.mxu0 0.0
    %2665 = vmatprep.subr.mxu0 0.0
    %2666 = vmatpush1.msra.mxu0 0.0
    %2667 = vmatprep.subr.mxu0 0.0
    %2668 = vmatpush1.msra.mxu0 0.0
    %2669 = vmatprep.subr.mxu0 0.0
    %2670 = vmatpush1.msra.mxu0 0.0
    %2671 = vmatprep.subr.mxu0 0.0
    %2672 = vmatpush1.msra.mxu0 0.0
    %2673 = vmatprep.subr.mxu0 0.0
    %2674 = vmatpush1.msra.mxu0 0.0
    %2675 = vmatprep.subr.mxu0 0.0
    %2676 = vmatpush1.msra.mxu0 0.0
    %2677 = vmatprep.subr.mxu0 0.0
    %2678 = vmatpush1.msra.mxu0 %v2652
    %2679 = vmatprep.subr.mxu0 0.0
    %2680 = vmatpush1.msra.mxu0 %v2651
    %2681 = vmatprep.subr.mxu0 0.0
    %2682 = vmatpush1.msra.mxu0 %v2650
    %2683 = vmatprep.subr.mxu0 0.0
    %2684 = vmatpush1.msra.mxu0 %v2649
    %2685 = vmatprep.subr.mxu0 0.0
    %2686 = vmatpush2.msra.mxu0 0.0
    %2687 = vmatprep.subr.mxu0 0.0
    %2688 = vmatpush2.msra.mxu0 0.0
    %2689 = vmatprep.subr.mxu0 0.0
    %2690 = vmatpush2.msra.mxu0 0.0
    %2691 = vmatprep.subr.mxu0 0.0
    %2692 = vmatpush2.msra.mxu0 0.0
    %2693 = vmatprep.subr.mxu0 0.0
    %2694 = vmatpush2.msra.mxu0 0.0
    %2695 = vmatprep.subr.mxu0 0.0
    %2696 = vmatpush2.msra.mxu0 0.0
    %2697 = vmatprep.subr.mxu0 0.0
    %2698 = vmatpush2.msra.mxu0 0.0
    %2699 = vmatprep.subr.mxu0 0.0
    %2700 = vmatpush2.msra.mxu0 0.0
    %2701 = vmatprep.subr.mxu0 0.0
    %2702 = vmatpush2.msra.mxu0 0.0
    %2703 = vmatprep.subr.mxu0 0.0
    %2704 = vmatpush2.msra.mxu0 0.0
    %2705 = vmatprep.subr.mxu0 0.0
    %2706 = vmatpush2.msra.mxu0 0.0
    %2707 = vmatprep.subr.mxu0 0.0
    %2708 = vmatpush2.msra.mxu0 0.0
    %2709 = vmatprep.subr.mxu0 0.0
    %2710 = vmatpush2.msra.mxu0 0.0
    %2711 = vmatprep.subr.mxu0 0.0
    %2712 = vmatpush2.msra.mxu0 0.0
    %2713 = vmatprep.subr.mxu0 0.0
    %2714 = vmatpush2.msra.mxu0 0.0
    %2715 = vmatprep.subr.mxu0 0.0
    %2716 = vmatpush2.msra.mxu0 0.0
    %2717 = vmatprep.mubr.f32.mxu0 0.0
    %2718 = vmatmul.mubr.f32.gmra.mxu0 %v2063
    %v2719 = vpop.f32.mrf.mxu0
    %v2720 = vadd.f32 0.0, %v2719
    %v2721 = vpop.f32.mrf.mxu0
    %2722 = vdwg.mxu0
    %2723 = vmatprep.subr.mxu0 0.0
    %2724 = vmatpush1.msra.mxu0 0.0
    %2725 = vmatprep.subr.mxu0 0.0
    %2726 = vmatpush1.msra.mxu0 0.0
    %2727 = vmatprep.subr.mxu0 0.0
    %2728 = vmatpush1.msra.mxu0 0.0
    %2729 = vmatprep.subr.mxu0 0.0
    %2730 = vmatpush1.msra.mxu0 0.0
    %2731 = vmatprep.subr.mxu0 0.0
    %2732 = vmatpush1.msra.mxu0 0.0
    %2733 = vmatprep.subr.mxu0 0.0
    %2734 = vmatpush1.msra.mxu0 0.0
    %2735 = vmatprep.subr.mxu0 0.0
    %2736 = vmatpush1.msra.mxu0 0.0
    %2737 = vmatprep.subr.mxu0 0.0
    %2738 = vmatpush1.msra.mxu0 0.0
    %2739 = vmatprep.subr.mxu0 0.0
    %2740 = vmatpush1.msra.mxu0 0.0
    %2741 = vmatprep.subr.mxu0 0.0
    %2742 = vmatpush1.msra.mxu0 0.0
    %2743 = vmatprep.subr.mxu0 0.0
    %2744 = vmatpush1.msra.mxu0 0.0
    %2745 = vmatprep.subr.mxu0 0.0
    %2746 = vmatpush1.msra.mxu0 0.0
    %2747 = vmatprep.subr.mxu0 0.0
    %2748 = vmatpush1.msra.mxu0 %v2652
    %2749 = vmatprep.subr.mxu0 0.0
    %2750 = vmatpush1.msra.mxu0 %v2651
    %2751 = vmatprep.subr.mxu0 0.0
    %2752 = vmatpush1.msra.mxu0 %v2650
    %2753 = vmatprep.subr.mxu0 0.0
    %2754 = vmatpush1.msra.mxu0 %v2649
    %2755 = vmatprep.subr.mxu0 0.0
    %2756 = vmatpush2.msra.mxu0 0.0
    %2757 = vmatprep.subr.mxu0 0.0
    %2758 = vmatpush2.msra.mxu0 0.0
    %2759 = vmatprep.subr.mxu0 0.0
    %2760 = vmatpush2.msra.mxu0 0.0
    %2761 = vmatprep.subr.mxu0 0.0
    %2762 = vmatpush2.msra.mxu0 0.0
    %2763 = vmatprep.subr.mxu0 0.0
    %2764 = vmatpush2.msra.mxu0 0.0
    %2765 = vmatprep.subr.mxu0 0.0
    %2766 = vmatpush2.msra.mxu0 0.0
    %2767 = vmatprep.subr.mxu0 0.0
    %2768 = vmatpush2.msra.mxu0 0.0
    %2769 = vmatprep.subr.mxu0 0.0
    %2770 = vmatpush2.msra.mxu0 0.0
    %2771 = vmatprep.subr.mxu0 0.0
    %2772 = vmatpush2.msra.mxu0 0.0
    %2773 = vmatprep.subr.mxu0 0.0
    %2774 = vmatpush2.msra.mxu0 0.0
    %2775 = vmatprep.subr.mxu0 0.0
    %2776 = vmatpush2.msra.mxu0 0.0
    %2777 = vmatprep.subr.mxu0 0.0
    %2778 = vmatpush2.msra.mxu0 0.0
    %2779 = vmatprep.subr.mxu0 0.0
    %2780 = vmatpush2.msra.mxu0 0.0
    %2781 = vmatprep.subr.mxu0 0.0
    %2782 = vmatpush2.msra.mxu0 0.0
    %2783 = vmatprep.subr.mxu0 0.0
    %2784 = vmatpush2.msra.mxu0 0.0
    %2785 = vmatprep.subr.mxu0 0.0
    %2786 = vmatpush2.msra.mxu0 0.0
    %2787 = vmatprep.mubr.f32.mxu0 0.0
    %2788 = vmatmul.mubr.f32.gmra.mxu0 %v2136
    %v2789 = vpop.f32.mrf.mxu0
    %v2790 = vadd.f32 0.0, %v2789
    %v2791 = vpop.f32.mrf.mxu0
    %2792 = vdwg.mxu0
    %2793 = vmatprep.subr.mxu0 0.0
    %2794 = vmatpush1.msra.mxu0 0.0
    %2795 = vmatprep.subr.mxu0 0.0
    %2796 = vmatpush1.msra.mxu0 0.0
    %2797 = vmatprep.subr.mxu0 0.0
    %2798 = vmatpush1.msra.mxu0 0.0
    %2799 = vmatprep.subr.mxu0 0.0
    %2800 = vmatpush1.msra.mxu0 0.0
    %2801 = vmatprep.subr.mxu0 0.0
    %2802 = vmatpush1.msra.mxu0 0.0
    %2803 = vmatprep.subr.mxu0 0.0
    %2804 = vmatpush1.msra.mxu0 0.0
    %2805 = vmatprep.subr.mxu0 0.0
    %2806 = vmatpush1.msra.mxu0 0.0
    %2807 = vmatprep.subr.mxu0 0.0
    %2808 = vmatpush1.msra.mxu0 0.0
    %2809 = vmatprep.subr.mxu0 0.0
    %2810 = vmatpush1.msra.mxu0 0.0
    %2811 = vmatprep.subr.mxu0 0.0
    %2812 = vmatpush1.msra.mxu0 0.0
    %2813 = vmatprep.subr.mxu0 0.0
    %2814 = vmatpush1.msra.mxu0 0.0
    %2815 = vmatprep.subr.mxu0 0.0
    %2816 = vmatpush1.msra.mxu0 0.0
    %2817 = vmatprep.subr.mxu0 0.0
    %2818 = vmatpush1.msra.mxu0 %v2652
    %2819 = vmatprep.subr.mxu0 0.0
    %2820 = vmatpush1.msra.mxu0 %v2651
    %2821 = vmatprep.subr.mxu0 0.0
    %2822 = vmatpush1.msra.mxu0 %v2650
    %2823 = vmatprep.subr.mxu0 0.0
    %2824 = vmatpush1.msra.mxu0 %v2649
    %2825 = vmatprep.subr.mxu0 0.0
    %2826 = vmatpush2.msra.mxu0 0.0
    %2827 = vmatprep.subr.mxu0 0.0
    %2828 = vmatpush2.msra.mxu0 0.0
    %2829 = vmatprep.subr.mxu0 0.0
    %2830 = vmatpush2.msra.mxu0 0.0
    %2831 = vmatprep.subr.mxu0 0.0
    %2832 = vmatpush2.msra.mxu0 0.0
    %2833 = vmatprep.subr.mxu0 0.0
    %2834 = vmatpush2.msra.mxu0 0.0
    %2835 = vmatprep.subr.mxu0 0.0
    %2836 = vmatpush2.msra.mxu0 0.0
    %2837 = vmatprep.subr.mxu0 0.0
    %2838 = vmatpush2.msra.mxu0 0.0
    %2839 = vmatprep.subr.mxu0 0.0
    %2840 = vmatpush2.msra.mxu0 0.0
    %2841 = vmatprep.subr.mxu0 0.0
    %2842 = vmatpush2.msra.mxu0 0.0
    %2843 = vmatprep.subr.mxu0 0.0
    %2844 = vmatpush2.msra.mxu0 0.0
    %2845 = vmatprep.subr.mxu0 0.0
    %2846 = vmatpush2.msra.mxu0 0.0
    %2847 = vmatprep.subr.mxu0 0.0
    %2848 = vmatpush2.msra.mxu0 0.0
    %2849 = vmatprep.subr.mxu0 0.0
    %2850 = vmatpush2.msra.mxu0 0.0
    %2851 = vmatprep.subr.mxu0 0.0
    %2852 = vmatpush2.msra.mxu0 0.0
    %2853 = vmatprep.subr.mxu0 0.0
    %2854 = vmatpush2.msra.mxu0 0.0
    %2855 = vmatprep.subr.mxu0 0.0
    %2856 = vmatpush2.msra.mxu0 0.0
    %2857 = vmatprep.mubr.f32.mxu0 0.0
    %2858 = vmatmul.mubr.f32.gmra.mxu0 %v2209
    %v2859 = vpop.f32.mrf.mxu0
    %v2860 = vadd.f32 0.0, %v2859
    %v2861 = vpop.f32.mrf.mxu0
    %2862 = vdwg.mxu0
    %2863 = vmatprep.subr.mxu0 0.0
    %2864 = vmatpush1.msra.mxu0 0.0
    %2865 = vmatprep.subr.mxu0 0.0
    %2866 = vmatpush1.msra.mxu0 0.0
    %2867 = vmatprep.subr.mxu0 0.0
    %2868 = vmatpush1.msra.mxu0 0.0
    %2869 = vmatprep.subr.mxu0 0.0
    %2870 = vmatpush1.msra.mxu0 0.0
    %2871 = vmatprep.subr.mxu0 0.0
    %2872 = vmatpush1.msra.mxu0 0.0
    %2873 = vmatprep.subr.mxu0 0.0
    %2874 = vmatpush1.msra.mxu0 0.0
    %2875 = vmatprep.subr.mxu0 0.0
    %2876 = vmatpush1.msra.mxu0 0.0
    %2877 = vmatprep.subr.mxu0 0.0
    %2878 = vmatpush1.msra.mxu0 0.0
    %2879 = vmatprep.subr.mxu0 0.0
    %2880 = vmatpush1.msra.mxu0 0.0
    %2881 = vmatprep.subr.mxu0 0.0
    %2882 = vmatpush1.msra.mxu0 0.0
    %2883 = vmatprep.subr.mxu0 0.0
    %2884 = vmatpush1.msra.mxu0 0.0
    %2885 = vmatprep.subr.mxu0 0.0
    %2886 = vmatpush1.msra.mxu0 0.0
    %2887 = vmatprep.subr.mxu0 0.0
    %2888 = vmatpush1.msra.mxu0 %v2652
    %2889 = vmatprep.subr.mxu0 0.0
    %2890 = vmatpush1.msra.mxu0 %v2651
    %2891 = vmatprep.subr.mxu0 0.0
    %2892 = vmatpush1.msra.mxu0 %v2650
    %2893 = vmatprep.subr.mxu0 0.0
    %2894 = vmatpush1.msra.mxu0 %v2649
    %2895 = vmatprep.subr.mxu0 0.0
    %2896 = vmatpush2.msra.mxu0 0.0
    %2897 = vmatprep.subr.mxu0 0.0
    %2898 = vmatpush2.msra.mxu0 0.0
    %2899 = vmatprep.subr.mxu0 0.0
    %2900 = vmatpush2.msra.mxu0 0.0
    %2901 = vmatprep.subr.mxu0 0.0
    %2902 = vmatpush2.msra.mxu0 0.0
    %2903 = vmatprep.subr.mxu0 0.0
    %2904 = vmatpush2.msra.mxu0 0.0
    %2905 = vmatprep.subr.mxu0 0.0
    %2906 = vmatpush2.msra.mxu0 0.0
    %2907 = vmatprep.subr.mxu0 0.0
    %2908 = vmatpush2.msra.mxu0 0.0
    %2909 = vmatprep.subr.mxu0 0.0
    %2910 = vmatpush2.msra.mxu0 0.0
    %2911 = vmatprep.subr.mxu0 0.0
    %2912 = vmatpush2.msra.mxu0 0.0
    %2913 = vmatprep.subr.mxu0 0.0
    %2914 = vmatpush2.msra.mxu0 0.0
    %2915 = vmatprep.subr.mxu0 0.0
    %2916 = vmatpush2.msra.mxu0 0.0
    %2917 = vmatprep.subr.mxu0 0.0
    %2918 = vmatpush2.msra.mxu0 0.0
    %2919 = vmatprep.subr.mxu0 0.0
    %2920 = vmatpush2.msra.mxu0 0.0
    %2921 = vmatprep.subr.mxu0 0.0
    %2922 = vmatpush2.msra.mxu0 0.0
    %2923 = vmatprep.subr.mxu0 0.0
    %2924 = vmatpush2.msra.mxu0 0.0
    %2925 = vmatprep.subr.mxu0 0.0
    %2926 = vmatpush2.msra.mxu0 0.0
    %2927 = vmatprep.mubr.f32.mxu0 0.0
    %2928 = vmatmul.mubr.f32.gmra.mxu0 %v2282
    %v2929 = vpop.f32.mrf.mxu0
    %v2930 = vadd.f32 0.0, %v2929
    %v2931 = vpop.f32.mrf.mxu0
    %2932 = vdwg.mxu0
    %2934 = vrot.lane.b32.xlu0 %v2790, 64
    %v2935 = vpop.permute.xlu0 %2934
    %2938 = vrot.lane.b32.xlu0 %v2930, 64
    %v2939 = vpop.permute.xlu0 %2938
    %v2941 = vsel %vm2362, %v2720, %v2935
    %v2942 = vsel %vm2362, %v2860, %v2939
    %2943 = vmatprep.subr.mxu0 0.0
    %2944 = vmatpush1.msra.mxu0 %v1826
    %2945 = vmatprep.subr.mxu0 0.0
    %2946 = vmatpush1.msra.mxu0 %v1825
    %2947 = vmatprep.subr.mxu0 0.0
    %2948 = vmatpush1.msra.mxu0 %v1824
    %2949 = vmatprep.subr.mxu0 0.0
    %2950 = vmatpush1.msra.mxu0 %v1823
    %2951 = vmatprep.subr.mxu0 0.0
    %2952 = vmatpush1.msra.mxu0 %v1822
    %2953 = vmatprep.subr.mxu0 0.0
    %2954 = vmatpush1.msra.mxu0 %v1821
    %2955 = vmatprep.subr.mxu0 0.0
    %2956 = vmatpush1.msra.mxu0 %v1820
    %2957 = vmatprep.subr.mxu0 0.0
    %2958 = vmatpush1.msra.mxu0 %v1819
    %2959 = vmatprep.subr.mxu0 0.0
    %2960 = vmatpush1.msra.mxu0 %v1818
    %2961 = vmatprep.subr.mxu0 0.0
    %2962 = vmatpush1.msra.mxu0 %v1817
    %2963 = vmatprep.subr.mxu0 0.0
    %2964 = vmatpush1.msra.mxu0 %v1816
    %2965 = vmatprep.subr.mxu0 0.0
    %2966 = vmatpush1.msra.mxu0 %v1815
    %2967 = vmatprep.subr.mxu0 0.0
    %2968 = vmatpush1.msra.mxu0 %v1814
    %2969 = vmatprep.subr.mxu0 0.0
    %2970 = vmatpush1.msra.mxu0 %v1813
    %2971 = vmatprep.subr.mxu0 0.0
    %2972 = vmatpush1.msra.mxu0 %v1812
    %2973 = vmatprep.subr.mxu0 0.0
    %2974 = vmatpush1.msra.mxu0 %v1811
    %2975 = vmatprep.subr.mxu0 0.0
    %2976 = vmatpush2.msra.mxu0 %v1842
    %2977 = vmatprep.subr.mxu0 0.0
    %2978 = vmatpush2.msra.mxu0 %v1841
    %2979 = vmatprep.subr.mxu0 0.0
    %2980 = vmatpush2.msra.mxu0 %v1840
    %2981 = vmatprep.subr.mxu0 0.0
    %2982 = vmatpush2.msra.mxu0 %v1839
    %2983 = vmatprep.subr.mxu0 0.0
    %2984 = vmatpush2.msra.mxu0 %v1838
    %2985 = vmatprep.subr.mxu0 0.0
    %2986 = vmatpush2.msra.mxu0 %v1837
    %2987 = vmatprep.subr.mxu0 0.0
    %2988 = vmatpush2.msra.mxu0 %v1836
    %2989 = vmatprep.subr.mxu0 0.0
    %2990 = vmatpush2.msra.mxu0 %v1835
    %2991 = vmatprep.subr.mxu0 0.0
    %2992 = vmatpush2.msra.mxu0 %v1834
    %2993 = vmatprep.subr.mxu0 0.0
    %2994 = vmatpush2.msra.mxu0 %v1833
    %2995 = vmatprep.subr.mxu0 0.0
    %2996 = vmatpush2.msra.mxu0 %v1832
    %2997 = vmatprep.subr.mxu0 0.0
    %2998 = vmatpush2.msra.mxu0 %v1831
    %2999 = vmatprep.subr.mxu0 0.0
    %3000 = vmatpush2.msra.mxu0 %v1830
    %3001 = vmatprep.subr.mxu0 0.0
    %3002 = vmatpush2.msra.mxu0 %v1829
    %3003 = vmatprep.subr.mxu0 0.0
    %3004 = vmatpush2.msra.mxu0 %v1828
    %3005 = vmatprep.subr.mxu0 0.0
    %3006 = vmatpush2.msra.mxu0 %v1827
    %3007 = vmatprep.mubr.f32.mxu0 %v2942
    %3008 = vmatmul.mubr.f32.gmra.mxu0 %v2941
    %v3009 = vpop.f32.mrf.mxu0
    %v3010 = vadd.f32 0.0, %v3009
    %v3011 = vpop.f32.mrf.mxu0
    %3012 = vdwg.mxu0
    %3013 = vst [vmem:[#allocation2] sm:$0xff] %v2432
    %3014 = vst [vmem:[#allocation2 + $0x8] sm:$0xff] %v3010
    // Predicated region
    $region26: #{llama_attention_palu_forward.1} parent=1 // pred_check
      _
    $region27: #{llama_attention_palu_forward.1} parent=1 // pred_check_branch
      %3016 = sbr.rel (0) target = $region29
    $region28: #{llama_attention_palu_forward.1} parent=1 // pred_region
      %s3018 = ssub.s32 256, 256
      %3019 = vsyncadd [#allocation3], %s3018
      %s3020 = sshll.u32 [#allocation2], 4
      %s3021 = int_to_ptr.vmem [resolvable:$true] %s3020
      %3026 = dma.vmem_to_hbm [thread:$0]  %s3021, 256, %s6, [#allocation3], 128, 128, 8
    $region29: #{llama_attention_palu_forward.1} parent=1 // pred_fallthru
      _
    // Predicated region
    $region30: #{llama_attention_palu_forward.1} parent=1 // pred_check
      _
    $region31: #{llama_attention_palu_forward.1} parent=1 // pred_check_branch
      %3028 = sbr.rel (0) target = $region33
    $region32: #{llama_attention_palu_forward.1} parent=1 // pred_region
      %3029 = dma.done [#allocation3], 256
    $region33: #{llama_attention_palu_forward.1} parent=1 // pred_fallthru
      _
    %3030 = vsyncpa [#allocation3], 1

</llo_original>
